<compile_context>
chip_gen: v5e
topology: v5e:2x2
jax: 0.10.0
libtpu: 0.0.40
codegen_flags: <defaults>
</compile_context>

<pallas_src>
import jax
import jax.numpy as jnp
from jax import lax
from jax.experimental import pallas as pl
from jax.experimental.pallas import tpu as pltpu

CLIMB_CNT = 24227
EMBED_SIZE = 10
HOLD_CNT = 198

_TILE_C = 512          # climb rows per grid step (sweep 512/1024/2048 if desired)
_LANE = 128            # TPU lane width; output last dim padded to a multiple of this
_MIN_PALLAS_C = 512    # below this, plain XLA beats kernel-launch + per-step overhead


def _round_up(x, m):
    return (x + m - 1) // m * m


def _dot_sigmoid_kernel(c_ref, h_ref, o_ref):
    # c_ref: [TILE_C, E] climb embedding rows for this tile.
    # h_ref: [H_pad, E] all hold embedding rows (VMEM-resident across the grid).
    # Contract on E for BOTH operands -> climb @ holds.T without an in-kernel
    # XLU transpose; result [TILE_C, H_pad] with H on the lane axis.
    dots = lax.dot_general(
        c_ref[...],
        h_ref[...],
        dimension_numbers=(((1,), (1,)), ((), ())),
        preferred_element_type=jnp.float32,
    )
    o_ref[...] = jax.nn.sigmoid(dots).astype(o_ref.dtype)


def _pallas_dot_sigmoid(climb_vectors, hold_vectors, *, tile_c=_TILE_C,
                        out_dtype=jnp.float32):
    """sigmoid(climb_vectors @ hold_vectors.T) via a C-tiled Pallas kernel."""
    C, E = climb_vectors.shape
    H, _ = hold_vectors.shape

    # Lane-dense output: pad H up to a multiple of 128 (zero hold rows; their
    # sigmoid(0)=0.5 columns are sliced away below).
    h_pad = _round_up(H, _LANE)
    if h_pad != H:
        hold_vectors = jnp.pad(hold_vectors, ((0, h_pad - H), (0, 0)))

    # Pad C up to a whole number of tiles; padded rows are sliced away below.
    tile_c = min(tile_c, _round_up(C, 8))
    c_pad = _round_up(C, tile_c)
    if c_pad != C:
        climb_vectors = jnp.pad(climb_vectors, ((0, c_pad - C), (0, 0)))

    grid = (c_pad // tile_c,)

    # Per-tile VMEM footprint is tiny (~0.5 MB output tile + KB-scale inputs),
    # comfortably inside the default scoped-VMEM limit on v5e/v6e/v7x.
    out = pl.pallas_call(
        _dot_sigmoid_kernel,
        out_shape=jax.ShapeDtypeStruct((c_pad, h_pad), out_dtype),
        grid_spec=pltpu.PrefetchScalarGridSpec(
            num_scalar_prefetch=0,
            grid=grid,
            in_specs=[
                pl.BlockSpec((tile_c, E), lambda i: (i, 0)),   # climb: tiled over C
                pl.BlockSpec((h_pad, E), lambda i: (0, 0)),    # holds: same block every step
            ],
            out_specs=pl.BlockSpec((tile_c, h_pad), lambda i: (i, 0)),
        ),
        compiler_params=pltpu.CompilerParams(
            dimension_semantics=("parallel",),
        ),
    )(climb_vectors, hold_vectors)

    return out[:C, :H]


def hold_embedding_forward(h_embed_table, c_embed_table, holds, climb, *,
                           min_pallas_c=_MIN_PALLAS_C, out_dtype=jnp.float32):
    """Replicates HoldEmbedding.forward.

    h_embed_table: [HOLD_CNT, E] float32
    c_embed_table: [CLIMB_CNT, E] float32
    holds: [H] int32 indices into h_embed_table
    climb: [C] int32 indices into c_embed_table
    returns: [C, H] = sigmoid(c_embed[climb] @ h_embed[holds].T)
    """
    # Embedding gathers are glue; matmul + sigmoid hot path lives in Pallas.
    hold_vectors = jnp.take(h_embed_table, holds, axis=0)    # [H, E]
    climb_vectors = jnp.take(c_embed_table, climb, axis=0)   # [C, E]

    C = climb_vectors.shape[0]
    if C < min_pallas_c:
        # Tiny interactive case: kernel launch + per-step overhead dwarfs the work.
        return jax.nn.sigmoid(climb_vectors @ hold_vectors.T).astype(out_dtype)

    return _pallas_dot_sigmoid(climb_vectors, hold_vectors, out_dtype=out_dtype)


def reference_forward(h_embed_table, c_embed_table, holds, climb):
    hold_vectors = jnp.take(h_embed_table, holds, axis=0)
    climb_vectors = jnp.take(c_embed_table, climb, axis=0)
    return jax.nn.sigmoid(climb_vectors @ hold_vectors.T)


if __name__ == "__main__":
    key = jax.random.PRNGKey(0)
    k_h, k_c, k_hi, k_ci, k_ci2 = jax.random.split(key, 5)

    # Deterministic embedding tables (nn.Embedding default init ~ N(0, 1)).
    h_embed_table = jax.random.normal(k_h, (HOLD_CNT, EMBED_SIZE), dtype=jnp.float32)
    c_embed_table = jax.random.normal(k_c, (CLIMB_CNT, EMBED_SIZE), dtype=jnp.float32)

    # Case 1: exercise the Pallas path (C >= threshold). H=198 (all holds),
    # C=600 climbs -> grid of 2 tiles, padded output width 256, sliced back to 198.
    holds_full = jnp.arange(HOLD_CNT, dtype=jnp.int32)
    climb_big = jax.random.randint(k_ci, (600,), 0, CLIMB_CNT, dtype=jnp.int32)

    out_big = hold_embedding_forward(h_embed_table, c_embed_table,
                                     holds_full, climb_big)
    out_big = jax.block_until_ready(out_big)
    ref_big = reference_forward(h_embed_table, c_embed_table, holds_full, climb_big)
    assert out_big.shape == (600, HOLD_CNT), out_big.shape
    assert jnp.allclose(out_big, ref_big, atol=1e-5, rtol=1e-5), "Pallas path mismatch"

    # Case 2: tiny interactive case takes the plain-XLA fast path.
    holds_small = jax.random.randint(k_hi, (16,), 0, HOLD_CNT, dtype=jnp.int32)
    climb_small = jax.random.randint(k_ci2, (8,), 0, CLIMB_CNT, dtype=jnp.int32)
    out_small = hold_embedding_forward(h_embed_table, c_embed_table,
                                       holds_small, climb_small)
    out_small = jax.block_until_ready(out_small)
    ref_small = reference_forward(h_embed_table, c_embed_table,
                                  holds_small, climb_small)
    assert out_small.shape == (8, 16), out_small.shape
    assert jnp.allclose(out_small, ref_small, atol=1e-5, rtol=1e-5), \
        "fallback path mismatch"

    print("KERNEL_OK")
</pallas_src>

<mosaic_0001>
module attributes {stable_mosaic.version = 11 : i64} {
  func.func @_dot_sigmoid_kernel(%arg0: i32, %arg1: memref<512x10xf32, #tpu.memory_space<vmem>>, %arg2: memref<256x10xf32, #tpu.memory_space<vmem>>, %arg3: memref<512x256xf32, #tpu.memory_space<vmem>>) attributes {dimension_semantics = [#tpu.dimension_semantics<parallel>], iteration_bounds = array<i64: 2>, scalar_prefetch = 0 : i64, scratch_operands = 0 : i64, tpu.core_type = #tpu.core_type<tc>, window_params = [{transform_indices = @transform_0, window_bounds = array<i64: 512, 10>}, {pipeline_mode = #tpu.pipeline_mode<synchronous>, transform_indices = @transform_1, window_bounds = array<i64: 256, 10>}, {transform_indices = @transform_2, window_bounds = array<i64: 512, 256>}]} {
    %c0 = arith.constant 0 : index
    %c0_0 = arith.constant 0 : index
    %0 = vector.load %arg1[%c0, %c0_0] : memref<512x10xf32, #tpu.memory_space<vmem>>, vector<512x10xf32>
    %c0_1 = arith.constant 0 : index
    %c0_2 = arith.constant 0 : index
    %1 = vector.load %arg2[%c0_1, %c0_2] : memref<256x10xf32, #tpu.memory_space<vmem>>, vector<256x10xf32>
    %cst = arith.constant dense<0.000000e+00> : vector<512x256xf32>
    %2 = tpu.matmul %0, %1, %cst {dimension_numbers = #tpu.dot_dimension_numbers<[1], [1], [0], [0], [0, 0, 1, 0], [], []>} : vector<512x10xf32>, vector<256x10xf32>, vector<512x256xf32> -> vector<512x256xf32>
    %3 = arith.negf %2 : vector<512x256xf32>
    %4 = math.exp %3 : vector<512x256xf32>
    %cst_3 = arith.constant 1.000000e+00 : f32
    %5 = vector.broadcast %cst_3 : f32 to vector<512x256xf32>
    %6 = arith.addf %5, %4 : vector<512x256xf32>
    %7 = arith.divf %5, %6 : vector<512x256xf32>
    %c0_4 = arith.constant 0 : index
    %c0_5 = arith.constant 0 : index
    %8 = vector.load %arg3[%c0_4, %c0_5] : memref<512x256xf32, #tpu.memory_space<vmem>>, vector<512x256xf32>
    tpu.vector_store %arg3[%c0_4, %c0_5], %7 {strides = array<i32>} : memref<512x256xf32, #tpu.memory_space<vmem>>, vector<512x256xf32>,
    return
  }
  func.func @transform_0(%arg0: i32) -> (i32, i32) {
    %c0_i32 = arith.constant 0 : i32
    %c0_i32_0 = arith.constant 0 : i32
    return %arg0, %c0_i32 : i32, i32
  }
  func.func @transform_1(%arg0: i32) -> (i32, i32) {
    %c0_i32 = arith.constant 0 : i32
    %c0_i32_0 = arith.constant 0 : i32
    %c0_i32_1 = arith.constant 0 : i32
    return %c0_i32, %c0_i32_0 : i32, i32
  }
  func.func @transform_2(%arg0: i32) -> (i32, i32) {
    %c0_i32 = arith.constant 0 : i32
    %c0_i32_0 = arith.constant 0 : i32
    return %arg0, %c0_i32 : i32, i32
  }
}

</mosaic_0001>

<llo_original>
// kernel: tpu_custom_call.1
$region0: #{tpu_custom_call.1}
  #allocation0 [shape = 'u32[]', space=smem, size = 0x4, offset = 0x4, fixed_abs, tag = 'smem constant byte address 0x4 - core index']
  #allocation1 [shape = 'u32[72,128]{1,0:T(1,128)}', space=vmem, size = 0x9000, scoped, tag = 'internal scratch']
  %s0 = inlined_call_operand.vmem [shape: f32[1024,10], index: 0, kind: input, shape index: {}]
  %s1 = inlined_call_operand.vmem [shape: f32[256,10], index: 1, kind: input, shape index: {}]
  %s2 = inlined_call_operand.hbm [shape: f32[1024,256], index: 2, kind: output, shape index: {}]
  %s3 = sld [smem:[#allocation0]]
  $region41: #{tpu_custom_call.1} parent=0
    _
  %s5 = ssub.s32 1, %s3
  %s6 = scalar_select 0, %s5, %s3
  $region1: #{tpu_custom_call.1} parent=0
    #allocation2 [shape = 'u8[1048576]{0}', space=vmem, size = 0x100000, scoped, tag = 'output window, operand 0']
    #allocation3 [shape = 's32[2]{0}', space=sflag, size = 0x8, scoped, tag = 'scoped memory for tpu_custom_call.1']
    %7 = vsyncpa [#allocation3], 0
    %s8 = scalar_lea.sflag [#allocation3], 1
    %9 = vsyncpa %s8, 0
    loop: start=0, step=1, limit=4
    $region2: #{tpu_custom_call.1} parent=1 // loop_pre_header
      _
    $region3: #{tpu_custom_call.1} parent=1 // loop_header
      %s11 = sphi 0, %s15
      %p12 = scmp.ge.s32.totalorder %s11, 4
      %s21 = sphi 0, %s23
      %s24 = sphi 0, %s21
      %s25 = sphi 0, %s24
      %s41 = sphi 0, %s25
      %s45 = sphi 0, %s45
      %s47 = sphi 0, %s45
      %s48 = sphi 0, %s47
      %s62 = sphi 0, %s48
      %s68 = sphi 0, %s70
      %s71 = sphi 0, %s68
      %s72 = sphi 0, %s71
      %s88 = sphi 0, %s72
    $region4: #{tpu_custom_call.1} parent=1 // loop_header_branch
      %14 = sbr.rel (%p12) target = $region8
    $region5: #{tpu_custom_call.1} parent=1 // loop_body
      %s16 = ssub.s32 %s11, 1
      %s17 = ssub.s32 %s11, 2
      %s18 = sadd.s32 %s11, 1
      %s19 = ssub.s32 %s11, %s18
      %p20 = scmp.eq.s32.totalorder %s19, 0
      %s22 = sadd.s32 %s21, 1
      %s23 = scalar_select %p20, %s21, %s22
      %p26 = pneg %p20
      %p27 = scmp.eq.s32.totalorder %s11, 1
      %p28 = por %p26, %p27
      %p29 = scmp.ne.s32.totalorder %s21, %s24
      %p30 = scmp.eq.s32.totalorder %s11, 0
      %p31 = por %p29, %p30
      %p32 = scmp.ne.s32.totalorder %s21, %s24
      %p33 = scmp.eq.s32.totalorder %s16, 1
      %p34 = por %p32, %p33
      %p35 = scmp.ne.s32.totalorder %s24, %s25
      %p36 = scmp.eq.s32.totalorder %s16, 0
      %p37 = por %p35, %p36
      %p38 = scmp.ne.s32.totalorder %s24, %s25
      %p39 = scmp.eq.s32.totalorder %s17, 1
      %p40 = por %p38, %p39
      %p42 = scmp.ne.s32.totalorder %s25, %s41
      %p43 = scmp.eq.s32.totalorder %s17, 0
      %p44 = por %p42, %p43
      %s46 = sadd.s32 %s45, 1
      %p49 = scmp.eq.s32.totalorder %s11, 1
      %p50 = scmp.ne.s32.totalorder %s45, %s47
      %p51 = scmp.eq.s32.totalorder %s11, 0
      %p52 = por %p50, %p51
      %p53 = scmp.ne.s32.totalorder %s45, %s47
      %p54 = scmp.eq.s32.totalorder %s16, 1
      %p55 = por %p53, %p54
      %p56 = scmp.ne.s32.totalorder %s47, %s48
      %p57 = scmp.eq.s32.totalorder %s16, 0
      %p58 = por %p56, %p57
      %p59 = scmp.ne.s32.totalorder %s47, %s48
      %p60 = scmp.eq.s32.totalorder %s17, 1
      %p61 = por %p59, %p60
      %p63 = scmp.ne.s32.totalorder %s48, %s62
      %p64 = scmp.eq.s32.totalorder %s17, 0
      %p65 = por %p63, %p64
      %s66 = ssub.s32 %s11, %s18
      %p67 = scmp.eq.s32.totalorder %s66, 0
      %s69 = sadd.s32 %s68, 1
      %s70 = scalar_select %p67, %s68, %s69
      %p73 = pneg %p67
      %p74 = scmp.eq.s32.totalorder %s11, 1
      %p75 = por %p73, %p74
      %p76 = scmp.ne.s32.totalorder %s68, %s71
      %p77 = scmp.eq.s32.totalorder %s11, 0
      %p78 = por %p76, %p77
      %p79 = scmp.ne.s32.totalorder %s68, %s71
      %p80 = scmp.eq.s32.totalorder %s16, 1
      %p81 = por %p79, %p80
      %p82 = scmp.ne.s32.totalorder %s71, %s72
      %p83 = scmp.eq.s32.totalorder %s16, 0
      %p84 = por %p82, %p83
      %p85 = scmp.ne.s32.totalorder %s71, %s72
      %p86 = scmp.eq.s32.totalorder %s17, 1
      %p87 = por %p85, %p86
      %p89 = scmp.ne.s32.totalorder %s72, %s88
      %p90 = scmp.eq.s32.totalorder %s17, 0
      %p91 = por %p89, %p90
      %p92 = scmp.le.s32.totalorder 1, %s11
      %p93 = scmp.lt.s32.totalorder %s11, 3
      %p94 = pnand %p92, %p93
      %p95 = pneg %p94
      // Predicated region
      $region9: #{tpu_custom_call.1} parent=5 // pred_check
        _
      $region10: #{tpu_custom_call.1} parent=5 // pred_check_branch
        %97 = sbr.rel (%p94) target = $region12
      $region11: #{tpu_custom_call.1} parent=5 // pred_region
        %s98 = ssub.s32 %s11, 1
        // Predicated region
        $region13: #{tpu_custom_call.1} parent=11 // pred_check
          %p99 = pneg %p58
        $region14: #{tpu_custom_call.1} parent=11 // pred_check_branch
          %101 = sbr.rel (%p99) target = $region16
        $region15: #{tpu_custom_call.1} parent=11 // pred_region
          _
        $region16: #{tpu_custom_call.1} parent=11 // pred_fallthru
          _
      $region12: #{tpu_custom_call.1} parent=5 // pred_fallthru
        _
      %p102 = scmp.lt.s32.totalorder %s11, 2
      // Predicated region
      $region17: #{tpu_custom_call.1} parent=5 // pred_check
        %p103 = pneg %p102
      $region18: #{tpu_custom_call.1} parent=5 // pred_check_branch
        %105 = sbr.rel (%p103) target = $region20
      $region19: #{tpu_custom_call.1} parent=5 // pred_region
        // Predicated region
        $region21: #{tpu_custom_call.1} parent=19 // pred_check
          %p106 = pneg %p31
        $region22: #{tpu_custom_call.1} parent=19 // pred_check_branch
          %108 = sbr.rel (%p106) target = $region24
        $region23: #{tpu_custom_call.1} parent=19 // pred_region
          %s109 = smul.u32 64, %s11
          %p110 = scmp.lt.s32.totalorder %s109, 127
          %s111 = scalar_select %p110, %s109, 127
          %s112 = smul.addr %s111, 8
          %s113 = scalar_lea.vmem %s0, %s112
          %s114 = smul.u32 64, %s11
        $region24: #{tpu_custom_call.1} parent=19 // pred_fallthru
          _
      $region20: #{tpu_custom_call.1} parent=5 // pred_fallthru
        _
      %p115 = scmp.le.s32.totalorder 1, %s11
      %p116 = scmp.lt.s32.totalorder %s11, 3
      %p117 = pnand %p115, %p116
      %p118 = pneg %p117
      // Predicated region
      $region25: #{tpu_custom_call.1} parent=5 // pred_check
        _
      $region26: #{tpu_custom_call.1} parent=5 // pred_check_branch
        %120 = sbr.rel (%p117) target = $region28
      $region27: #{tpu_custom_call.1} parent=5 // pred_region
        %s121 = ssub.s32 %s11, 1
        %s122 = smul.u32 64, %s16
        %p123 = scmp.lt.s32.totalorder %s122, 127
        %s124 = scalar_select %p123, %s122, 127
        %s125 = smul.addr %s124, 8
        %s126 = scalar_lea.vmem %s0, %s125
        %p127 = pneg %p37
        %p128 = pneg %p34
        %p129 = pneg %p58
        %p130 = pneg %p55
        %p131 = pneg %p84
        %p132 = pneg %p81
        %s133 = sand.u32 %s71, 1
        %s134 = scalar_lea.sflag [#allocation3], %s133
        %s135 = sand.u32 %s71, 1
        %s136 = smul.addr %s135, 1024
        %s137 = scalar_lea.vmem [#allocation2], %s136
        %s138 = smul.u32 64, %s16
        %p139 = scmp.lt.s32.totalorder %s138, 127
        %s140 = scalar_select %p139, %s138, 127
        %s141 = smul.addr %s140, 8
        %s142 = scalar_lea.vmem %s0, %s141
        %s143 = smul.u32 64, %s16
        %s144 = smul.u32 64, %s16
        %v145 = vld [vmem:[%s142] sm:$0xff]
        %v146 = vld [vmem:[%s142 + $0x8] sm:$0xff]
        %v147 = vld [vmem:[%s142 + $0x10] sm:$0xff]
        %v148 = vld [vmem:[%s142 + $0x18] sm:$0xff]
        %v149 = vld [vmem:[%s142 + $0x20] sm:$0xff]
        %v150 = vld [vmem:[%s142 + $0x28] sm:$0xff]
        %v151 = vld [vmem:[%s142 + $0x30] sm:$0xff]
        %v152 = vld [vmem:[%s142 + $0x38] sm:$0xff]
        %v153 = vld [vmem:[%s142 + $0x40] sm:$0xff]
        %v154 = vld [vmem:[%s142 + $0x48] sm:$0xff]
        %v155 = vld [vmem:[%s142 + $0x50] sm:$0xff]
        %v156 = vld [vmem:[%s142 + $0x58] sm:$0xff]
        %v157 = vld [vmem:[%s142 + $0x60] sm:$0xff]
        %v158 = vld [vmem:[%s142 + $0x68] sm:$0xff]
        %v159 = vld [vmem:[%s142 + $0x70] sm:$0xff]
        %v160 = vld [vmem:[%s142 + $0x78] sm:$0xff]
        %v161 = vld [vmem:[%s142 + $0x80] sm:$0xff]
        %v162 = vld [vmem:[%s142 + $0x88] sm:$0xff]
        %v163 = vld [vmem:[%s142 + $0x90] sm:$0xff]
        %v164 = vld [vmem:[%s142 + $0x98] sm:$0xff]
        %v165 = vld [vmem:[%s142 + $0xa0] sm:$0xff]
        %v166 = vld [vmem:[%s142 + $0xa8] sm:$0xff]
        %v167 = vld [vmem:[%s142 + $0xb0] sm:$0xff]
        %v168 = vld [vmem:[%s142 + $0xb8] sm:$0xff]
        %v169 = vld [vmem:[%s142 + $0xc0] sm:$0xff]
        %v170 = vld [vmem:[%s142 + $0xc8] sm:$0xff]
        %v171 = vld [vmem:[%s142 + $0xd0] sm:$0xff]
        %v172 = vld [vmem:[%s142 + $0xd8] sm:$0xff]
        %v173 = vld [vmem:[%s142 + $0xe0] sm:$0xff]
        %v174 = vld [vmem:[%s142 + $0xe8] sm:$0xff]
        %v175 = vld [vmem:[%s142 + $0xf0] sm:$0xff]
        %v176 = vld [vmem:[%s142 + $0xf8] sm:$0xff]
        %v177 = vld [vmem:[%s142 + $0x100] sm:$0xff]
        %v178 = vld [vmem:[%s142 + $0x108] sm:$0xff]
        %v179 = vld [vmem:[%s142 + $0x110] sm:$0xff]
        %v180 = vld [vmem:[%s142 + $0x118] sm:$0xff]
        %v181 = vld [vmem:[%s142 + $0x120] sm:$0xff]
        %v182 = vld [vmem:[%s142 + $0x128] sm:$0xff]
        %v183 = vld [vmem:[%s142 + $0x130] sm:$0xff]
        %v184 = vld [vmem:[%s142 + $0x138] sm:$0xff]
        %v185 = vld [vmem:[%s142 + $0x140] sm:$0xff]
        %v186 = vld [vmem:[%s142 + $0x148] sm:$0xff]
        %v187 = vld [vmem:[%s142 + $0x150] sm:$0xff]
        %v188 = vld [vmem:[%s142 + $0x158] sm:$0xff]
        %v189 = vld [vmem:[%s142 + $0x160] sm:$0xff]
        %v190 = vld [vmem:[%s142 + $0x168] sm:$0xff]
        %v191 = vld [vmem:[%s142 + $0x170] sm:$0xff]
        %v192 = vld [vmem:[%s142 + $0x178] sm:$0xff]
        %v193 = vld [vmem:[%s142 + $0x180] sm:$0xff]
        %v194 = vld [vmem:[%s142 + $0x188] sm:$0xff]
        %v195 = vld [vmem:[%s142 + $0x190] sm:$0xff]
        %v196 = vld [vmem:[%s142 + $0x198] sm:$0xff]
        %v197 = vld [vmem:[%s142 + $0x1a0] sm:$0xff]
        %v198 = vld [vmem:[%s142 + $0x1a8] sm:$0xff]
        %v199 = vld [vmem:[%s142 + $0x1b0] sm:$0xff]
        %v200 = vld [vmem:[%s142 + $0x1b8] sm:$0xff]
        %v201 = vld [vmem:[%s142 + $0x1c0] sm:$0xff]
        %v202 = vld [vmem:[%s142 + $0x1c8] sm:$0xff]
        %v203 = vld [vmem:[%s142 + $0x1d0] sm:$0xff]
        %v204 = vld [vmem:[%s142 + $0x1d8] sm:$0xff]
        %v205 = vld [vmem:[%s142 + $0x1e0] sm:$0xff]
        %v206 = vld [vmem:[%s142 + $0x1e8] sm:$0xff]
        %v207 = vld [vmem:[%s142 + $0x1f0] sm:$0xff]
        %v208 = vld [vmem:[%s142 + $0x1f8] sm:$0xff]
        %v209 = vld [vmem:[%s1] sm:$0xff]
        %v210 = vld [vmem:[%s1 + $0x8] sm:$0xff]
        %v211 = vld [vmem:[%s1 + $0x10] sm:$0xff]
        %v212 = vld [vmem:[%s1 + $0x18] sm:$0xff]
        %v213 = vld [vmem:[%s1 + $0x20] sm:$0xff]
        %v214 = vld [vmem:[%s1 + $0x28] sm:$0xff]
        %v215 = vld [vmem:[%s1 + $0x30] sm:$0xff]
        %v216 = vld [vmem:[%s1 + $0x38] sm:$0xff]
        %v217 = vld [vmem:[%s1 + $0x40] sm:$0xff]
        %v218 = vld [vmem:[%s1 + $0x48] sm:$0xff]
        %v219 = vld [vmem:[%s1 + $0x50] sm:$0xff]
        %v220 = vld [vmem:[%s1 + $0x58] sm:$0xff]
        %v221 = vld [vmem:[%s1 + $0x60] sm:$0xff]
        %v222 = vld [vmem:[%s1 + $0x68] sm:$0xff]
        %v223 = vld [vmem:[%s1 + $0x70] sm:$0xff]
        %v224 = vld [vmem:[%s1 + $0x78] sm:$0xff]
        %v225 = vld [vmem:[%s1 + $0x80] sm:$0xff]
        %v226 = vld [vmem:[%s1 + $0x88] sm:$0xff]
        %v227 = vld [vmem:[%s1 + $0x90] sm:$0xff]
        %v228 = vld [vmem:[%s1 + $0x98] sm:$0xff]
        %v229 = vld [vmem:[%s1 + $0xa0] sm:$0xff]
        %v230 = vld [vmem:[%s1 + $0xa8] sm:$0xff]
        %v231 = vld [vmem:[%s1 + $0xb0] sm:$0xff]
        %v232 = vld [vmem:[%s1 + $0xb8] sm:$0xff]
        %v233 = vld [vmem:[%s1 + $0xc0] sm:$0xff]
        %v234 = vld [vmem:[%s1 + $0xc8] sm:$0xff]
        %v235 = vld [vmem:[%s1 + $0xd0] sm:$0xff]
        %v236 = vld [vmem:[%s1 + $0xd8] sm:$0xff]
        %v237 = vld [vmem:[%s1 + $0xe0] sm:$0xff]
        %v238 = vld [vmem:[%s1 + $0xe8] sm:$0xff]
        %v239 = vld [vmem:[%s1 + $0xf0] sm:$0xff]
        %v240 = vld [vmem:[%s1 + $0xf8] sm:$0xff]
        %vm241 = vcmask 80896
        %v243 = vsel %vm241, %v145, 0
        %v246 = vsel %vm241, %v146, 0
        %v249 = vsel %vm241, %v147, 0
        %v252 = vsel %vm241, %v148, 0
        %v255 = vsel %vm241, %v149, 0
        %v258 = vsel %vm241, %v150, 0
        %v261 = vsel %vm241, %v151, 0
        %v264 = vsel %vm241, %v152, 0
        %v267 = vsel %vm241, %v153, 0
        %v270 = vsel %vm241, %v154, 0
        %v273 = vsel %vm241, %v155, 0
        %v276 = vsel %vm241, %v156, 0
        %v279 = vsel %vm241, %v157, 0
        %v282 = vsel %vm241, %v158, 0
        %v285 = vsel %vm241, %v159, 0
        %v288 = vsel %vm241, %v160, 0
        %v291 = vsel %vm241, %v161, 0
        %v294 = vsel %vm241, %v162, 0
        %v297 = vsel %vm241, %v163, 0
        %v300 = vsel %vm241, %v164, 0
        %v303 = vsel %vm241, %v165, 0
        %v306 = vsel %vm241, %v166, 0
        %v309 = vsel %vm241, %v167, 0
        %v312 = vsel %vm241, %v168, 0
        %v315 = vsel %vm241, %v169, 0
        %v318 = vsel %vm241, %v170, 0
        %v321 = vsel %vm241, %v171, 0
        %v324 = vsel %vm241, %v172, 0
        %v327 = vsel %vm241, %v173, 0
        %v330 = vsel %vm241, %v174, 0
        %v333 = vsel %vm241, %v175, 0
        %v336 = vsel %vm241, %v176, 0
        %v339 = vsel %vm241, %v177, 0
        %v342 = vsel %vm241, %v178, 0
        %v345 = vsel %vm241, %v179, 0
        %v348 = vsel %vm241, %v180, 0
        %v351 = vsel %vm241, %v181, 0
        %v354 = vsel %vm241, %v182, 0
        %v357 = vsel %vm241, %v183, 0
        %v360 = vsel %vm241, %v184, 0
        %v363 = vsel %vm241, %v185, 0
        %v366 = vsel %vm241, %v186, 0
        %v369 = vsel %vm241, %v187, 0
        %v372 = vsel %vm241, %v188, 0
        %v375 = vsel %vm241, %v189, 0
        %v378 = vsel %vm241, %v190, 0
        %v381 = vsel %vm241, %v191, 0
        %v384 = vsel %vm241, %v192, 0
        %v387 = vsel %vm241, %v193, 0
        %v390 = vsel %vm241, %v194, 0
        %v393 = vsel %vm241, %v195, 0
        %v396 = vsel %vm241, %v196, 0
        %v399 = vsel %vm241, %v197, 0
        %v402 = vsel %vm241, %v198, 0
        %v405 = vsel %vm241, %v199, 0
        %v408 = vsel %vm241, %v200, 0
        %v411 = vsel %vm241, %v201, 0
        %v414 = vsel %vm241, %v202, 0
        %v417 = vsel %vm241, %v203, 0
        %v420 = vsel %vm241, %v204, 0
        %v423 = vsel %vm241, %v205, 0
        %v426 = vsel %vm241, %v206, 0
        %v429 = vsel %vm241, %v207, 0
        %v432 = vsel %vm241, %v208, 0
        %v435 = vsel %vm241, %v209, 0
        %v438 = vsel %vm241, %v210, 0
        %v441 = vsel %vm241, %v211, 0
        %v444 = vsel %vm241, %v212, 0
        %v447 = vsel %vm241, %v213, 0
        %v450 = vsel %vm241, %v214, 0
        %v453 = vsel %vm241, %v215, 0
        %v456 = vsel %vm241, %v216, 0
        %v459 = vsel %vm241, %v217, 0
        %v462 = vsel %vm241, %v218, 0
        %v465 = vsel %vm241, %v219, 0
        %v468 = vsel %vm241, %v220, 0
        %v471 = vsel %vm241, %v221, 0
        %v474 = vsel %vm241, %v222, 0
        %v477 = vsel %vm241, %v223, 0
        %v480 = vsel %vm241, %v224, 0
        %v483 = vsel %vm241, %v225, 0
        %v486 = vsel %vm241, %v226, 0
        %v489 = vsel %vm241, %v227, 0
        %v492 = vsel %vm241, %v228, 0
        %v495 = vsel %vm241, %v229, 0
        %v498 = vsel %vm241, %v230, 0
        %v501 = vsel %vm241, %v231, 0
        %v504 = vsel %vm241, %v232, 0
        %v507 = vsel %vm241, %v233, 0
        %v510 = vsel %vm241, %v234, 0
        %v513 = vsel %vm241, %v235, 0
        %v516 = vsel %vm241, %v236, 0
        %v519 = vsel %vm241, %v237, 0
        %v522 = vsel %vm241, %v238, 0
        %v525 = vsel %vm241, %v239, 0
        %v528 = vsel %vm241, %v240, 0
        %530 = vmatpush.xpose.msra.mxu0 %v480
        %531 = vmatpush.xpose.msra.mxu0 %v477
        %532 = vmatpush.xpose.msra.mxu0 %v474
        %533 = vmatpush.xpose.msra.mxu0 %v471
        %534 = vmatpush.xpose.msra.mxu0 %v468
        %535 = vmatpush.xpose.msra.mxu0 %v465
        %536 = vmatpush.xpose.msra.mxu0 %v462
        %537 = vmatpush.xpose.msra.mxu0 %v459
        %538 = vmatpush.xpose.msra.mxu0 %v456
        %539 = vmatpush.xpose.msra.mxu0 %v453
        %540 = vmatpush.xpose.msra.mxu0 %v450
        %541 = vmatpush.xpose.msra.mxu0 %v447
        %542 = vmatpush.xpose.msra.mxu0 %v444
        %543 = vmatpush.xpose.msra.mxu0 %v441
        %544 = vmatpush.xpose.msra.mxu0 %v438
        %545 = vmatpush.xpose.msra.mxu0 %v435
        %546 = vmatmul.f32.gmra.mxu0 %v243
        %v547 = vpop.f32.mrf.mxu0
        %v548 = vadd.f32 0.0, %v547
        %549 = vmatmul.f32.gmra.mxu0 %v246
        %v550 = vpop.f32.mrf.mxu0
        %v551 = vadd.f32 0.0, %v550
        %552 = vmatmul.f32.gmra.mxu0 %v249
        %v553 = vpop.f32.mrf.mxu0
        %v554 = vadd.f32 0.0, %v553
        %555 = vmatmul.f32.gmra.mxu0 %v252
        %v556 = vpop.f32.mrf.mxu0
        %v557 = vadd.f32 0.0, %v556
        %558 = vmatmul.f32.gmra.mxu0 %v255
        %v559 = vpop.f32.mrf.mxu0
        %v560 = vadd.f32 0.0, %v559
        %561 = vmatmul.f32.gmra.mxu0 %v258
        %v562 = vpop.f32.mrf.mxu0
        %v563 = vadd.f32 0.0, %v562
        %564 = vmatmul.f32.gmra.mxu0 %v261
        %v565 = vpop.f32.mrf.mxu0
        %v566 = vadd.f32 0.0, %v565
        %567 = vmatmul.f32.gmra.mxu0 %v264
        %v568 = vpop.f32.mrf.mxu0
        %v569 = vadd.f32 0.0, %v568
        %570 = vmatmul.f32.gmra.mxu0 %v267
        %v571 = vpop.f32.mrf.mxu0
        %v572 = vadd.f32 0.0, %v571
        %573 = vmatmul.f32.gmra.mxu0 %v270
        %v574 = vpop.f32.mrf.mxu0
        %v575 = vadd.f32 0.0, %v574
        %576 = vmatmul.f32.gmra.mxu0 %v273
        %v577 = vpop.f32.mrf.mxu0
        %v578 = vadd.f32 0.0, %v577
        %579 = vmatmul.f32.gmra.mxu0 %v276
        %v580 = vpop.f32.mrf.mxu0
        %v581 = vadd.f32 0.0, %v580
        %582 = vmatmul.f32.gmra.mxu0 %v279
        %v583 = vpop.f32.mrf.mxu0
        %v584 = vadd.f32 0.0, %v583
        %585 = vmatmul.f32.gmra.mxu0 %v282
        %v586 = vpop.f32.mrf.mxu0
        %v587 = vadd.f32 0.0, %v586
        %588 = vmatmul.f32.gmra.mxu0 %v285
        %v589 = vpop.f32.mrf.mxu0
        %v590 = vadd.f32 0.0, %v589
        %591 = vmatmul.f32.gmra.mxu0 %v288
        %v592 = vpop.f32.mrf.mxu0
        %v593 = vadd.f32 0.0, %v592
        %594 = vmatmul.f32.gmra.mxu0 %v291
        %v595 = vpop.f32.mrf.mxu0
        %v596 = vadd.f32 0.0, %v595
        %597 = vmatmul.f32.gmra.mxu0 %v294
        %v598 = vpop.f32.mrf.mxu0
        %v599 = vadd.f32 0.0, %v598
        %600 = vmatmul.f32.gmra.mxu0 %v297
        %v601 = vpop.f32.mrf.mxu0
        %v602 = vadd.f32 0.0, %v601
        %603 = vmatmul.f32.gmra.mxu0 %v300
        %v604 = vpop.f32.mrf.mxu0
        %v605 = vadd.f32 0.0, %v604
        %606 = vmatmul.f32.gmra.mxu0 %v303
        %v607 = vpop.f32.mrf.mxu0
        %v608 = vadd.f32 0.0, %v607
        %609 = vmatmul.f32.gmra.mxu0 %v306
        %v610 = vpop.f32.mrf.mxu0
        %v611 = vadd.f32 0.0, %v610
        %612 = vmatmul.f32.gmra.mxu0 %v309
        %v613 = vpop.f32.mrf.mxu0
        %v614 = vadd.f32 0.0, %v613
        %615 = vmatmul.f32.gmra.mxu0 %v312
        %v616 = vpop.f32.mrf.mxu0
        %v617 = vadd.f32 0.0, %v616
        %618 = vmatmul.f32.gmra.mxu0 %v315
        %v619 = vpop.f32.mrf.mxu0
        %v620 = vadd.f32 0.0, %v619
        %621 = vmatmul.f32.gmra.mxu0 %v318
        %v622 = vpop.f32.mrf.mxu0
        %v623 = vadd.f32 0.0, %v622
        %624 = vmatmul.f32.gmra.mxu0 %v321
        %v625 = vpop.f32.mrf.mxu0
        %v626 = vadd.f32 0.0, %v625
        %627 = vmatmul.f32.gmra.mxu0 %v324
        %v628 = vpop.f32.mrf.mxu0
        %v629 = vadd.f32 0.0, %v628
        %630 = vmatmul.f32.gmra.mxu0 %v327
        %v631 = vpop.f32.mrf.mxu0
        %v632 = vadd.f32 0.0, %v631
        %633 = vmatmul.f32.gmra.mxu0 %v330
        %v634 = vpop.f32.mrf.mxu0
        %v635 = vadd.f32 0.0, %v634
        %636 = vmatmul.f32.gmra.mxu0 %v333
        %v637 = vpop.f32.mrf.mxu0
        %v638 = vadd.f32 0.0, %v637
        %639 = vmatmul.f32.gmra.mxu0 %v336
        %v640 = vpop.f32.mrf.mxu0
        %v641 = vadd.f32 0.0, %v640
        %642 = vmatmul.f32.gmra.mxu0 %v339
        %v643 = vpop.f32.mrf.mxu0
        %v644 = vadd.f32 0.0, %v643
        %645 = vmatmul.f32.gmra.mxu0 %v342
        %v646 = vpop.f32.mrf.mxu0
        %v647 = vadd.f32 0.0, %v646
        %648 = vmatmul.f32.gmra.mxu0 %v345
        %v649 = vpop.f32.mrf.mxu0
        %v650 = vadd.f32 0.0, %v649
        %651 = vmatmul.f32.gmra.mxu0 %v348
        %v652 = vpop.f32.mrf.mxu0
        %v653 = vadd.f32 0.0, %v652
        %654 = vmatmul.f32.gmra.mxu0 %v351
        %v655 = vpop.f32.mrf.mxu0
        %v656 = vadd.f32 0.0, %v655
        %657 = vmatmul.f32.gmra.mxu0 %v354
        %v658 = vpop.f32.mrf.mxu0
        %v659 = vadd.f32 0.0, %v658
        %660 = vmatmul.f32.gmra.mxu0 %v357
        %v661 = vpop.f32.mrf.mxu0
        %v662 = vadd.f32 0.0, %v661
        %663 = vmatmul.f32.gmra.mxu0 %v360
        %v664 = vpop.f32.mrf.mxu0
        %v665 = vadd.f32 0.0, %v664
        %666 = vmatmul.f32.gmra.mxu0 %v363
        %v667 = vpop.f32.mrf.mxu0
        %v668 = vadd.f32 0.0, %v667
        %669 = vmatmul.f32.gmra.mxu0 %v366
        %v670 = vpop.f32.mrf.mxu0
        %v671 = vadd.f32 0.0, %v670
        %672 = vmatmul.f32.gmra.mxu0 %v369
        %v673 = vpop.f32.mrf.mxu0
        %v674 = vadd.f32 0.0, %v673
        %675 = vmatmul.f32.gmra.mxu0 %v372
        %v676 = vpop.f32.mrf.mxu0
        %v677 = vadd.f32 0.0, %v676
        %678 = vmatmul.f32.gmra.mxu0 %v375
        %v679 = vpop.f32.mrf.mxu0
        %v680 = vadd.f32 0.0, %v679
        %681 = vmatmul.f32.gmra.mxu0 %v378
        %v682 = vpop.f32.mrf.mxu0
        %v683 = vadd.f32 0.0, %v682
        %684 = vmatmul.f32.gmra.mxu0 %v381
        %v685 = vpop.f32.mrf.mxu0
        %v686 = vadd.f32 0.0, %v685
        %687 = vmatmul.f32.gmra.mxu0 %v384
        %v688 = vpop.f32.mrf.mxu0
        %v689 = vadd.f32 0.0, %v688
        %690 = vmatmul.f32.gmra.mxu0 %v387
        %v691 = vpop.f32.mrf.mxu0
        %v692 = vadd.f32 0.0, %v691
        %693 = vmatmul.f32.gmra.mxu0 %v390
        %v694 = vpop.f32.mrf.mxu0
        %v695 = vadd.f32 0.0, %v694
        %696 = vmatmul.f32.gmra.mxu0 %v393
        %v697 = vpop.f32.mrf.mxu0
        %v698 = vadd.f32 0.0, %v697
        %699 = vmatmul.f32.gmra.mxu0 %v396
        %v700 = vpop.f32.mrf.mxu0
        %v701 = vadd.f32 0.0, %v700
        %702 = vmatmul.f32.gmra.mxu0 %v399
        %v703 = vpop.f32.mrf.mxu0
        %v704 = vadd.f32 0.0, %v703
        %705 = vmatmul.f32.gmra.mxu0 %v402
        %v706 = vpop.f32.mrf.mxu0
        %v707 = vadd.f32 0.0, %v706
        %708 = vmatmul.f32.gmra.mxu0 %v405
        %v709 = vpop.f32.mrf.mxu0
        %v710 = vadd.f32 0.0, %v709
        %711 = vmatmul.f32.gmra.mxu0 %v408
        %v712 = vpop.f32.mrf.mxu0
        %v713 = vadd.f32 0.0, %v712
        %714 = vmatmul.f32.gmra.mxu0 %v411
        %v715 = vpop.f32.mrf.mxu0
        %v716 = vadd.f32 0.0, %v715
        %717 = vmatmul.f32.gmra.mxu0 %v414
        %v718 = vpop.f32.mrf.mxu0
        %v719 = vadd.f32 0.0, %v718
        %720 = vmatmul.f32.gmra.mxu0 %v417
        %v721 = vpop.f32.mrf.mxu0
        %v722 = vadd.f32 0.0, %v721
        %723 = vmatmul.f32.gmra.mxu0 %v420
        %v724 = vpop.f32.mrf.mxu0
        %v725 = vadd.f32 0.0, %v724
        %726 = vmatmul.f32.gmra.mxu0 %v423
        %v727 = vpop.f32.mrf.mxu0
        %v728 = vadd.f32 0.0, %v727
        %729 = vmatmul.f32.gmra.mxu0 %v426
        %v730 = vpop.f32.mrf.mxu0
        %v731 = vadd.f32 0.0, %v730
        %732 = vmatmul.f32.gmra.mxu0 %v429
        %v733 = vpop.f32.mrf.mxu0
        %v734 = vadd.f32 0.0, %v733
        %735 = vmatmul.f32.gmra.mxu0 %v432
        %v736 = vpop.f32.mrf.mxu0
        %v737 = vadd.f32 0.0, %v736
        %738 = vdwg.mxu0
        %739 = vmatpush.xpose.msra.mxu0 %v528
        %740 = vmatpush.xpose.msra.mxu0 %v525
        %741 = vmatpush.xpose.msra.mxu0 %v522
        %742 = vmatpush.xpose.msra.mxu0 %v519
        %743 = vmatpush.xpose.msra.mxu0 %v516
        %744 = vmatpush.xpose.msra.mxu0 %v513
        %745 = vmatpush.xpose.msra.mxu0 %v510
        %746 = vmatpush.xpose.msra.mxu0 %v507
        %747 = vmatpush.xpose.msra.mxu0 %v504
        %748 = vmatpush.xpose.msra.mxu0 %v501
        %749 = vmatpush.xpose.msra.mxu0 %v498
        %750 = vmatpush.xpose.msra.mxu0 %v495
        %751 = vmatpush.xpose.msra.mxu0 %v492
        %752 = vmatpush.xpose.msra.mxu0 %v489
        %753 = vmatpush.xpose.msra.mxu0 %v486
        %754 = vmatpush.xpose.msra.mxu0 %v483
        %755 = vmatmul.f32.gmra.mxu0 %v243
        %v756 = vpop.f32.mrf.mxu0
        %v757 = vadd.f32 0.0, %v756
        %758 = vmatmul.f32.gmra.mxu0 %v246
        %v759 = vpop.f32.mrf.mxu0
        %v760 = vadd.f32 0.0, %v759
        %761 = vmatmul.f32.gmra.mxu0 %v249
        %v762 = vpop.f32.mrf.mxu0
        %v763 = vadd.f32 0.0, %v762
        %764 = vmatmul.f32.gmra.mxu0 %v252
        %v765 = vpop.f32.mrf.mxu0
        %v766 = vadd.f32 0.0, %v765
        %767 = vmatmul.f32.gmra.mxu0 %v255
        %v768 = vpop.f32.mrf.mxu0
        %v769 = vadd.f32 0.0, %v768
        %770 = vmatmul.f32.gmra.mxu0 %v258
        %v771 = vpop.f32.mrf.mxu0
        %v772 = vadd.f32 0.0, %v771
        %773 = vmatmul.f32.gmra.mxu0 %v261
        %v774 = vpop.f32.mrf.mxu0
        %v775 = vadd.f32 0.0, %v774
        %776 = vmatmul.f32.gmra.mxu0 %v264
        %v777 = vpop.f32.mrf.mxu0
        %v778 = vadd.f32 0.0, %v777
        %779 = vmatmul.f32.gmra.mxu0 %v267
        %v780 = vpop.f32.mrf.mxu0
        %v781 = vadd.f32 0.0, %v780
        %782 = vmatmul.f32.gmra.mxu0 %v270
        %v783 = vpop.f32.mrf.mxu0
        %v784 = vadd.f32 0.0, %v783
        %785 = vmatmul.f32.gmra.mxu0 %v273
        %v786 = vpop.f32.mrf.mxu0
        %v787 = vadd.f32 0.0, %v786
        %788 = vmatmul.f32.gmra.mxu0 %v276
        %v789 = vpop.f32.mrf.mxu0
        %v790 = vadd.f32 0.0, %v789
        %791 = vmatmul.f32.gmra.mxu0 %v279
        %v792 = vpop.f32.mrf.mxu0
        %v793 = vadd.f32 0.0, %v792
        %794 = vmatmul.f32.gmra.mxu0 %v282
        %v795 = vpop.f32.mrf.mxu0
        %v796 = vadd.f32 0.0, %v795
        %797 = vmatmul.f32.gmra.mxu0 %v285
        %v798 = vpop.f32.mrf.mxu0
        %v799 = vadd.f32 0.0, %v798
        %800 = vmatmul.f32.gmra.mxu0 %v288
        %v801 = vpop.f32.mrf.mxu0
        %v802 = vadd.f32 0.0, %v801
        %803 = vmatmul.f32.gmra.mxu0 %v291
        %v804 = vpop.f32.mrf.mxu0
        %v805 = vadd.f32 0.0, %v804
        %806 = vmatmul.f32.gmra.mxu0 %v294
        %v807 = vpop.f32.mrf.mxu0
        %v808 = vadd.f32 0.0, %v807
        %809 = vmatmul.f32.gmra.mxu0 %v297
        %v810 = vpop.f32.mrf.mxu0
        %v811 = vadd.f32 0.0, %v810
        %812 = vmatmul.f32.gmra.mxu0 %v300
        %v813 = vpop.f32.mrf.mxu0
        %v814 = vadd.f32 0.0, %v813
        %815 = vmatmul.f32.gmra.mxu0 %v303
        %v816 = vpop.f32.mrf.mxu0
        %v817 = vadd.f32 0.0, %v816
        %818 = vmatmul.f32.gmra.mxu0 %v306
        %v819 = vpop.f32.mrf.mxu0
        %v820 = vadd.f32 0.0, %v819
        %821 = vmatmul.f32.gmra.mxu0 %v309
        %v822 = vpop.f32.mrf.mxu0
        %v823 = vadd.f32 0.0, %v822
        %824 = vmatmul.f32.gmra.mxu0 %v312
        %v825 = vpop.f32.mrf.mxu0
        %v826 = vadd.f32 0.0, %v825
        %827 = vmatmul.f32.gmra.mxu0 %v315
        %v828 = vpop.f32.mrf.mxu0
        %v829 = vadd.f32 0.0, %v828
        %830 = vmatmul.f32.gmra.mxu0 %v318
        %v831 = vpop.f32.mrf.mxu0
        %v832 = vadd.f32 0.0, %v831
        %833 = vmatmul.f32.gmra.mxu0 %v321
        %v834 = vpop.f32.mrf.mxu0
        %v835 = vadd.f32 0.0, %v834
        %836 = vmatmul.f32.gmra.mxu0 %v324
        %v837 = vpop.f32.mrf.mxu0
        %v838 = vadd.f32 0.0, %v837
        %839 = vmatmul.f32.gmra.mxu0 %v327
        %v840 = vpop.f32.mrf.mxu0
        %v841 = vadd.f32 0.0, %v840
        %842 = vmatmul.f32.gmra.mxu0 %v330
        %v843 = vpop.f32.mrf.mxu0
        %v844 = vadd.f32 0.0, %v843
        %845 = vmatmul.f32.gmra.mxu0 %v333
        %v846 = vpop.f32.mrf.mxu0
        %v847 = vadd.f32 0.0, %v846
        %848 = vmatmul.f32.gmra.mxu0 %v336
        %v849 = vpop.f32.mrf.mxu0
        %v850 = vadd.f32 0.0, %v849
        %851 = vmatmul.f32.gmra.mxu0 %v339
        %v852 = vpop.f32.mrf.mxu0
        %v853 = vadd.f32 0.0, %v852
        %854 = vmatmul.f32.gmra.mxu0 %v342
        %v855 = vpop.f32.mrf.mxu0
        %v856 = vadd.f32 0.0, %v855
        %857 = vmatmul.f32.gmra.mxu0 %v345
        %v858 = vpop.f32.mrf.mxu0
        %v859 = vadd.f32 0.0, %v858
        %860 = vmatmul.f32.gmra.mxu0 %v348
        %v861 = vpop.f32.mrf.mxu0
        %v862 = vadd.f32 0.0, %v861
        %863 = vmatmul.f32.gmra.mxu0 %v351
        %v864 = vpop.f32.mrf.mxu0
        %v865 = vadd.f32 0.0, %v864
        %866 = vmatmul.f32.gmra.mxu0 %v354
        %v867 = vpop.f32.mrf.mxu0
        %v868 = vadd.f32 0.0, %v867
        %869 = vmatmul.f32.gmra.mxu0 %v357
        %v870 = vpop.f32.mrf.mxu0
        %v871 = vadd.f32 0.0, %v870
        %872 = vmatmul.f32.gmra.mxu0 %v360
        %v873 = vpop.f32.mrf.mxu0
        %v874 = vadd.f32 0.0, %v873
        %875 = vmatmul.f32.gmra.mxu0 %v363
        %v876 = vpop.f32.mrf.mxu0
        %v877 = vadd.f32 0.0, %v876
        %878 = vmatmul.f32.gmra.mxu0 %v366
        %v879 = vpop.f32.mrf.mxu0
        %v880 = vadd.f32 0.0, %v879
        %881 = vmatmul.f32.gmra.mxu0 %v369
        %v882 = vpop.f32.mrf.mxu0
        %v883 = vadd.f32 0.0, %v882
        %884 = vmatmul.f32.gmra.mxu0 %v372
        %v885 = vpop.f32.mrf.mxu0
        %v886 = vadd.f32 0.0, %v885
        %887 = vmatmul.f32.gmra.mxu0 %v375
        %v888 = vpop.f32.mrf.mxu0
        %v889 = vadd.f32 0.0, %v888
        %890 = vmatmul.f32.gmra.mxu0 %v378
        %v891 = vpop.f32.mrf.mxu0
        %v892 = vadd.f32 0.0, %v891
        %893 = vmatmul.f32.gmra.mxu0 %v381
        %v894 = vpop.f32.mrf.mxu0
        %v895 = vadd.f32 0.0, %v894
        %896 = vmatmul.f32.gmra.mxu0 %v384
        %v897 = vpop.f32.mrf.mxu0
        %v898 = vadd.f32 0.0, %v897
        %899 = vmatmul.f32.gmra.mxu0 %v387
        %v900 = vpop.f32.mrf.mxu0
        %v901 = vadd.f32 0.0, %v900
        %902 = vmatmul.f32.gmra.mxu0 %v390
        %v903 = vpop.f32.mrf.mxu0
        %v904 = vadd.f32 0.0, %v903
        %905 = vmatmul.f32.gmra.mxu0 %v393
        %v906 = vpop.f32.mrf.mxu0
        %v907 = vadd.f32 0.0, %v906
        %908 = vmatmul.f32.gmra.mxu0 %v396
        %v909 = vpop.f32.mrf.mxu0
        %v910 = vadd.f32 0.0, %v909
        %911 = vmatmul.f32.gmra.mxu0 %v399
        %v912 = vpop.f32.mrf.mxu0
        %v913 = vadd.f32 0.0, %v912
        %914 = vmatmul.f32.gmra.mxu0 %v402
        %v915 = vpop.f32.mrf.mxu0
        %v916 = vadd.f32 0.0, %v915
        %917 = vmatmul.f32.gmra.mxu0 %v405
        %v918 = vpop.f32.mrf.mxu0
        %v919 = vadd.f32 0.0, %v918
        %920 = vmatmul.f32.gmra.mxu0 %v408
        %v921 = vpop.f32.mrf.mxu0
        %v922 = vadd.f32 0.0, %v921
        %923 = vmatmul.f32.gmra.mxu0 %v411
        %v924 = vpop.f32.mrf.mxu0
        %v925 = vadd.f32 0.0, %v924
        %926 = vmatmul.f32.gmra.mxu0 %v414
        %v927 = vpop.f32.mrf.mxu0
        %v928 = vadd.f32 0.0, %v927
        %929 = vmatmul.f32.gmra.mxu0 %v417
        %v930 = vpop.f32.mrf.mxu0
        %v931 = vadd.f32 0.0, %v930
        %932 = vmatmul.f32.gmra.mxu0 %v420
        %v933 = vpop.f32.mrf.mxu0
        %v934 = vadd.f32 0.0, %v933
        %935 = vmatmul.f32.gmra.mxu0 %v423
        %v936 = vpop.f32.mrf.mxu0
        %v937 = vadd.f32 0.0, %v936
        %938 = vmatmul.f32.gmra.mxu0 %v426
        %v939 = vpop.f32.mrf.mxu0
        %v940 = vadd.f32 0.0, %v939
        %941 = vmatmul.f32.gmra.mxu0 %v429
        %v942 = vpop.f32.mrf.mxu0
        %v943 = vadd.f32 0.0, %v942
        %944 = vmatmul.f32.gmra.mxu0 %v432
        %v945 = vpop.f32.mrf.mxu0
        %v946 = vadd.f32 0.0, %v945
        %947 = vdwg.mxu0
        %v948 = vxor.u32 %v548, 2147483648
        %v949 = vxor.u32 %v757, 2147483648
        %v950 = vxor.u32 %v551, 2147483648
        %v951 = vxor.u32 %v760, 2147483648
        %v952 = vxor.u32 %v554, 2147483648
        %v953 = vxor.u32 %v763, 2147483648
        %v954 = vxor.u32 %v557, 2147483648
        %v955 = vxor.u32 %v766, 2147483648
        %v956 = vxor.u32 %v560, 2147483648
        %v957 = vxor.u32 %v769, 2147483648
        %v958 = vxor.u32 %v563, 2147483648
        %v959 = vxor.u32 %v772, 2147483648
        %v960 = vxor.u32 %v566, 2147483648
        %v961 = vxor.u32 %v775, 2147483648
        %v962 = vxor.u32 %v569, 2147483648
        %v963 = vxor.u32 %v778, 2147483648
        %v964 = vxor.u32 %v572, 2147483648
        %v965 = vxor.u32 %v781, 2147483648
        %v966 = vxor.u32 %v575, 2147483648
        %v967 = vxor.u32 %v784, 2147483648
        %v968 = vxor.u32 %v578, 2147483648
        %v969 = vxor.u32 %v787, 2147483648
        %v970 = vxor.u32 %v581, 2147483648
        %v971 = vxor.u32 %v790, 2147483648
        %v972 = vxor.u32 %v584, 2147483648
        %v973 = vxor.u32 %v793, 2147483648
        %v974 = vxor.u32 %v587, 2147483648
        %v975 = vxor.u32 %v796, 2147483648
        %v976 = vxor.u32 %v590, 2147483648
        %v977 = vxor.u32 %v799, 2147483648
        %v978 = vxor.u32 %v593, 2147483648
        %v979 = vxor.u32 %v802, 2147483648
        %v980 = vxor.u32 %v596, 2147483648
        %v981 = vxor.u32 %v805, 2147483648
        %v982 = vxor.u32 %v599, 2147483648
        %v983 = vxor.u32 %v808, 2147483648
        %v984 = vxor.u32 %v602, 2147483648
        %v985 = vxor.u32 %v811, 2147483648
        %v986 = vxor.u32 %v605, 2147483648
        %v987 = vxor.u32 %v814, 2147483648
        %v988 = vxor.u32 %v608, 2147483648
        %v989 = vxor.u32 %v817, 2147483648
        %v990 = vxor.u32 %v611, 2147483648
        %v991 = vxor.u32 %v820, 2147483648
        %v992 = vxor.u32 %v614, 2147483648
        %v993 = vxor.u32 %v823, 2147483648
        %v994 = vxor.u32 %v617, 2147483648
        %v995 = vxor.u32 %v826, 2147483648
        %v996 = vxor.u32 %v620, 2147483648
        %v997 = vxor.u32 %v829, 2147483648
        %v998 = vxor.u32 %v623, 2147483648
        %v999 = vxor.u32 %v832, 2147483648
        %v1000 = vxor.u32 %v626, 2147483648
        %v1001 = vxor.u32 %v835, 2147483648
        %v1002 = vxor.u32 %v629, 2147483648
        %v1003 = vxor.u32 %v838, 2147483648
        %v1004 = vxor.u32 %v632, 2147483648
        %v1005 = vxor.u32 %v841, 2147483648
        %v1006 = vxor.u32 %v635, 2147483648
        %v1007 = vxor.u32 %v844, 2147483648
        %v1008 = vxor.u32 %v638, 2147483648
        %v1009 = vxor.u32 %v847, 2147483648
        %v1010 = vxor.u32 %v641, 2147483648
        %v1011 = vxor.u32 %v850, 2147483648
        %v1012 = vxor.u32 %v644, 2147483648
        %v1013 = vxor.u32 %v853, 2147483648
        %v1014 = vxor.u32 %v647, 2147483648
        %v1015 = vxor.u32 %v856, 2147483648
        %v1016 = vxor.u32 %v650, 2147483648
        %v1017 = vxor.u32 %v859, 2147483648
        %v1018 = vxor.u32 %v653, 2147483648
        %v1019 = vxor.u32 %v862, 2147483648
        %v1020 = vxor.u32 %v656, 2147483648
        %v1021 = vxor.u32 %v865, 2147483648
        %v1022 = vxor.u32 %v659, 2147483648
        %v1023 = vxor.u32 %v868, 2147483648
        %v1024 = vxor.u32 %v662, 2147483648
        %v1025 = vxor.u32 %v871, 2147483648
        %v1026 = vxor.u32 %v665, 2147483648
        %v1027 = vxor.u32 %v874, 2147483648
        %v1028 = vxor.u32 %v668, 2147483648
        %v1029 = vxor.u32 %v877, 2147483648
        %v1030 = vxor.u32 %v671, 2147483648
        %v1031 = vxor.u32 %v880, 2147483648
        %v1032 = vxor.u32 %v674, 2147483648
        %v1033 = vxor.u32 %v883, 2147483648
        %v1034 = vxor.u32 %v677, 2147483648
        %v1035 = vxor.u32 %v886, 2147483648
        %v1036 = vxor.u32 %v680, 2147483648
        %v1037 = vxor.u32 %v889, 2147483648
        %v1038 = vxor.u32 %v683, 2147483648
        %v1039 = vxor.u32 %v892, 2147483648
        %v1040 = vxor.u32 %v686, 2147483648
        %v1041 = vxor.u32 %v895, 2147483648
        %v1042 = vxor.u32 %v689, 2147483648
        %v1043 = vxor.u32 %v898, 2147483648
        %v1044 = vxor.u32 %v692, 2147483648
        %v1045 = vxor.u32 %v901, 2147483648
        %v1046 = vxor.u32 %v695, 2147483648
        %v1047 = vxor.u32 %v904, 2147483648
        %v1048 = vxor.u32 %v698, 2147483648
        %v1049 = vxor.u32 %v907, 2147483648
        %v1050 = vxor.u32 %v701, 2147483648
        %v1051 = vxor.u32 %v910, 2147483648
        %v1052 = vxor.u32 %v704, 2147483648
        %v1053 = vxor.u32 %v913, 2147483648
        %v1054 = vxor.u32 %v707, 2147483648
        %v1055 = vxor.u32 %v916, 2147483648
        %v1056 = vxor.u32 %v710, 2147483648
        %v1057 = vxor.u32 %v919, 2147483648
        %v1058 = vxor.u32 %v713, 2147483648
        %v1059 = vxor.u32 %v922, 2147483648
        %v1060 = vxor.u32 %v716, 2147483648
        %v1061 = vxor.u32 %v925, 2147483648
        %v1062 = vxor.u32 %v719, 2147483648
        %v1063 = vxor.u32 %v928, 2147483648
        %v1064 = vxor.u32 %v722, 2147483648
        %v1065 = vxor.u32 %v931, 2147483648
        %v1066 = vxor.u32 %v725, 2147483648
        %v1067 = vxor.u32 %v934, 2147483648
        %v1068 = vxor.u32 %v728, 2147483648
        %v1069 = vxor.u32 %v937, 2147483648
        %v1070 = vxor.u32 %v731, 2147483648
        %v1071 = vxor.u32 %v940, 2147483648
        %v1072 = vxor.u32 %v734, 2147483648
        %v1073 = vxor.u32 %v943, 2147483648
        %v1074 = vxor.u32 %v737, 2147483648
        %v1075 = vxor.u32 %v946, 2147483648
        %v1076 = vmul.f32 %v948, 1.442695
        %v1077 = vpow.pop %v1076
        %v1078 = vmul.f32 %v949, 1.442695
        %v1079 = vpow.pop %v1078
        %v1080 = vmul.f32 %v950, 1.442695
        %v1081 = vpow.pop %v1080
        %v1082 = vmul.f32 %v951, 1.442695
        %v1083 = vpow.pop %v1082
        %v1084 = vmul.f32 %v952, 1.442695
        %v1085 = vpow.pop %v1084
        %v1086 = vmul.f32 %v953, 1.442695
        %v1087 = vpow.pop %v1086
        %v1088 = vmul.f32 %v954, 1.442695
        %v1089 = vpow.pop %v1088
        %v1090 = vmul.f32 %v955, 1.442695
        %v1091 = vpow.pop %v1090
        %v1092 = vmul.f32 %v956, 1.442695
        %v1093 = vpow.pop %v1092
        %v1094 = vmul.f32 %v957, 1.442695
        %v1095 = vpow.pop %v1094
        %v1096 = vmul.f32 %v958, 1.442695
        %v1097 = vpow.pop %v1096
        %v1098 = vmul.f32 %v959, 1.442695
        %v1099 = vpow.pop %v1098
        %v1100 = vmul.f32 %v960, 1.442695
        %v1101 = vpow.pop %v1100
        %v1102 = vmul.f32 %v961, 1.442695
        %v1103 = vpow.pop %v1102
        %v1104 = vmul.f32 %v962, 1.442695
        %v1105 = vpow.pop %v1104
        %v1106 = vmul.f32 %v963, 1.442695
        %v1107 = vpow.pop %v1106
        %v1108 = vmul.f32 %v964, 1.442695
        %v1109 = vpow.pop %v1108
        %v1110 = vmul.f32 %v965, 1.442695
        %v1111 = vpow.pop %v1110
        %v1112 = vmul.f32 %v966, 1.442695
        %v1113 = vpow.pop %v1112
        %v1114 = vmul.f32 %v967, 1.442695
        %v1115 = vpow.pop %v1114
        %v1116 = vmul.f32 %v968, 1.442695
        %v1117 = vpow.pop %v1116
        %v1118 = vmul.f32 %v969, 1.442695
        %v1119 = vpow.pop %v1118
        %v1120 = vmul.f32 %v970, 1.442695
        %v1121 = vpow.pop %v1120
        %v1122 = vmul.f32 %v971, 1.442695
        %v1123 = vpow.pop %v1122
        %v1124 = vmul.f32 %v972, 1.442695
        %v1125 = vpow.pop %v1124
        %v1126 = vmul.f32 %v973, 1.442695
        %v1127 = vpow.pop %v1126
        %v1128 = vmul.f32 %v974, 1.442695
        %v1129 = vpow.pop %v1128
        %v1130 = vmul.f32 %v975, 1.442695
        %v1131 = vpow.pop %v1130
        %v1132 = vmul.f32 %v976, 1.442695
        %v1133 = vpow.pop %v1132
        %v1134 = vmul.f32 %v977, 1.442695
        %v1135 = vpow.pop %v1134
        %v1136 = vmul.f32 %v978, 1.442695
        %v1137 = vpow.pop %v1136
        %v1138 = vmul.f32 %v979, 1.442695
        %v1139 = vpow.pop %v1138
        %v1140 = vmul.f32 %v980, 1.442695
        %v1141 = vpow.pop %v1140
        %v1142 = vmul.f32 %v981, 1.442695
        %v1143 = vpow.pop %v1142
        %v1144 = vmul.f32 %v982, 1.442695
        %v1145 = vpow.pop %v1144
        %v1146 = vmul.f32 %v983, 1.442695
        %v1147 = vpow.pop %v1146
        %v1148 = vmul.f32 %v984, 1.442695
        %v1149 = vpow.pop %v1148
        %v1150 = vmul.f32 %v985, 1.442695
        %v1151 = vpow.pop %v1150
        %v1152 = vmul.f32 %v986, 1.442695
        %v1153 = vpow.pop %v1152
        %v1154 = vmul.f32 %v987, 1.442695
        %v1155 = vpow.pop %v1154
        %v1156 = vmul.f32 %v988, 1.442695
        %v1157 = vpow.pop %v1156
        %v1158 = vmul.f32 %v989, 1.442695
        %v1159 = vpow.pop %v1158
        %v1160 = vmul.f32 %v990, 1.442695
        %v1161 = vpow.pop %v1160
        %v1162 = vmul.f32 %v991, 1.442695
        %v1163 = vpow.pop %v1162
        %v1164 = vmul.f32 %v992, 1.442695
        %v1165 = vpow.pop %v1164
        %v1166 = vmul.f32 %v993, 1.442695
        %v1167 = vpow.pop %v1166
        %v1168 = vmul.f32 %v994, 1.442695
        %v1169 = vpow.pop %v1168
        %v1170 = vmul.f32 %v995, 1.442695
        %v1171 = vpow.pop %v1170
        %v1172 = vmul.f32 %v996, 1.442695
        %v1173 = vpow.pop %v1172
        %v1174 = vmul.f32 %v997, 1.442695
        %v1175 = vpow.pop %v1174
        %v1176 = vmul.f32 %v998, 1.442695
        %v1177 = vpow.pop %v1176
        %v1178 = vmul.f32 %v999, 1.442695
        %v1179 = vpow.pop %v1178
        %v1180 = vmul.f32 %v1000, 1.442695
        %v1181 = vpow.pop %v1180
        %v1182 = vmul.f32 %v1001, 1.442695
        %v1183 = vpow.pop %v1182
        %v1184 = vmul.f32 %v1002, 1.442695
        %v1185 = vpow.pop %v1184
        %v1186 = vmul.f32 %v1003, 1.442695
        %v1187 = vpow.pop %v1186
        %v1188 = vmul.f32 %v1004, 1.442695
        %v1189 = vpow.pop %v1188
        %v1190 = vmul.f32 %v1005, 1.442695
        %v1191 = vpow.pop %v1190
        %v1192 = vmul.f32 %v1006, 1.442695
        %v1193 = vpow.pop %v1192
        %v1194 = vmul.f32 %v1007, 1.442695
        %v1195 = vpow.pop %v1194
        %v1196 = vmul.f32 %v1008, 1.442695
        %v1197 = vpow.pop %v1196
        %v1198 = vmul.f32 %v1009, 1.442695
        %v1199 = vpow.pop %v1198
        %v1200 = vmul.f32 %v1010, 1.442695
        %v1201 = vpow.pop %v1200
        %v1202 = vmul.f32 %v1011, 1.442695
        %v1203 = vpow.pop %v1202
        %v1204 = vmul.f32 %v1012, 1.442695
        %v1205 = vpow.pop %v1204
        %v1206 = vmul.f32 %v1013, 1.442695
        %v1207 = vpow.pop %v1206
        %v1208 = vmul.f32 %v1014, 1.442695
        %v1209 = vpow.pop %v1208
        %v1210 = vmul.f32 %v1015, 1.442695
        %v1211 = vpow.pop %v1210
        %v1212 = vmul.f32 %v1016, 1.442695
        %v1213 = vpow.pop %v1212
        %v1214 = vmul.f32 %v1017, 1.442695
        %v1215 = vpow.pop %v1214
        %v1216 = vmul.f32 %v1018, 1.442695
        %v1217 = vpow.pop %v1216
        %v1218 = vmul.f32 %v1019, 1.442695
        %v1219 = vpow.pop %v1218
        %v1220 = vmul.f32 %v1020, 1.442695
        %v1221 = vpow.pop %v1220
        %v1222 = vmul.f32 %v1021, 1.442695
        %v1223 = vpow.pop %v1222
        %v1224 = vmul.f32 %v1022, 1.442695
        %v1225 = vpow.pop %v1224
        %v1226 = vmul.f32 %v1023, 1.442695
        %v1227 = vpow.pop %v1226
        %v1228 = vmul.f32 %v1024, 1.442695
        %v1229 = vpow.pop %v1228
        %v1230 = vmul.f32 %v1025, 1.442695
        %v1231 = vpow.pop %v1230
        %v1232 = vmul.f32 %v1026, 1.442695
        %v1233 = vpow.pop %v1232
        %v1234 = vmul.f32 %v1027, 1.442695
        %v1235 = vpow.pop %v1234
        %v1236 = vmul.f32 %v1028, 1.442695
        %v1237 = vpow.pop %v1236
        %v1238 = vmul.f32 %v1029, 1.442695
        %v1239 = vpow.pop %v1238
        %v1240 = vmul.f32 %v1030, 1.442695
        %v1241 = vpow.pop %v1240
        %v1242 = vmul.f32 %v1031, 1.442695
        %v1243 = vpow.pop %v1242
        %v1244 = vmul.f32 %v1032, 1.442695
        %v1245 = vpow.pop %v1244
        %v1246 = vmul.f32 %v1033, 1.442695
        %v1247 = vpow.pop %v1246
        %v1248 = vmul.f32 %v1034, 1.442695
        %v1249 = vpow.pop %v1248
        %v1250 = vmul.f32 %v1035, 1.442695
        %v1251 = vpow.pop %v1250
        %v1252 = vmul.f32 %v1036, 1.442695
        %v1253 = vpow.pop %v1252
        %v1254 = vmul.f32 %v1037, 1.442695
        %v1255 = vpow.pop %v1254
        %v1256 = vmul.f32 %v1038, 1.442695
        %v1257 = vpow.pop %v1256
        %v1258 = vmul.f32 %v1039, 1.442695
        %v1259 = vpow.pop %v1258
        %v1260 = vmul.f32 %v1040, 1.442695
        %v1261 = vpow.pop %v1260
        %v1262 = vmul.f32 %v1041, 1.442695
        %v1263 = vpow.pop %v1262
        %v1264 = vmul.f32 %v1042, 1.442695
        %v1265 = vpow.pop %v1264
        %v1266 = vmul.f32 %v1043, 1.442695
        %v1267 = vpow.pop %v1266
        %v1268 = vmul.f32 %v1044, 1.442695
        %v1269 = vpow.pop %v1268
        %v1270 = vmul.f32 %v1045, 1.442695
        %v1271 = vpow.pop %v1270
        %v1272 = vmul.f32 %v1046, 1.442695
        %v1273 = vpow.pop %v1272
        %v1274 = vmul.f32 %v1047, 1.442695
        %v1275 = vpow.pop %v1274
        %v1276 = vmul.f32 %v1048, 1.442695
        %v1277 = vpow.pop %v1276
        %v1278 = vmul.f32 %v1049, 1.442695
        %v1279 = vpow.pop %v1278
        %v1280 = vmul.f32 %v1050, 1.442695
        %v1281 = vpow.pop %v1280
        %v1282 = vmul.f32 %v1051, 1.442695
        %v1283 = vpow.pop %v1282
        %v1284 = vmul.f32 %v1052, 1.442695
        %v1285 = vpow.pop %v1284
        %v1286 = vmul.f32 %v1053, 1.442695
        %v1287 = vpow.pop %v1286
        %v1288 = vmul.f32 %v1054, 1.442695
        %v1289 = vpow.pop %v1288
        %v1290 = vmul.f32 %v1055, 1.442695
        %v1291 = vpow.pop %v1290
        %v1292 = vmul.f32 %v1056, 1.442695
        %v1293 = vpow.pop %v1292
        %v1294 = vmul.f32 %v1057, 1.442695
        %v1295 = vpow.pop %v1294
        %v1296 = vmul.f32 %v1058, 1.442695
        %v1297 = vpow.pop %v1296
        %v1298 = vmul.f32 %v1059, 1.442695
        %v1299 = vpow.pop %v1298
        %v1300 = vmul.f32 %v1060, 1.442695
        %v1301 = vpow.pop %v1300
        %v1302 = vmul.f32 %v1061, 1.442695
        %v1303 = vpow.pop %v1302
        %v1304 = vmul.f32 %v1062, 1.442695
        %v1305 = vpow.pop %v1304
        %v1306 = vmul.f32 %v1063, 1.442695
        %v1307 = vpow.pop %v1306
        %v1308 = vmul.f32 %v1064, 1.442695
        %v1309 = vpow.pop %v1308
        %v1310 = vmul.f32 %v1065, 1.442695
        %v1311 = vpow.pop %v1310
        %v1312 = vmul.f32 %v1066, 1.442695
        %v1313 = vpow.pop %v1312
        %v1314 = vmul.f32 %v1067, 1.442695
        %v1315 = vpow.pop %v1314
        %v1316 = vmul.f32 %v1068, 1.442695
        %v1317 = vpow.pop %v1316
        %v1318 = vmul.f32 %v1069, 1.442695
        %v1319 = vpow.pop %v1318
        %v1320 = vmul.f32 %v1070, 1.442695
        %v1321 = vpow.pop %v1320
        %v1322 = vmul.f32 %v1071, 1.442695
        %v1323 = vpow.pop %v1322
        %v1324 = vmul.f32 %v1072, 1.442695
        %v1325 = vpow.pop %v1324
        %v1326 = vmul.f32 %v1073, 1.442695
        %v1327 = vpow.pop %v1326
        %v1328 = vmul.f32 %v1074, 1.442695
        %v1329 = vpow.pop %v1328
        %v1330 = vmul.f32 %v1075, 1.442695
        %v1331 = vpow.pop %v1330
        %v1332 = vadd.f32 %v1077, 1.0
        %v1333 = vadd.f32 %v1079, 1.0
        %v1334 = vadd.f32 %v1081, 1.0
        %v1335 = vadd.f32 %v1083, 1.0
        %v1336 = vadd.f32 %v1085, 1.0
        %v1337 = vadd.f32 %v1087, 1.0
        %v1338 = vadd.f32 %v1089, 1.0
        %v1339 = vadd.f32 %v1091, 1.0
        %v1340 = vadd.f32 %v1093, 1.0
        %v1341 = vadd.f32 %v1095, 1.0
        %v1342 = vadd.f32 %v1097, 1.0
        %v1343 = vadd.f32 %v1099, 1.0
        %v1344 = vadd.f32 %v1101, 1.0
        %v1345 = vadd.f32 %v1103, 1.0
        %v1346 = vadd.f32 %v1105, 1.0
        %v1347 = vadd.f32 %v1107, 1.0
        %v1348 = vadd.f32 %v1109, 1.0
        %v1349 = vadd.f32 %v1111, 1.0
        %v1350 = vadd.f32 %v1113, 1.0
        %v1351 = vadd.f32 %v1115, 1.0
        %v1352 = vadd.f32 %v1117, 1.0
        %v1353 = vadd.f32 %v1119, 1.0
        %v1354 = vadd.f32 %v1121, 1.0
        %v1355 = vadd.f32 %v1123, 1.0
        %v1356 = vadd.f32 %v1125, 1.0
        %v1357 = vadd.f32 %v1127, 1.0
        %v1358 = vadd.f32 %v1129, 1.0
        %v1359 = vadd.f32 %v1131, 1.0
        %v1360 = vadd.f32 %v1133, 1.0
        %v1361 = vadd.f32 %v1135, 1.0
        %v1362 = vadd.f32 %v1137, 1.0
        %v1363 = vadd.f32 %v1139, 1.0
        %v1364 = vadd.f32 %v1141, 1.0
        %v1365 = vadd.f32 %v1143, 1.0
        %v1366 = vadd.f32 %v1145, 1.0
        %v1367 = vadd.f32 %v1147, 1.0
        %v1368 = vadd.f32 %v1149, 1.0
        %v1369 = vadd.f32 %v1151, 1.0
        %v1370 = vadd.f32 %v1153, 1.0
        %v1371 = vadd.f32 %v1155, 1.0
        %v1372 = vadd.f32 %v1157, 1.0
        %v1373 = vadd.f32 %v1159, 1.0
        %v1374 = vadd.f32 %v1161, 1.0
        %v1375 = vadd.f32 %v1163, 1.0
        %v1376 = vadd.f32 %v1165, 1.0
        %v1377 = vadd.f32 %v1167, 1.0
        %v1378 = vadd.f32 %v1169, 1.0
        %v1379 = vadd.f32 %v1171, 1.0
        %v1380 = vadd.f32 %v1173, 1.0
        %v1381 = vadd.f32 %v1175, 1.0
        %v1382 = vadd.f32 %v1177, 1.0
        %v1383 = vadd.f32 %v1179, 1.0
        %v1384 = vadd.f32 %v1181, 1.0
        %v1385 = vadd.f32 %v1183, 1.0
        %v1386 = vadd.f32 %v1185, 1.0
        %v1387 = vadd.f32 %v1187, 1.0
        %v1388 = vadd.f32 %v1189, 1.0
        %v1389 = vadd.f32 %v1191, 1.0
        %v1390 = vadd.f32 %v1193, 1.0
        %v1391 = vadd.f32 %v1195, 1.0
        %v1392 = vadd.f32 %v1197, 1.0
        %v1393 = vadd.f32 %v1199, 1.0
        %v1394 = vadd.f32 %v1201, 1.0
        %v1395 = vadd.f32 %v1203, 1.0
        %v1396 = vadd.f32 %v1205, 1.0
        %v1397 = vadd.f32 %v1207, 1.0
        %v1398 = vadd.f32 %v1209, 1.0
        %v1399 = vadd.f32 %v1211, 1.0
        %v1400 = vadd.f32 %v1213, 1.0
        %v1401 = vadd.f32 %v1215, 1.0
        %v1402 = vadd.f32 %v1217, 1.0
        %v1403 = vadd.f32 %v1219, 1.0
        %v1404 = vadd.f32 %v1221, 1.0
        %v1405 = vadd.f32 %v1223, 1.0
        %v1406 = vadd.f32 %v1225, 1.0
        %v1407 = vadd.f32 %v1227, 1.0
        %v1408 = vadd.f32 %v1229, 1.0
        %v1409 = vadd.f32 %v1231, 1.0
        %v1410 = vadd.f32 %v1233, 1.0
        %v1411 = vadd.f32 %v1235, 1.0
        %v1412 = vadd.f32 %v1237, 1.0
        %v1413 = vadd.f32 %v1239, 1.0
        %v1414 = vadd.f32 %v1241, 1.0
        %v1415 = vadd.f32 %v1243, 1.0
        %v1416 = vadd.f32 %v1245, 1.0
        %v1417 = vadd.f32 %v1247, 1.0
        %v1418 = vadd.f32 %v1249, 1.0
        %v1419 = vadd.f32 %v1251, 1.0
        %v1420 = vadd.f32 %v1253, 1.0
        %v1421 = vadd.f32 %v1255, 1.0
        %v1422 = vadd.f32 %v1257, 1.0
        %v1423 = vadd.f32 %v1259, 1.0
        %v1424 = vadd.f32 %v1261, 1.0
        %v1425 = vadd.f32 %v1263, 1.0
        %v1426 = vadd.f32 %v1265, 1.0
        %v1427 = vadd.f32 %v1267, 1.0
        %v1428 = vadd.f32 %v1269, 1.0
        %v1429 = vadd.f32 %v1271, 1.0
        %v1430 = vadd.f32 %v1273, 1.0
        %v1431 = vadd.f32 %v1275, 1.0
        %v1432 = vadd.f32 %v1277, 1.0
        %v1433 = vadd.f32 %v1279, 1.0
        %v1434 = vadd.f32 %v1281, 1.0
        %v1435 = vadd.f32 %v1283, 1.0
        %v1436 = vadd.f32 %v1285, 1.0
        %v1437 = vadd.f32 %v1287, 1.0
        %v1438 = vadd.f32 %v1289, 1.0
        %v1439 = vadd.f32 %v1291, 1.0
        %v1440 = vadd.f32 %v1293, 1.0
        %v1441 = vadd.f32 %v1295, 1.0
        %v1442 = vadd.f32 %v1297, 1.0
        %v1443 = vadd.f32 %v1299, 1.0
        %v1444 = vadd.f32 %v1301, 1.0
        %v1445 = vadd.f32 %v1303, 1.0
        %v1446 = vadd.f32 %v1305, 1.0
        %v1447 = vadd.f32 %v1307, 1.0
        %v1448 = vadd.f32 %v1309, 1.0
        %v1449 = vadd.f32 %v1311, 1.0
        %v1450 = vadd.f32 %v1313, 1.0
        %v1451 = vadd.f32 %v1315, 1.0
        %v1452 = vadd.f32 %v1317, 1.0
        %v1453 = vadd.f32 %v1319, 1.0
        %v1454 = vadd.f32 %v1321, 1.0
        %v1455 = vadd.f32 %v1323, 1.0
        %v1456 = vadd.f32 %v1325, 1.0
        %v1457 = vadd.f32 %v1327, 1.0
        %v1458 = vadd.f32 %v1329, 1.0
        %v1459 = vadd.f32 %v1331, 1.0
        %v1460 = vrcp.pop %v1332
        %v1461 = vmul.f32 %v1332, %v1460
        %v1462 = vsub.f32 1.0, %v1461
        %v1463 = vmul.f32 %v1460, %v1462
        %v1464 = vadd.f32 %v1460, %v1463
        %vm1465 = vweird.f32 %v1332
        %vm1466 = vweird.f32 %v1460
        %vm1467 = vmor %vm1465, %vm1466
        %v1468 = vsel %vm1467, %v1460, %v1464
        %v1469 = vand.u32 2147483647, %v1332
        %vm1470 = vcmp.eq.f32.partialorder %v1469, 8.507059e+37
        %v1471 = vand.u32 %v1332, 2147483648
        %v1472 = vor.u32 1.1754944e-38, %v1471
        %v1473 = vsel %vm1470, %v1472, %v1468
        %v1474 = vmul.f32 1.0, %v1473
        %v1475 = vrcp.pop %v1333
        %v1476 = vmul.f32 %v1333, %v1475
        %v1477 = vsub.f32 1.0, %v1476
        %v1478 = vmul.f32 %v1475, %v1477
        %v1479 = vadd.f32 %v1475, %v1478
        %vm1480 = vweird.f32 %v1333
        %vm1481 = vweird.f32 %v1475
        %vm1482 = vmor %vm1480, %vm1481
        %v1483 = vsel %vm1482, %v1475, %v1479
        %v1484 = vand.u32 2147483647, %v1333
        %vm1485 = vcmp.eq.f32.partialorder %v1484, 8.507059e+37
        %v1486 = vand.u32 %v1333, 2147483648
        %v1487 = vor.u32 1.1754944e-38, %v1486
        %v1488 = vsel %vm1485, %v1487, %v1483
        %v1489 = vmul.f32 1.0, %v1488
        %v1490 = vrcp.pop %v1334
        %v1491 = vmul.f32 %v1334, %v1490
        %v1492 = vsub.f32 1.0, %v1491
        %v1493 = vmul.f32 %v1490, %v1492
        %v1494 = vadd.f32 %v1490, %v1493
        %vm1495 = vweird.f32 %v1334
        %vm1496 = vweird.f32 %v1490
        %vm1497 = vmor %vm1495, %vm1496
        %v1498 = vsel %vm1497, %v1490, %v1494
        %v1499 = vand.u32 2147483647, %v1334
        %vm1500 = vcmp.eq.f32.partialorder %v1499, 8.507059e+37
        %v1501 = vand.u32 %v1334, 2147483648
        %v1502 = vor.u32 1.1754944e-38, %v1501
        %v1503 = vsel %vm1500, %v1502, %v1498
        %v1504 = vmul.f32 1.0, %v1503
        %v1505 = vrcp.pop %v1335
        %v1506 = vmul.f32 %v1335, %v1505
        %v1507 = vsub.f32 1.0, %v1506
        %v1508 = vmul.f32 %v1505, %v1507
        %v1509 = vadd.f32 %v1505, %v1508
        %vm1510 = vweird.f32 %v1335
        %vm1511 = vweird.f32 %v1505
        %vm1512 = vmor %vm1510, %vm1511
        %v1513 = vsel %vm1512, %v1505, %v1509
        %v1514 = vand.u32 2147483647, %v1335
        %vm1515 = vcmp.eq.f32.partialorder %v1514, 8.507059e+37
        %v1516 = vand.u32 %v1335, 2147483648
        %v1517 = vor.u32 1.1754944e-38, %v1516
        %v1518 = vsel %vm1515, %v1517, %v1513
        %v1519 = vmul.f32 1.0, %v1518
        %v1520 = vrcp.pop %v1336
        %v1521 = vmul.f32 %v1336, %v1520
        %v1522 = vsub.f32 1.0, %v1521
        %v1523 = vmul.f32 %v1520, %v1522
        %v1524 = vadd.f32 %v1520, %v1523
        %vm1525 = vweird.f32 %v1336
        %vm1526 = vweird.f32 %v1520
        %vm1527 = vmor %vm1525, %vm1526
        %v1528 = vsel %vm1527, %v1520, %v1524
        %v1529 = vand.u32 2147483647, %v1336
        %vm1530 = vcmp.eq.f32.partialorder %v1529, 8.507059e+37
        %v1531 = vand.u32 %v1336, 2147483648
        %v1532 = vor.u32 1.1754944e-38, %v1531
        %v1533 = vsel %vm1530, %v1532, %v1528
        %v1534 = vmul.f32 1.0, %v1533
        %v1535 = vrcp.pop %v1337
        %v1536 = vmul.f32 %v1337, %v1535
        %v1537 = vsub.f32 1.0, %v1536
        %v1538 = vmul.f32 %v1535, %v1537
        %v1539 = vadd.f32 %v1535, %v1538
        %vm1540 = vweird.f32 %v1337
        %vm1541 = vweird.f32 %v1535
        %vm1542 = vmor %vm1540, %vm1541
        %v1543 = vsel %vm1542, %v1535, %v1539
        %v1544 = vand.u32 2147483647, %v1337
        %vm1545 = vcmp.eq.f32.partialorder %v1544, 8.507059e+37
        %v1546 = vand.u32 %v1337, 2147483648
        %v1547 = vor.u32 1.1754944e-38, %v1546
        %v1548 = vsel %vm1545, %v1547, %v1543
        %v1549 = vmul.f32 1.0, %v1548
        %v1550 = vrcp.pop %v1338
        %v1551 = vmul.f32 %v1338, %v1550
        %v1552 = vsub.f32 1.0, %v1551
        %v1553 = vmul.f32 %v1550, %v1552
        %v1554 = vadd.f32 %v1550, %v1553
        %vm1555 = vweird.f32 %v1338
        %vm1556 = vweird.f32 %v1550
        %vm1557 = vmor %vm1555, %vm1556
        %v1558 = vsel %vm1557, %v1550, %v1554
        %v1559 = vand.u32 2147483647, %v1338
        %vm1560 = vcmp.eq.f32.partialorder %v1559, 8.507059e+37
        %v1561 = vand.u32 %v1338, 2147483648
        %v1562 = vor.u32 1.1754944e-38, %v1561
        %v1563 = vsel %vm1560, %v1562, %v1558
        %v1564 = vmul.f32 1.0, %v1563
        %v1565 = vrcp.pop %v1339
        %v1566 = vmul.f32 %v1339, %v1565
        %v1567 = vsub.f32 1.0, %v1566
        %v1568 = vmul.f32 %v1565, %v1567
        %v1569 = vadd.f32 %v1565, %v1568
        %vm1570 = vweird.f32 %v1339
        %vm1571 = vweird.f32 %v1565
        %vm1572 = vmor %vm1570, %vm1571
        %v1573 = vsel %vm1572, %v1565, %v1569
        %v1574 = vand.u32 2147483647, %v1339
        %vm1575 = vcmp.eq.f32.partialorder %v1574, 8.507059e+37
        %v1576 = vand.u32 %v1339, 2147483648
        %v1577 = vor.u32 1.1754944e-38, %v1576
        %v1578 = vsel %vm1575, %v1577, %v1573
        %v1579 = vmul.f32 1.0, %v1578
        %v1580 = vrcp.pop %v1340
        %v1581 = vmul.f32 %v1340, %v1580
        %v1582 = vsub.f32 1.0, %v1581
        %v1583 = vmul.f32 %v1580, %v1582
        %v1584 = vadd.f32 %v1580, %v1583
        %vm1585 = vweird.f32 %v1340
        %vm1586 = vweird.f32 %v1580
        %vm1587 = vmor %vm1585, %vm1586
        %v1588 = vsel %vm1587, %v1580, %v1584
        %v1589 = vand.u32 2147483647, %v1340
        %vm1590 = vcmp.eq.f32.partialorder %v1589, 8.507059e+37
        %v1591 = vand.u32 %v1340, 2147483648
        %v1592 = vor.u32 1.1754944e-38, %v1591
        %v1593 = vsel %vm1590, %v1592, %v1588
        %v1594 = vmul.f32 1.0, %v1593
        %v1595 = vrcp.pop %v1341
        %v1596 = vmul.f32 %v1341, %v1595
        %v1597 = vsub.f32 1.0, %v1596
        %v1598 = vmul.f32 %v1595, %v1597
        %v1599 = vadd.f32 %v1595, %v1598
        %vm1600 = vweird.f32 %v1341
        %vm1601 = vweird.f32 %v1595
        %vm1602 = vmor %vm1600, %vm1601
        %v1603 = vsel %vm1602, %v1595, %v1599
        %v1604 = vand.u32 2147483647, %v1341
        %vm1605 = vcmp.eq.f32.partialorder %v1604, 8.507059e+37
        %v1606 = vand.u32 %v1341, 2147483648
        %v1607 = vor.u32 1.1754944e-38, %v1606
        %v1608 = vsel %vm1605, %v1607, %v1603
        %v1609 = vmul.f32 1.0, %v1608
        %v1610 = vrcp.pop %v1342
        %v1611 = vmul.f32 %v1342, %v1610
        %v1612 = vsub.f32 1.0, %v1611
        %v1613 = vmul.f32 %v1610, %v1612
        %v1614 = vadd.f32 %v1610, %v1613
        %vm1615 = vweird.f32 %v1342
        %vm1616 = vweird.f32 %v1610
        %vm1617 = vmor %vm1615, %vm1616
        %v1618 = vsel %vm1617, %v1610, %v1614
        %v1619 = vand.u32 2147483647, %v1342
        %vm1620 = vcmp.eq.f32.partialorder %v1619, 8.507059e+37
        %v1621 = vand.u32 %v1342, 2147483648
        %v1622 = vor.u32 1.1754944e-38, %v1621
        %v1623 = vsel %vm1620, %v1622, %v1618
        %v1624 = vmul.f32 1.0, %v1623
        %v1625 = vrcp.pop %v1343
        %v1626 = vmul.f32 %v1343, %v1625
        %v1627 = vsub.f32 1.0, %v1626
        %v1628 = vmul.f32 %v1625, %v1627
        %v1629 = vadd.f32 %v1625, %v1628
        %vm1630 = vweird.f32 %v1343
        %vm1631 = vweird.f32 %v1625
        %vm1632 = vmor %vm1630, %vm1631
        %v1633 = vsel %vm1632, %v1625, %v1629
        %v1634 = vand.u32 2147483647, %v1343
        %vm1635 = vcmp.eq.f32.partialorder %v1634, 8.507059e+37
        %v1636 = vand.u32 %v1343, 2147483648
        %v1637 = vor.u32 1.1754944e-38, %v1636
        %v1638 = vsel %vm1635, %v1637, %v1633
        %v1639 = vmul.f32 1.0, %v1638
        %v1640 = vrcp.pop %v1344
        %v1641 = vmul.f32 %v1344, %v1640
        %v1642 = vsub.f32 1.0, %v1641
        %v1643 = vmul.f32 %v1640, %v1642
        %v1644 = vadd.f32 %v1640, %v1643
        %vm1645 = vweird.f32 %v1344
        %vm1646 = vweird.f32 %v1640
        %vm1647 = vmor %vm1645, %vm1646
        %v1648 = vsel %vm1647, %v1640, %v1644
        %v1649 = vand.u32 2147483647, %v1344
        %vm1650 = vcmp.eq.f32.partialorder %v1649, 8.507059e+37
        %v1651 = vand.u32 %v1344, 2147483648
        %v1652 = vor.u32 1.1754944e-38, %v1651
        %v1653 = vsel %vm1650, %v1652, %v1648
        %v1654 = vmul.f32 1.0, %v1653
        %v1655 = vrcp.pop %v1345
        %v1656 = vmul.f32 %v1345, %v1655
        %v1657 = vsub.f32 1.0, %v1656
        %v1658 = vmul.f32 %v1655, %v1657
        %v1659 = vadd.f32 %v1655, %v1658
        %vm1660 = vweird.f32 %v1345
        %vm1661 = vweird.f32 %v1655
        %vm1662 = vmor %vm1660, %vm1661
        %v1663 = vsel %vm1662, %v1655, %v1659
        %v1664 = vand.u32 2147483647, %v1345
        %vm1665 = vcmp.eq.f32.partialorder %v1664, 8.507059e+37
        %v1666 = vand.u32 %v1345, 2147483648
        %v1667 = vor.u32 1.1754944e-38, %v1666
        %v1668 = vsel %vm1665, %v1667, %v1663
        %v1669 = vmul.f32 1.0, %v1668
        %v1670 = vrcp.pop %v1346
        %v1671 = vmul.f32 %v1346, %v1670
        %v1672 = vsub.f32 1.0, %v1671
        %v1673 = vmul.f32 %v1670, %v1672
        %v1674 = vadd.f32 %v1670, %v1673
        %vm1675 = vweird.f32 %v1346
        %vm1676 = vweird.f32 %v1670
        %vm1677 = vmor %vm1675, %vm1676
        %v1678 = vsel %vm1677, %v1670, %v1674
        %v1679 = vand.u32 2147483647, %v1346
        %vm1680 = vcmp.eq.f32.partialorder %v1679, 8.507059e+37
        %v1681 = vand.u32 %v1346, 2147483648
        %v1682 = vor.u32 1.1754944e-38, %v1681
        %v1683 = vsel %vm1680, %v1682, %v1678
        %v1684 = vmul.f32 1.0, %v1683
        %v1685 = vrcp.pop %v1347
        %v1686 = vmul.f32 %v1347, %v1685
        %v1687 = vsub.f32 1.0, %v1686
        %v1688 = vmul.f32 %v1685, %v1687
        %v1689 = vadd.f32 %v1685, %v1688
        %vm1690 = vweird.f32 %v1347
        %vm1691 = vweird.f32 %v1685
        %vm1692 = vmor %vm1690, %vm1691
        %v1693 = vsel %vm1692, %v1685, %v1689
        %v1694 = vand.u32 2147483647, %v1347
        %vm1695 = vcmp.eq.f32.partialorder %v1694, 8.507059e+37
        %v1696 = vand.u32 %v1347, 2147483648
        %v1697 = vor.u32 1.1754944e-38, %v1696
        %v1698 = vsel %vm1695, %v1697, %v1693
        %v1699 = vmul.f32 1.0, %v1698
        %v1700 = vrcp.pop %v1348
        %v1701 = vmul.f32 %v1348, %v1700
        %v1702 = vsub.f32 1.0, %v1701
        %v1703 = vmul.f32 %v1700, %v1702
        %v1704 = vadd.f32 %v1700, %v1703
        %vm1705 = vweird.f32 %v1348
        %vm1706 = vweird.f32 %v1700
        %vm1707 = vmor %vm1705, %vm1706
        %v1708 = vsel %vm1707, %v1700, %v1704
        %v1709 = vand.u32 2147483647, %v1348
        %vm1710 = vcmp.eq.f32.partialorder %v1709, 8.507059e+37
        %v1711 = vand.u32 %v1348, 2147483648
        %v1712 = vor.u32 1.1754944e-38, %v1711
        %v1713 = vsel %vm1710, %v1712, %v1708
        %v1714 = vmul.f32 1.0, %v1713
        %v1715 = vrcp.pop %v1349
        %v1716 = vmul.f32 %v1349, %v1715
        %v1717 = vsub.f32 1.0, %v1716
        %v1718 = vmul.f32 %v1715, %v1717
        %v1719 = vadd.f32 %v1715, %v1718
        %vm1720 = vweird.f32 %v1349
        %vm1721 = vweird.f32 %v1715
        %vm1722 = vmor %vm1720, %vm1721
        %v1723 = vsel %vm1722, %v1715, %v1719
        %v1724 = vand.u32 2147483647, %v1349
        %vm1725 = vcmp.eq.f32.partialorder %v1724, 8.507059e+37
        %v1726 = vand.u32 %v1349, 2147483648
        %v1727 = vor.u32 1.1754944e-38, %v1726
        %v1728 = vsel %vm1725, %v1727, %v1723
        %v1729 = vmul.f32 1.0, %v1728
        %v1730 = vrcp.pop %v1350
        %v1731 = vmul.f32 %v1350, %v1730
        %v1732 = vsub.f32 1.0, %v1731
        %v1733 = vmul.f32 %v1730, %v1732
        %v1734 = vadd.f32 %v1730, %v1733
        %vm1735 = vweird.f32 %v1350
        %vm1736 = vweird.f32 %v1730
        %vm1737 = vmor %vm1735, %vm1736
        %v1738 = vsel %vm1737, %v1730, %v1734
        %v1739 = vand.u32 2147483647, %v1350
        %vm1740 = vcmp.eq.f32.partialorder %v1739, 8.507059e+37
        %v1741 = vand.u32 %v1350, 2147483648
        %v1742 = vor.u32 1.1754944e-38, %v1741
        %v1743 = vsel %vm1740, %v1742, %v1738
        %v1744 = vmul.f32 1.0, %v1743
        %v1745 = vrcp.pop %v1351
        %v1746 = vmul.f32 %v1351, %v1745
        %v1747 = vsub.f32 1.0, %v1746
        %v1748 = vmul.f32 %v1745, %v1747
        %v1749 = vadd.f32 %v1745, %v1748
        %vm1750 = vweird.f32 %v1351
        %vm1751 = vweird.f32 %v1745
        %vm1752 = vmor %vm1750, %vm1751
        %v1753 = vsel %vm1752, %v1745, %v1749
        %v1754 = vand.u32 2147483647, %v1351
        %vm1755 = vcmp.eq.f32.partialorder %v1754, 8.507059e+37
        %v1756 = vand.u32 %v1351, 2147483648
        %v1757 = vor.u32 1.1754944e-38, %v1756
        %v1758 = vsel %vm1755, %v1757, %v1753
        %v1759 = vmul.f32 1.0, %v1758
        %v1760 = vrcp.pop %v1352
        %v1761 = vmul.f32 %v1352, %v1760
        %v1762 = vsub.f32 1.0, %v1761
        %v1763 = vmul.f32 %v1760, %v1762
        %v1764 = vadd.f32 %v1760, %v1763
        %vm1765 = vweird.f32 %v1352
        %vm1766 = vweird.f32 %v1760
        %vm1767 = vmor %vm1765, %vm1766
        %v1768 = vsel %vm1767, %v1760, %v1764
        %v1769 = vand.u32 2147483647, %v1352
        %vm1770 = vcmp.eq.f32.partialorder %v1769, 8.507059e+37
        %v1771 = vand.u32 %v1352, 2147483648
        %v1772 = vor.u32 1.1754944e-38, %v1771
        %v1773 = vsel %vm1770, %v1772, %v1768
        %v1774 = vmul.f32 1.0, %v1773
        %v1775 = vrcp.pop %v1353
        %v1776 = vmul.f32 %v1353, %v1775
        %v1777 = vsub.f32 1.0, %v1776
        %v1778 = vmul.f32 %v1775, %v1777
        %v1779 = vadd.f32 %v1775, %v1778
        %vm1780 = vweird.f32 %v1353
        %vm1781 = vweird.f32 %v1775
        %vm1782 = vmor %vm1780, %vm1781
        %v1783 = vsel %vm1782, %v1775, %v1779
        %v1784 = vand.u32 2147483647, %v1353
        %vm1785 = vcmp.eq.f32.partialorder %v1784, 8.507059e+37
        %v1786 = vand.u32 %v1353, 2147483648
        %v1787 = vor.u32 1.1754944e-38, %v1786
        %v1788 = vsel %vm1785, %v1787, %v1783
        %v1789 = vmul.f32 1.0, %v1788
        %v1790 = vrcp.pop %v1354
        %v1791 = vmul.f32 %v1354, %v1790
        %v1792 = vsub.f32 1.0, %v1791
        %v1793 = vmul.f32 %v1790, %v1792
        %v1794 = vadd.f32 %v1790, %v1793
        %vm1795 = vweird.f32 %v1354
        %vm1796 = vweird.f32 %v1790
        %vm1797 = vmor %vm1795, %vm1796
        %v1798 = vsel %vm1797, %v1790, %v1794
        %v1799 = vand.u32 2147483647, %v1354
        %vm1800 = vcmp.eq.f32.partialorder %v1799, 8.507059e+37
        %v1801 = vand.u32 %v1354, 2147483648
        %v1802 = vor.u32 1.1754944e-38, %v1801
        %v1803 = vsel %vm1800, %v1802, %v1798
        %v1804 = vmul.f32 1.0, %v1803
        %v1805 = vrcp.pop %v1355
        %v1806 = vmul.f32 %v1355, %v1805
        %v1807 = vsub.f32 1.0, %v1806
        %v1808 = vmul.f32 %v1805, %v1807
        %v1809 = vadd.f32 %v1805, %v1808
        %vm1810 = vweird.f32 %v1355
        %vm1811 = vweird.f32 %v1805
        %vm1812 = vmor %vm1810, %vm1811
        %v1813 = vsel %vm1812, %v1805, %v1809
        %v1814 = vand.u32 2147483647, %v1355
        %vm1815 = vcmp.eq.f32.partialorder %v1814, 8.507059e+37
        %v1816 = vand.u32 %v1355, 2147483648
        %v1817 = vor.u32 1.1754944e-38, %v1816
        %v1818 = vsel %vm1815, %v1817, %v1813
        %v1819 = vmul.f32 1.0, %v1818
        %v1820 = vrcp.pop %v1356
        %v1821 = vmul.f32 %v1356, %v1820
        %v1822 = vsub.f32 1.0, %v1821
        %v1823 = vmul.f32 %v1820, %v1822
        %v1824 = vadd.f32 %v1820, %v1823
        %vm1825 = vweird.f32 %v1356
        %vm1826 = vweird.f32 %v1820
        %vm1827 = vmor %vm1825, %vm1826
        %v1828 = vsel %vm1827, %v1820, %v1824
        %v1829 = vand.u32 2147483647, %v1356
        %vm1830 = vcmp.eq.f32.partialorder %v1829, 8.507059e+37
        %v1831 = vand.u32 %v1356, 2147483648
        %v1832 = vor.u32 1.1754944e-38, %v1831
        %v1833 = vsel %vm1830, %v1832, %v1828
        %v1834 = vmul.f32 1.0, %v1833
        %v1835 = vrcp.pop %v1357
        %v1836 = vmul.f32 %v1357, %v1835
        %v1837 = vsub.f32 1.0, %v1836
        %v1838 = vmul.f32 %v1835, %v1837
        %v1839 = vadd.f32 %v1835, %v1838
        %vm1840 = vweird.f32 %v1357
        %vm1841 = vweird.f32 %v1835
        %vm1842 = vmor %vm1840, %vm1841
        %v1843 = vsel %vm1842, %v1835, %v1839
        %v1844 = vand.u32 2147483647, %v1357
        %vm1845 = vcmp.eq.f32.partialorder %v1844, 8.507059e+37
        %v1846 = vand.u32 %v1357, 2147483648
        %v1847 = vor.u32 1.1754944e-38, %v1846
        %v1848 = vsel %vm1845, %v1847, %v1843
        %v1849 = vmul.f32 1.0, %v1848
        %v1850 = vrcp.pop %v1358
        %v1851 = vmul.f32 %v1358, %v1850
        %v1852 = vsub.f32 1.0, %v1851
        %v1853 = vmul.f32 %v1850, %v1852
        %v1854 = vadd.f32 %v1850, %v1853
        %vm1855 = vweird.f32 %v1358
        %vm1856 = vweird.f32 %v1850
        %vm1857 = vmor %vm1855, %vm1856
        %v1858 = vsel %vm1857, %v1850, %v1854
        %v1859 = vand.u32 2147483647, %v1358
        %vm1860 = vcmp.eq.f32.partialorder %v1859, 8.507059e+37
        %v1861 = vand.u32 %v1358, 2147483648
        %v1862 = vor.u32 1.1754944e-38, %v1861
        %v1863 = vsel %vm1860, %v1862, %v1858
        %v1864 = vmul.f32 1.0, %v1863
        %v1865 = vrcp.pop %v1359
        %v1866 = vmul.f32 %v1359, %v1865
        %v1867 = vsub.f32 1.0, %v1866
        %v1868 = vmul.f32 %v1865, %v1867
        %v1869 = vadd.f32 %v1865, %v1868
        %vm1870 = vweird.f32 %v1359
        %vm1871 = vweird.f32 %v1865
        %vm1872 = vmor %vm1870, %vm1871
        %v1873 = vsel %vm1872, %v1865, %v1869
        %v1874 = vand.u32 2147483647, %v1359
        %vm1875 = vcmp.eq.f32.partialorder %v1874, 8.507059e+37
        %v1876 = vand.u32 %v1359, 2147483648
        %v1877 = vor.u32 1.1754944e-38, %v1876
        %v1878 = vsel %vm1875, %v1877, %v1873
        %v1879 = vmul.f32 1.0, %v1878
        %v1880 = vrcp.pop %v1360
        %v1881 = vmul.f32 %v1360, %v1880
        %v1882 = vsub.f32 1.0, %v1881
        %v1883 = vmul.f32 %v1880, %v1882
        %v1884 = vadd.f32 %v1880, %v1883
        %vm1885 = vweird.f32 %v1360
        %vm1886 = vweird.f32 %v1880
        %vm1887 = vmor %vm1885, %vm1886
        %v1888 = vsel %vm1887, %v1880, %v1884
        %v1889 = vand.u32 2147483647, %v1360
        %vm1890 = vcmp.eq.f32.partialorder %v1889, 8.507059e+37
        %v1891 = vand.u32 %v1360, 2147483648
        %v1892 = vor.u32 1.1754944e-38, %v1891
        %v1893 = vsel %vm1890, %v1892, %v1888
        %v1894 = vmul.f32 1.0, %v1893
        %v1895 = vrcp.pop %v1361
        %v1896 = vmul.f32 %v1361, %v1895
        %v1897 = vsub.f32 1.0, %v1896
        %v1898 = vmul.f32 %v1895, %v1897
        %v1899 = vadd.f32 %v1895, %v1898
        %vm1900 = vweird.f32 %v1361
        %vm1901 = vweird.f32 %v1895
        %vm1902 = vmor %vm1900, %vm1901
        %v1903 = vsel %vm1902, %v1895, %v1899
        %v1904 = vand.u32 2147483647, %v1361
        %vm1905 = vcmp.eq.f32.partialorder %v1904, 8.507059e+37
        %v1906 = vand.u32 %v1361, 2147483648
        %v1907 = vor.u32 1.1754944e-38, %v1906
        %v1908 = vsel %vm1905, %v1907, %v1903
        %v1909 = vmul.f32 1.0, %v1908
        %v1910 = vrcp.pop %v1362
        %v1911 = vmul.f32 %v1362, %v1910
        %v1912 = vsub.f32 1.0, %v1911
        %v1913 = vmul.f32 %v1910, %v1912
        %v1914 = vadd.f32 %v1910, %v1913
        %vm1915 = vweird.f32 %v1362
        %vm1916 = vweird.f32 %v1910
        %vm1917 = vmor %vm1915, %vm1916
        %v1918 = vsel %vm1917, %v1910, %v1914
        %v1919 = vand.u32 2147483647, %v1362
        %vm1920 = vcmp.eq.f32.partialorder %v1919, 8.507059e+37
        %v1921 = vand.u32 %v1362, 2147483648
        %v1922 = vor.u32 1.1754944e-38, %v1921
        %v1923 = vsel %vm1920, %v1922, %v1918
        %v1924 = vmul.f32 1.0, %v1923
        %v1925 = vrcp.pop %v1363
        %v1926 = vmul.f32 %v1363, %v1925
        %v1927 = vsub.f32 1.0, %v1926
        %v1928 = vmul.f32 %v1925, %v1927
        %v1929 = vadd.f32 %v1925, %v1928
        %vm1930 = vweird.f32 %v1363
        %vm1931 = vweird.f32 %v1925
        %vm1932 = vmor %vm1930, %vm1931
        %v1933 = vsel %vm1932, %v1925, %v1929
        %v1934 = vand.u32 2147483647, %v1363
        %vm1935 = vcmp.eq.f32.partialorder %v1934, 8.507059e+37
        %v1936 = vand.u32 %v1363, 2147483648
        %v1937 = vor.u32 1.1754944e-38, %v1936
        %v1938 = vsel %vm1935, %v1937, %v1933
        %v1939 = vmul.f32 1.0, %v1938
        %v1940 = vrcp.pop %v1364
        %v1941 = vmul.f32 %v1364, %v1940
        %v1942 = vsub.f32 1.0, %v1941
        %v1943 = vmul.f32 %v1940, %v1942
        %v1944 = vadd.f32 %v1940, %v1943
        %vm1945 = vweird.f32 %v1364
        %vm1946 = vweird.f32 %v1940
        %vm1947 = vmor %vm1945, %vm1946
        %v1948 = vsel %vm1947, %v1940, %v1944
        %v1949 = vand.u32 2147483647, %v1364
        %vm1950 = vcmp.eq.f32.partialorder %v1949, 8.507059e+37
        %v1951 = vand.u32 %v1364, 2147483648
        %v1952 = vor.u32 1.1754944e-38, %v1951
        %v1953 = vsel %vm1950, %v1952, %v1948
        %v1954 = vmul.f32 1.0, %v1953
        %v1955 = vrcp.pop %v1365
        %v1956 = vmul.f32 %v1365, %v1955
        %v1957 = vsub.f32 1.0, %v1956
        %v1958 = vmul.f32 %v1955, %v1957
        %v1959 = vadd.f32 %v1955, %v1958
        %vm1960 = vweird.f32 %v1365
        %vm1961 = vweird.f32 %v1955
        %vm1962 = vmor %vm1960, %vm1961
        %v1963 = vsel %vm1962, %v1955, %v1959
        %v1964 = vand.u32 2147483647, %v1365
        %vm1965 = vcmp.eq.f32.partialorder %v1964, 8.507059e+37
        %v1966 = vand.u32 %v1365, 2147483648
        %v1967 = vor.u32 1.1754944e-38, %v1966
        %v1968 = vsel %vm1965, %v1967, %v1963
        %v1969 = vmul.f32 1.0, %v1968
        %v1970 = vrcp.pop %v1366
        %v1971 = vmul.f32 %v1366, %v1970
        %v1972 = vsub.f32 1.0, %v1971
        %v1973 = vmul.f32 %v1970, %v1972
        %v1974 = vadd.f32 %v1970, %v1973
        %vm1975 = vweird.f32 %v1366
        %vm1976 = vweird.f32 %v1970
        %vm1977 = vmor %vm1975, %vm1976
        %v1978 = vsel %vm1977, %v1970, %v1974
        %v1979 = vand.u32 2147483647, %v1366
        %vm1980 = vcmp.eq.f32.partialorder %v1979, 8.507059e+37
        %v1981 = vand.u32 %v1366, 2147483648
        %v1982 = vor.u32 1.1754944e-38, %v1981
        %v1983 = vsel %vm1980, %v1982, %v1978
        %v1984 = vmul.f32 1.0, %v1983
        %v1985 = vrcp.pop %v1367
        %v1986 = vmul.f32 %v1367, %v1985
        %v1987 = vsub.f32 1.0, %v1986
        %v1988 = vmul.f32 %v1985, %v1987
        %v1989 = vadd.f32 %v1985, %v1988
        %vm1990 = vweird.f32 %v1367
        %vm1991 = vweird.f32 %v1985
        %vm1992 = vmor %vm1990, %vm1991
        %v1993 = vsel %vm1992, %v1985, %v1989
        %v1994 = vand.u32 2147483647, %v1367
        %vm1995 = vcmp.eq.f32.partialorder %v1994, 8.507059e+37
        %v1996 = vand.u32 %v1367, 2147483648
        %v1997 = vor.u32 1.1754944e-38, %v1996
        %v1998 = vsel %vm1995, %v1997, %v1993
        %v1999 = vmul.f32 1.0, %v1998
        %v2000 = vrcp.pop %v1368
        %v2001 = vmul.f32 %v1368, %v2000
        %v2002 = vsub.f32 1.0, %v2001
        %v2003 = vmul.f32 %v2000, %v2002
        %v2004 = vadd.f32 %v2000, %v2003
        %vm2005 = vweird.f32 %v1368
        %vm2006 = vweird.f32 %v2000
        %vm2007 = vmor %vm2005, %vm2006
        %v2008 = vsel %vm2007, %v2000, %v2004
        %v2009 = vand.u32 2147483647, %v1368
        %vm2010 = vcmp.eq.f32.partialorder %v2009, 8.507059e+37
        %v2011 = vand.u32 %v1368, 2147483648
        %v2012 = vor.u32 1.1754944e-38, %v2011
        %v2013 = vsel %vm2010, %v2012, %v2008
        %v2014 = vmul.f32 1.0, %v2013
        %v2015 = vrcp.pop %v1369
        %v2016 = vmul.f32 %v1369, %v2015
        %v2017 = vsub.f32 1.0, %v2016
        %v2018 = vmul.f32 %v2015, %v2017
        %v2019 = vadd.f32 %v2015, %v2018
        %vm2020 = vweird.f32 %v1369
        %vm2021 = vweird.f32 %v2015
        %vm2022 = vmor %vm2020, %vm2021
        %v2023 = vsel %vm2022, %v2015, %v2019
        %v2024 = vand.u32 2147483647, %v1369
        %vm2025 = vcmp.eq.f32.partialorder %v2024, 8.507059e+37
        %v2026 = vand.u32 %v1369, 2147483648
        %v2027 = vor.u32 1.1754944e-38, %v2026
        %v2028 = vsel %vm2025, %v2027, %v2023
        %v2029 = vmul.f32 1.0, %v2028
        %v2030 = vrcp.pop %v1370
        %v2031 = vmul.f32 %v1370, %v2030
        %v2032 = vsub.f32 1.0, %v2031
        %v2033 = vmul.f32 %v2030, %v2032
        %v2034 = vadd.f32 %v2030, %v2033
        %vm2035 = vweird.f32 %v1370
        %vm2036 = vweird.f32 %v2030
        %vm2037 = vmor %vm2035, %vm2036
        %v2038 = vsel %vm2037, %v2030, %v2034
        %v2039 = vand.u32 2147483647, %v1370
        %vm2040 = vcmp.eq.f32.partialorder %v2039, 8.507059e+37
        %v2041 = vand.u32 %v1370, 2147483648
        %v2042 = vor.u32 1.1754944e-38, %v2041
        %v2043 = vsel %vm2040, %v2042, %v2038
        %v2044 = vmul.f32 1.0, %v2043
        %v2045 = vrcp.pop %v1371
        %v2046 = vmul.f32 %v1371, %v2045
        %v2047 = vsub.f32 1.0, %v2046
        %v2048 = vmul.f32 %v2045, %v2047
        %v2049 = vadd.f32 %v2045, %v2048
        %vm2050 = vweird.f32 %v1371
        %vm2051 = vweird.f32 %v2045
        %vm2052 = vmor %vm2050, %vm2051
        %v2053 = vsel %vm2052, %v2045, %v2049
        %v2054 = vand.u32 2147483647, %v1371
        %vm2055 = vcmp.eq.f32.partialorder %v2054, 8.507059e+37
        %v2056 = vand.u32 %v1371, 2147483648
        %v2057 = vor.u32 1.1754944e-38, %v2056
        %v2058 = vsel %vm2055, %v2057, %v2053
        %v2059 = vmul.f32 1.0, %v2058
        %v2060 = vrcp.pop %v1372
        %v2061 = vmul.f32 %v1372, %v2060
        %v2062 = vsub.f32 1.0, %v2061
        %v2063 = vmul.f32 %v2060, %v2062
        %v2064 = vadd.f32 %v2060, %v2063
        %vm2065 = vweird.f32 %v1372
        %vm2066 = vweird.f32 %v2060
        %vm2067 = vmor %vm2065, %vm2066
        %v2068 = vsel %vm2067, %v2060, %v2064
        %v2069 = vand.u32 2147483647, %v1372
        %vm2070 = vcmp.eq.f32.partialorder %v2069, 8.507059e+37
        %v2071 = vand.u32 %v1372, 2147483648
        %v2072 = vor.u32 1.1754944e-38, %v2071
        %v2073 = vsel %vm2070, %v2072, %v2068
        %v2074 = vmul.f32 1.0, %v2073
        %v2075 = vrcp.pop %v1373
        %v2076 = vmul.f32 %v1373, %v2075
        %v2077 = vsub.f32 1.0, %v2076
        %v2078 = vmul.f32 %v2075, %v2077
        %v2079 = vadd.f32 %v2075, %v2078
        %vm2080 = vweird.f32 %v1373
        %vm2081 = vweird.f32 %v2075
        %vm2082 = vmor %vm2080, %vm2081
        %v2083 = vsel %vm2082, %v2075, %v2079
        %v2084 = vand.u32 2147483647, %v1373
        %vm2085 = vcmp.eq.f32.partialorder %v2084, 8.507059e+37
        %v2086 = vand.u32 %v1373, 2147483648
        %v2087 = vor.u32 1.1754944e-38, %v2086
        %v2088 = vsel %vm2085, %v2087, %v2083
        %v2089 = vmul.f32 1.0, %v2088
        %v2090 = vrcp.pop %v1374
        %v2091 = vmul.f32 %v1374, %v2090
        %v2092 = vsub.f32 1.0, %v2091
        %v2093 = vmul.f32 %v2090, %v2092
        %v2094 = vadd.f32 %v2090, %v2093
        %vm2095 = vweird.f32 %v1374
        %vm2096 = vweird.f32 %v2090
        %vm2097 = vmor %vm2095, %vm2096
        %v2098 = vsel %vm2097, %v2090, %v2094
        %v2099 = vand.u32 2147483647, %v1374
        %vm2100 = vcmp.eq.f32.partialorder %v2099, 8.507059e+37
        %v2101 = vand.u32 %v1374, 2147483648
        %v2102 = vor.u32 1.1754944e-38, %v2101
        %v2103 = vsel %vm2100, %v2102, %v2098
        %v2104 = vmul.f32 1.0, %v2103
        %v2105 = vrcp.pop %v1375
        %v2106 = vmul.f32 %v1375, %v2105
        %v2107 = vsub.f32 1.0, %v2106
        %v2108 = vmul.f32 %v2105, %v2107
        %v2109 = vadd.f32 %v2105, %v2108
        %vm2110 = vweird.f32 %v1375
        %vm2111 = vweird.f32 %v2105
        %vm2112 = vmor %vm2110, %vm2111
        %v2113 = vsel %vm2112, %v2105, %v2109
        %v2114 = vand.u32 2147483647, %v1375
        %vm2115 = vcmp.eq.f32.partialorder %v2114, 8.507059e+37
        %v2116 = vand.u32 %v1375, 2147483648
        %v2117 = vor.u32 1.1754944e-38, %v2116
        %v2118 = vsel %vm2115, %v2117, %v2113
        %v2119 = vmul.f32 1.0, %v2118
        %v2120 = vrcp.pop %v1376
        %v2121 = vmul.f32 %v1376, %v2120
        %v2122 = vsub.f32 1.0, %v2121
        %v2123 = vmul.f32 %v2120, %v2122
        %v2124 = vadd.f32 %v2120, %v2123
        %vm2125 = vweird.f32 %v1376
        %vm2126 = vweird.f32 %v2120
        %vm2127 = vmor %vm2125, %vm2126
        %v2128 = vsel %vm2127, %v2120, %v2124
        %v2129 = vand.u32 2147483647, %v1376
        %vm2130 = vcmp.eq.f32.partialorder %v2129, 8.507059e+37
        %v2131 = vand.u32 %v1376, 2147483648
        %v2132 = vor.u32 1.1754944e-38, %v2131
        %v2133 = vsel %vm2130, %v2132, %v2128
        %v2134 = vmul.f32 1.0, %v2133
        %v2135 = vrcp.pop %v1377
        %v2136 = vmul.f32 %v1377, %v2135
        %v2137 = vsub.f32 1.0, %v2136
        %v2138 = vmul.f32 %v2135, %v2137
        %v2139 = vadd.f32 %v2135, %v2138
        %vm2140 = vweird.f32 %v1377
        %vm2141 = vweird.f32 %v2135
        %vm2142 = vmor %vm2140, %vm2141
        %v2143 = vsel %vm2142, %v2135, %v2139
        %v2144 = vand.u32 2147483647, %v1377
        %vm2145 = vcmp.eq.f32.partialorder %v2144, 8.507059e+37
        %v2146 = vand.u32 %v1377, 2147483648
        %v2147 = vor.u32 1.1754944e-38, %v2146
        %v2148 = vsel %vm2145, %v2147, %v2143
        %v2149 = vmul.f32 1.0, %v2148
        %v2150 = vrcp.pop %v1378
        %v2151 = vmul.f32 %v1378, %v2150
        %v2152 = vsub.f32 1.0, %v2151
        %v2153 = vmul.f32 %v2150, %v2152
        %v2154 = vadd.f32 %v2150, %v2153
        %vm2155 = vweird.f32 %v1378
        %vm2156 = vweird.f32 %v2150
        %vm2157 = vmor %vm2155, %vm2156
        %v2158 = vsel %vm2157, %v2150, %v2154
        %v2159 = vand.u32 2147483647, %v1378
        %vm2160 = vcmp.eq.f32.partialorder %v2159, 8.507059e+37
        %v2161 = vand.u32 %v1378, 2147483648
        %v2162 = vor.u32 1.1754944e-38, %v2161
        %v2163 = vsel %vm2160, %v2162, %v2158
        %v2164 = vmul.f32 1.0, %v2163
        %v2165 = vrcp.pop %v1379
        %v2166 = vmul.f32 %v1379, %v2165
        %v2167 = vsub.f32 1.0, %v2166
        %v2168 = vmul.f32 %v2165, %v2167
        %v2169 = vadd.f32 %v2165, %v2168
        %vm2170 = vweird.f32 %v1379
        %vm2171 = vweird.f32 %v2165
        %vm2172 = vmor %vm2170, %vm2171
        %v2173 = vsel %vm2172, %v2165, %v2169
        %v2174 = vand.u32 2147483647, %v1379
        %vm2175 = vcmp.eq.f32.partialorder %v2174, 8.507059e+37
        %v2176 = vand.u32 %v1379, 2147483648
        %v2177 = vor.u32 1.1754944e-38, %v2176
        %v2178 = vsel %vm2175, %v2177, %v2173
        %v2179 = vmul.f32 1.0, %v2178
        %v2180 = vrcp.pop %v1380
        %v2181 = vmul.f32 %v1380, %v2180
        %v2182 = vsub.f32 1.0, %v2181
        %v2183 = vmul.f32 %v2180, %v2182
        %v2184 = vadd.f32 %v2180, %v2183
        %vm2185 = vweird.f32 %v1380
        %vm2186 = vweird.f32 %v2180
        %vm2187 = vmor %vm2185, %vm2186
        %v2188 = vsel %vm2187, %v2180, %v2184
        %v2189 = vand.u32 2147483647, %v1380
        %vm2190 = vcmp.eq.f32.partialorder %v2189, 8.507059e+37
        %v2191 = vand.u32 %v1380, 2147483648
        %v2192 = vor.u32 1.1754944e-38, %v2191
        %v2193 = vsel %vm2190, %v2192, %v2188
        %v2194 = vmul.f32 1.0, %v2193
        %v2195 = vrcp.pop %v1381
        %v2196 = vmul.f32 %v1381, %v2195
        %v2197 = vsub.f32 1.0, %v2196
        %v2198 = vmul.f32 %v2195, %v2197
        %v2199 = vadd.f32 %v2195, %v2198
        %vm2200 = vweird.f32 %v1381
        %vm2201 = vweird.f32 %v2195
        %vm2202 = vmor %vm2200, %vm2201
        %v2203 = vsel %vm2202, %v2195, %v2199
        %v2204 = vand.u32 2147483647, %v1381
        %vm2205 = vcmp.eq.f32.partialorder %v2204, 8.507059e+37
        %v2206 = vand.u32 %v1381, 2147483648
        %v2207 = vor.u32 1.1754944e-38, %v2206
        %v2208 = vsel %vm2205, %v2207, %v2203
        %v2209 = vmul.f32 1.0, %v2208
        %v2210 = vrcp.pop %v1382
        %v2211 = vmul.f32 %v1382, %v2210
        %v2212 = vsub.f32 1.0, %v2211
        %v2213 = vmul.f32 %v2210, %v2212
        %v2214 = vadd.f32 %v2210, %v2213
        %vm2215 = vweird.f32 %v1382
        %vm2216 = vweird.f32 %v2210
        %vm2217 = vmor %vm2215, %vm2216
        %v2218 = vsel %vm2217, %v2210, %v2214
        %v2219 = vand.u32 2147483647, %v1382
        %vm2220 = vcmp.eq.f32.partialorder %v2219, 8.507059e+37
        %v2221 = vand.u32 %v1382, 2147483648
        %v2222 = vor.u32 1.1754944e-38, %v2221
        %v2223 = vsel %vm2220, %v2222, %v2218
        %v2224 = vmul.f32 1.0, %v2223
        %v2225 = vrcp.pop %v1383
        %v2226 = vmul.f32 %v1383, %v2225
        %v2227 = vsub.f32 1.0, %v2226
        %v2228 = vmul.f32 %v2225, %v2227
        %v2229 = vadd.f32 %v2225, %v2228
        %vm2230 = vweird.f32 %v1383
        %vm2231 = vweird.f32 %v2225
        %vm2232 = vmor %vm2230, %vm2231
        %v2233 = vsel %vm2232, %v2225, %v2229
        %v2234 = vand.u32 2147483647, %v1383
        %vm2235 = vcmp.eq.f32.partialorder %v2234, 8.507059e+37
        %v2236 = vand.u32 %v1383, 2147483648
        %v2237 = vor.u32 1.1754944e-38, %v2236
        %v2238 = vsel %vm2235, %v2237, %v2233
        %v2239 = vmul.f32 1.0, %v2238
        %v2240 = vrcp.pop %v1384
        %v2241 = vmul.f32 %v1384, %v2240
        %v2242 = vsub.f32 1.0, %v2241
        %v2243 = vmul.f32 %v2240, %v2242
        %v2244 = vadd.f32 %v2240, %v2243
        %vm2245 = vweird.f32 %v1384
        %vm2246 = vweird.f32 %v2240
        %vm2247 = vmor %vm2245, %vm2246
        %v2248 = vsel %vm2247, %v2240, %v2244
        %v2249 = vand.u32 2147483647, %v1384
        %vm2250 = vcmp.eq.f32.partialorder %v2249, 8.507059e+37
        %v2251 = vand.u32 %v1384, 2147483648
        %v2252 = vor.u32 1.1754944e-38, %v2251
        %v2253 = vsel %vm2250, %v2252, %v2248
        %v2254 = vmul.f32 1.0, %v2253
        %v2255 = vrcp.pop %v1385
        %v2256 = vmul.f32 %v1385, %v2255
        %v2257 = vsub.f32 1.0, %v2256
        %v2258 = vmul.f32 %v2255, %v2257
        %v2259 = vadd.f32 %v2255, %v2258
        %vm2260 = vweird.f32 %v1385
        %vm2261 = vweird.f32 %v2255
        %vm2262 = vmor %vm2260, %vm2261
        %v2263 = vsel %vm2262, %v2255, %v2259
        %v2264 = vand.u32 2147483647, %v1385
        %vm2265 = vcmp.eq.f32.partialorder %v2264, 8.507059e+37
        %v2266 = vand.u32 %v1385, 2147483648
        %v2267 = vor.u32 1.1754944e-38, %v2266
        %v2268 = vsel %vm2265, %v2267, %v2263
        %v2269 = vmul.f32 1.0, %v2268
        %v2270 = vrcp.pop %v1386
        %v2271 = vmul.f32 %v1386, %v2270
        %v2272 = vsub.f32 1.0, %v2271
        %v2273 = vmul.f32 %v2270, %v2272
        %v2274 = vadd.f32 %v2270, %v2273
        %vm2275 = vweird.f32 %v1386
        %vm2276 = vweird.f32 %v2270
        %vm2277 = vmor %vm2275, %vm2276
        %v2278 = vsel %vm2277, %v2270, %v2274
        %v2279 = vand.u32 2147483647, %v1386
        %vm2280 = vcmp.eq.f32.partialorder %v2279, 8.507059e+37
        %v2281 = vand.u32 %v1386, 2147483648
        %v2282 = vor.u32 1.1754944e-38, %v2281
        %v2283 = vsel %vm2280, %v2282, %v2278
        %v2284 = vmul.f32 1.0, %v2283
        %v2285 = vrcp.pop %v1387
        %v2286 = vmul.f32 %v1387, %v2285
        %v2287 = vsub.f32 1.0, %v2286
        %v2288 = vmul.f32 %v2285, %v2287
        %v2289 = vadd.f32 %v2285, %v2288
        %vm2290 = vweird.f32 %v1387
        %vm2291 = vweird.f32 %v2285
        %vm2292 = vmor %vm2290, %vm2291
        %v2293 = vsel %vm2292, %v2285, %v2289
        %v2294 = vand.u32 2147483647, %v1387
        %vm2295 = vcmp.eq.f32.partialorder %v2294, 8.507059e+37
        %v2296 = vand.u32 %v1387, 2147483648
        %v2297 = vor.u32 1.1754944e-38, %v2296
        %v2298 = vsel %vm2295, %v2297, %v2293
        %v2299 = vmul.f32 1.0, %v2298
        %v2300 = vrcp.pop %v1388
        %v2301 = vmul.f32 %v1388, %v2300
        %v2302 = vsub.f32 1.0, %v2301
        %v2303 = vmul.f32 %v2300, %v2302
        %v2304 = vadd.f32 %v2300, %v2303
        %vm2305 = vweird.f32 %v1388
        %vm2306 = vweird.f32 %v2300
        %vm2307 = vmor %vm2305, %vm2306
        %v2308 = vsel %vm2307, %v2300, %v2304
        %v2309 = vand.u32 2147483647, %v1388
        %vm2310 = vcmp.eq.f32.partialorder %v2309, 8.507059e+37
        %v2311 = vand.u32 %v1388, 2147483648
        %v2312 = vor.u32 1.1754944e-38, %v2311
        %v2313 = vsel %vm2310, %v2312, %v2308
        %v2314 = vmul.f32 1.0, %v2313
        %v2315 = vrcp.pop %v1389
        %v2316 = vmul.f32 %v1389, %v2315
        %v2317 = vsub.f32 1.0, %v2316
        %v2318 = vmul.f32 %v2315, %v2317
        %v2319 = vadd.f32 %v2315, %v2318
        %vm2320 = vweird.f32 %v1389
        %vm2321 = vweird.f32 %v2315
        %vm2322 = vmor %vm2320, %vm2321
        %v2323 = vsel %vm2322, %v2315, %v2319
        %v2324 = vand.u32 2147483647, %v1389
        %vm2325 = vcmp.eq.f32.partialorder %v2324, 8.507059e+37
        %v2326 = vand.u32 %v1389, 2147483648
        %v2327 = vor.u32 1.1754944e-38, %v2326
        %v2328 = vsel %vm2325, %v2327, %v2323
        %v2329 = vmul.f32 1.0, %v2328
        %v2330 = vrcp.pop %v1390
        %v2331 = vmul.f32 %v1390, %v2330
        %v2332 = vsub.f32 1.0, %v2331
        %v2333 = vmul.f32 %v2330, %v2332
        %v2334 = vadd.f32 %v2330, %v2333
        %vm2335 = vweird.f32 %v1390
        %vm2336 = vweird.f32 %v2330
        %vm2337 = vmor %vm2335, %vm2336
        %v2338 = vsel %vm2337, %v2330, %v2334
        %v2339 = vand.u32 2147483647, %v1390
        %vm2340 = vcmp.eq.f32.partialorder %v2339, 8.507059e+37
        %v2341 = vand.u32 %v1390, 2147483648
        %v2342 = vor.u32 1.1754944e-38, %v2341
        %v2343 = vsel %vm2340, %v2342, %v2338
        %v2344 = vmul.f32 1.0, %v2343
        %v2345 = vrcp.pop %v1391
        %v2346 = vmul.f32 %v1391, %v2345
        %v2347 = vsub.f32 1.0, %v2346
        %v2348 = vmul.f32 %v2345, %v2347
        %v2349 = vadd.f32 %v2345, %v2348
        %vm2350 = vweird.f32 %v1391
        %vm2351 = vweird.f32 %v2345
        %vm2352 = vmor %vm2350, %vm2351
        %v2353 = vsel %vm2352, %v2345, %v2349
        %v2354 = vand.u32 2147483647, %v1391
        %vm2355 = vcmp.eq.f32.partialorder %v2354, 8.507059e+37
        %v2356 = vand.u32 %v1391, 2147483648
        %v2357 = vor.u32 1.1754944e-38, %v2356
        %v2358 = vsel %vm2355, %v2357, %v2353
        %v2359 = vmul.f32 1.0, %v2358
        %v2360 = vrcp.pop %v1392
        %v2361 = vmul.f32 %v1392, %v2360
        %v2362 = vsub.f32 1.0, %v2361
        %v2363 = vmul.f32 %v2360, %v2362
        %v2364 = vadd.f32 %v2360, %v2363
        %vm2365 = vweird.f32 %v1392
        %vm2366 = vweird.f32 %v2360
        %vm2367 = vmor %vm2365, %vm2366
        %v2368 = vsel %vm2367, %v2360, %v2364
        %v2369 = vand.u32 2147483647, %v1392
        %vm2370 = vcmp.eq.f32.partialorder %v2369, 8.507059e+37
        %v2371 = vand.u32 %v1392, 2147483648
        %v2372 = vor.u32 1.1754944e-38, %v2371
        %v2373 = vsel %vm2370, %v2372, %v2368
        %v2374 = vmul.f32 1.0, %v2373
        %v2375 = vrcp.pop %v1393
        %v2376 = vmul.f32 %v1393, %v2375
        %v2377 = vsub.f32 1.0, %v2376
        %v2378 = vmul.f32 %v2375, %v2377
        %v2379 = vadd.f32 %v2375, %v2378
        %vm2380 = vweird.f32 %v1393
        %vm2381 = vweird.f32 %v2375
        %vm2382 = vmor %vm2380, %vm2381
        %v2383 = vsel %vm2382, %v2375, %v2379
        %v2384 = vand.u32 2147483647, %v1393
        %vm2385 = vcmp.eq.f32.partialorder %v2384, 8.507059e+37
        %v2386 = vand.u32 %v1393, 2147483648
        %v2387 = vor.u32 1.1754944e-38, %v2386
        %v2388 = vsel %vm2385, %v2387, %v2383
        %v2389 = vmul.f32 1.0, %v2388
        %v2390 = vrcp.pop %v1394
        %v2391 = vmul.f32 %v1394, %v2390
        %v2392 = vsub.f32 1.0, %v2391
        %v2393 = vmul.f32 %v2390, %v2392
        %v2394 = vadd.f32 %v2390, %v2393
        %vm2395 = vweird.f32 %v1394
        %vm2396 = vweird.f32 %v2390
        %vm2397 = vmor %vm2395, %vm2396
        %v2398 = vsel %vm2397, %v2390, %v2394
        %v2399 = vand.u32 2147483647, %v1394
        %vm2400 = vcmp.eq.f32.partialorder %v2399, 8.507059e+37
        %v2401 = vand.u32 %v1394, 2147483648
        %v2402 = vor.u32 1.1754944e-38, %v2401
        %v2403 = vsel %vm2400, %v2402, %v2398
        %v2404 = vmul.f32 1.0, %v2403
        %v2405 = vrcp.pop %v1395
        %v2406 = vmul.f32 %v1395, %v2405
        %v2407 = vsub.f32 1.0, %v2406
        %v2408 = vmul.f32 %v2405, %v2407
        %v2409 = vadd.f32 %v2405, %v2408
        %vm2410 = vweird.f32 %v1395
        %vm2411 = vweird.f32 %v2405
        %vm2412 = vmor %vm2410, %vm2411
        %v2413 = vsel %vm2412, %v2405, %v2409
        %v2414 = vand.u32 2147483647, %v1395
        %vm2415 = vcmp.eq.f32.partialorder %v2414, 8.507059e+37
        %v2416 = vand.u32 %v1395, 2147483648
        %v2417 = vor.u32 1.1754944e-38, %v2416
        %v2418 = vsel %vm2415, %v2417, %v2413
        %v2419 = vmul.f32 1.0, %v2418
        %v2420 = vrcp.pop %v1396
        %v2421 = vmul.f32 %v1396, %v2420
        %v2422 = vsub.f32 1.0, %v2421
        %v2423 = vmul.f32 %v2420, %v2422
        %v2424 = vadd.f32 %v2420, %v2423
        %vm2425 = vweird.f32 %v1396
        %vm2426 = vweird.f32 %v2420
        %vm2427 = vmor %vm2425, %vm2426
        %v2428 = vsel %vm2427, %v2420, %v2424
        %v2429 = vand.u32 2147483647, %v1396
        %vm2430 = vcmp.eq.f32.partialorder %v2429, 8.507059e+37
        %v2431 = vand.u32 %v1396, 2147483648
        %v2432 = vor.u32 1.1754944e-38, %v2431
        %v2433 = vsel %vm2430, %v2432, %v2428
        %v2434 = vmul.f32 1.0, %v2433
        %v2435 = vrcp.pop %v1397
        %v2436 = vmul.f32 %v1397, %v2435
        %v2437 = vsub.f32 1.0, %v2436
        %v2438 = vmul.f32 %v2435, %v2437
        %v2439 = vadd.f32 %v2435, %v2438
        %vm2440 = vweird.f32 %v1397
        %vm2441 = vweird.f32 %v2435
        %vm2442 = vmor %vm2440, %vm2441
        %v2443 = vsel %vm2442, %v2435, %v2439
        %v2444 = vand.u32 2147483647, %v1397
        %vm2445 = vcmp.eq.f32.partialorder %v2444, 8.507059e+37
        %v2446 = vand.u32 %v1397, 2147483648
        %v2447 = vor.u32 1.1754944e-38, %v2446
        %v2448 = vsel %vm2445, %v2447, %v2443
        %v2449 = vmul.f32 1.0, %v2448
        %v2450 = vrcp.pop %v1398
        %v2451 = vmul.f32 %v1398, %v2450
        %v2452 = vsub.f32 1.0, %v2451
        %v2453 = vmul.f32 %v2450, %v2452
        %v2454 = vadd.f32 %v2450, %v2453
        %vm2455 = vweird.f32 %v1398
        %vm2456 = vweird.f32 %v2450
        %vm2457 = vmor %vm2455, %vm2456
        %v2458 = vsel %vm2457, %v2450, %v2454
        %v2459 = vand.u32 2147483647, %v1398
        %vm2460 = vcmp.eq.f32.partialorder %v2459, 8.507059e+37
        %v2461 = vand.u32 %v1398, 2147483648
        %v2462 = vor.u32 1.1754944e-38, %v2461
        %v2463 = vsel %vm2460, %v2462, %v2458
        %v2464 = vmul.f32 1.0, %v2463
        %v2465 = vrcp.pop %v1399
        %v2466 = vmul.f32 %v1399, %v2465
        %v2467 = vsub.f32 1.0, %v2466
        %v2468 = vmul.f32 %v2465, %v2467
        %v2469 = vadd.f32 %v2465, %v2468
        %vm2470 = vweird.f32 %v1399
        %vm2471 = vweird.f32 %v2465
        %vm2472 = vmor %vm2470, %vm2471
        %v2473 = vsel %vm2472, %v2465, %v2469
        %v2474 = vand.u32 2147483647, %v1399
        %vm2475 = vcmp.eq.f32.partialorder %v2474, 8.507059e+37
        %v2476 = vand.u32 %v1399, 2147483648
        %v2477 = vor.u32 1.1754944e-38, %v2476
        %v2478 = vsel %vm2475, %v2477, %v2473
        %v2479 = vmul.f32 1.0, %v2478
        %v2480 = vrcp.pop %v1400
        %v2481 = vmul.f32 %v1400, %v2480
        %v2482 = vsub.f32 1.0, %v2481
        %v2483 = vmul.f32 %v2480, %v2482
        %v2484 = vadd.f32 %v2480, %v2483
        %vm2485 = vweird.f32 %v1400
        %vm2486 = vweird.f32 %v2480
        %vm2487 = vmor %vm2485, %vm2486
        %v2488 = vsel %vm2487, %v2480, %v2484
        %v2489 = vand.u32 2147483647, %v1400
        %vm2490 = vcmp.eq.f32.partialorder %v2489, 8.507059e+37
        %v2491 = vand.u32 %v1400, 2147483648
        %v2492 = vor.u32 1.1754944e-38, %v2491
        %v2493 = vsel %vm2490, %v2492, %v2488
        %v2494 = vmul.f32 1.0, %v2493
        %v2495 = vrcp.pop %v1401
        %v2496 = vmul.f32 %v1401, %v2495
        %v2497 = vsub.f32 1.0, %v2496
        %v2498 = vmul.f32 %v2495, %v2497
        %v2499 = vadd.f32 %v2495, %v2498
        %vm2500 = vweird.f32 %v1401
        %vm2501 = vweird.f32 %v2495
        %vm2502 = vmor %vm2500, %vm2501
        %v2503 = vsel %vm2502, %v2495, %v2499
        %v2504 = vand.u32 2147483647, %v1401
        %vm2505 = vcmp.eq.f32.partialorder %v2504, 8.507059e+37
        %v2506 = vand.u32 %v1401, 2147483648
        %v2507 = vor.u32 1.1754944e-38, %v2506
        %v2508 = vsel %vm2505, %v2507, %v2503
        %v2509 = vmul.f32 1.0, %v2508
        %v2510 = vrcp.pop %v1402
        %v2511 = vmul.f32 %v1402, %v2510
        %v2512 = vsub.f32 1.0, %v2511
        %v2513 = vmul.f32 %v2510, %v2512
        %v2514 = vadd.f32 %v2510, %v2513
        %vm2515 = vweird.f32 %v1402
        %vm2516 = vweird.f32 %v2510
        %vm2517 = vmor %vm2515, %vm2516
        %v2518 = vsel %vm2517, %v2510, %v2514
        %v2519 = vand.u32 2147483647, %v1402
        %vm2520 = vcmp.eq.f32.partialorder %v2519, 8.507059e+37
        %v2521 = vand.u32 %v1402, 2147483648
        %v2522 = vor.u32 1.1754944e-38, %v2521
        %v2523 = vsel %vm2520, %v2522, %v2518
        %v2524 = vmul.f32 1.0, %v2523
        %v2525 = vrcp.pop %v1403
        %v2526 = vmul.f32 %v1403, %v2525
        %v2527 = vsub.f32 1.0, %v2526
        %v2528 = vmul.f32 %v2525, %v2527
        %v2529 = vadd.f32 %v2525, %v2528
        %vm2530 = vweird.f32 %v1403
        %vm2531 = vweird.f32 %v2525
        %vm2532 = vmor %vm2530, %vm2531
        %v2533 = vsel %vm2532, %v2525, %v2529
        %v2534 = vand.u32 2147483647, %v1403
        %vm2535 = vcmp.eq.f32.partialorder %v2534, 8.507059e+37
        %v2536 = vand.u32 %v1403, 2147483648
        %v2537 = vor.u32 1.1754944e-38, %v2536
        %v2538 = vsel %vm2535, %v2537, %v2533
        %v2539 = vmul.f32 1.0, %v2538
        %v2540 = vrcp.pop %v1404
        %v2541 = vmul.f32 %v1404, %v2540
        %v2542 = vsub.f32 1.0, %v2541
        %v2543 = vmul.f32 %v2540, %v2542
        %v2544 = vadd.f32 %v2540, %v2543
        %vm2545 = vweird.f32 %v1404
        %vm2546 = vweird.f32 %v2540
        %vm2547 = vmor %vm2545, %vm2546
        %v2548 = vsel %vm2547, %v2540, %v2544
        %v2549 = vand.u32 2147483647, %v1404
        %vm2550 = vcmp.eq.f32.partialorder %v2549, 8.507059e+37
        %v2551 = vand.u32 %v1404, 2147483648
        %v2552 = vor.u32 1.1754944e-38, %v2551
        %v2553 = vsel %vm2550, %v2552, %v2548
        %v2554 = vmul.f32 1.0, %v2553
        %v2555 = vrcp.pop %v1405
        %v2556 = vmul.f32 %v1405, %v2555
        %v2557 = vsub.f32 1.0, %v2556
        %v2558 = vmul.f32 %v2555, %v2557
        %v2559 = vadd.f32 %v2555, %v2558
        %vm2560 = vweird.f32 %v1405
        %vm2561 = vweird.f32 %v2555
        %vm2562 = vmor %vm2560, %vm2561
        %v2563 = vsel %vm2562, %v2555, %v2559
        %v2564 = vand.u32 2147483647, %v1405
        %vm2565 = vcmp.eq.f32.partialorder %v2564, 8.507059e+37
        %v2566 = vand.u32 %v1405, 2147483648
        %v2567 = vor.u32 1.1754944e-38, %v2566
        %v2568 = vsel %vm2565, %v2567, %v2563
        %v2569 = vmul.f32 1.0, %v2568
        %v2570 = vrcp.pop %v1406
        %v2571 = vmul.f32 %v1406, %v2570
        %v2572 = vsub.f32 1.0, %v2571
        %v2573 = vmul.f32 %v2570, %v2572
        %v2574 = vadd.f32 %v2570, %v2573
        %vm2575 = vweird.f32 %v1406
        %vm2576 = vweird.f32 %v2570
        %vm2577 = vmor %vm2575, %vm2576
        %v2578 = vsel %vm2577, %v2570, %v2574
        %v2579 = vand.u32 2147483647, %v1406
        %vm2580 = vcmp.eq.f32.partialorder %v2579, 8.507059e+37
        %v2581 = vand.u32 %v1406, 2147483648
        %v2582 = vor.u32 1.1754944e-38, %v2581
        %v2583 = vsel %vm2580, %v2582, %v2578
        %v2584 = vmul.f32 1.0, %v2583
        %v2585 = vrcp.pop %v1407
        %v2586 = vmul.f32 %v1407, %v2585
        %v2587 = vsub.f32 1.0, %v2586
        %v2588 = vmul.f32 %v2585, %v2587
        %v2589 = vadd.f32 %v2585, %v2588
        %vm2590 = vweird.f32 %v1407
        %vm2591 = vweird.f32 %v2585
        %vm2592 = vmor %vm2590, %vm2591
        %v2593 = vsel %vm2592, %v2585, %v2589
        %v2594 = vand.u32 2147483647, %v1407
        %vm2595 = vcmp.eq.f32.partialorder %v2594, 8.507059e+37
        %v2596 = vand.u32 %v1407, 2147483648
        %v2597 = vor.u32 1.1754944e-38, %v2596
        %v2598 = vsel %vm2595, %v2597, %v2593
        %v2599 = vmul.f32 1.0, %v2598
        %v2600 = vrcp.pop %v1408
        %v2601 = vmul.f32 %v1408, %v2600
        %v2602 = vsub.f32 1.0, %v2601
        %v2603 = vmul.f32 %v2600, %v2602
        %v2604 = vadd.f32 %v2600, %v2603
        %vm2605 = vweird.f32 %v1408
        %vm2606 = vweird.f32 %v2600
        %vm2607 = vmor %vm2605, %vm2606
        %v2608 = vsel %vm2607, %v2600, %v2604
        %v2609 = vand.u32 2147483647, %v1408
        %vm2610 = vcmp.eq.f32.partialorder %v2609, 8.507059e+37
        %v2611 = vand.u32 %v1408, 2147483648
        %v2612 = vor.u32 1.1754944e-38, %v2611
        %v2613 = vsel %vm2610, %v2612, %v2608
        %v2614 = vmul.f32 1.0, %v2613
        %v2615 = vrcp.pop %v1409
        %v2616 = vmul.f32 %v1409, %v2615
        %v2617 = vsub.f32 1.0, %v2616
        %v2618 = vmul.f32 %v2615, %v2617
        %v2619 = vadd.f32 %v2615, %v2618
        %vm2620 = vweird.f32 %v1409
        %vm2621 = vweird.f32 %v2615
        %vm2622 = vmor %vm2620, %vm2621
        %v2623 = vsel %vm2622, %v2615, %v2619
        %v2624 = vand.u32 2147483647, %v1409
        %vm2625 = vcmp.eq.f32.partialorder %v2624, 8.507059e+37
        %v2626 = vand.u32 %v1409, 2147483648
        %v2627 = vor.u32 1.1754944e-38, %v2626
        %v2628 = vsel %vm2625, %v2627, %v2623
        %v2629 = vmul.f32 1.0, %v2628
        %v2630 = vrcp.pop %v1410
        %v2631 = vmul.f32 %v1410, %v2630
        %v2632 = vsub.f32 1.0, %v2631
        %v2633 = vmul.f32 %v2630, %v2632
        %v2634 = vadd.f32 %v2630, %v2633
        %vm2635 = vweird.f32 %v1410
        %vm2636 = vweird.f32 %v2630
        %vm2637 = vmor %vm2635, %vm2636
        %v2638 = vsel %vm2637, %v2630, %v2634
        %v2639 = vand.u32 2147483647, %v1410
        %vm2640 = vcmp.eq.f32.partialorder %v2639, 8.507059e+37
        %v2641 = vand.u32 %v1410, 2147483648
        %v2642 = vor.u32 1.1754944e-38, %v2641
        %v2643 = vsel %vm2640, %v2642, %v2638
        %v2644 = vmul.f32 1.0, %v2643
        %v2645 = vrcp.pop %v1411
        %v2646 = vmul.f32 %v1411, %v2645
        %v2647 = vsub.f32 1.0, %v2646
        %v2648 = vmul.f32 %v2645, %v2647
        %v2649 = vadd.f32 %v2645, %v2648
        %vm2650 = vweird.f32 %v1411
        %vm2651 = vweird.f32 %v2645
        %vm2652 = vmor %vm2650, %vm2651
        %v2653 = vsel %vm2652, %v2645, %v2649
        %v2654 = vand.u32 2147483647, %v1411
        %vm2655 = vcmp.eq.f32.partialorder %v2654, 8.507059e+37
        %v2656 = vand.u32 %v1411, 2147483648
        %v2657 = vor.u32 1.1754944e-38, %v2656
        %v2658 = vsel %vm2655, %v2657, %v2653
        %v2659 = vmul.f32 1.0, %v2658
        %v2660 = vrcp.pop %v1412
        %v2661 = vmul.f32 %v1412, %v2660
        %v2662 = vsub.f32 1.0, %v2661
        %v2663 = vmul.f32 %v2660, %v2662
        %v2664 = vadd.f32 %v2660, %v2663
        %vm2665 = vweird.f32 %v1412
        %vm2666 = vweird.f32 %v2660
        %vm2667 = vmor %vm2665, %vm2666
        %v2668 = vsel %vm2667, %v2660, %v2664
        %v2669 = vand.u32 2147483647, %v1412
        %vm2670 = vcmp.eq.f32.partialorder %v2669, 8.507059e+37
        %v2671 = vand.u32 %v1412, 2147483648
        %v2672 = vor.u32 1.1754944e-38, %v2671
        %v2673 = vsel %vm2670, %v2672, %v2668
        %v2674 = vmul.f32 1.0, %v2673
        %v2675 = vrcp.pop %v1413
        %v2676 = vmul.f32 %v1413, %v2675
        %v2677 = vsub.f32 1.0, %v2676
        %v2678 = vmul.f32 %v2675, %v2677
        %v2679 = vadd.f32 %v2675, %v2678
        %vm2680 = vweird.f32 %v1413
        %vm2681 = vweird.f32 %v2675
        %vm2682 = vmor %vm2680, %vm2681
        %v2683 = vsel %vm2682, %v2675, %v2679
        %v2684 = vand.u32 2147483647, %v1413
        %vm2685 = vcmp.eq.f32.partialorder %v2684, 8.507059e+37
        %v2686 = vand.u32 %v1413, 2147483648
        %v2687 = vor.u32 1.1754944e-38, %v2686
        %v2688 = vsel %vm2685, %v2687, %v2683
        %v2689 = vmul.f32 1.0, %v2688
        %v2690 = vrcp.pop %v1414
        %v2691 = vmul.f32 %v1414, %v2690
        %v2692 = vsub.f32 1.0, %v2691
        %v2693 = vmul.f32 %v2690, %v2692
        %v2694 = vadd.f32 %v2690, %v2693
        %vm2695 = vweird.f32 %v1414
        %vm2696 = vweird.f32 %v2690
        %vm2697 = vmor %vm2695, %vm2696
        %v2698 = vsel %vm2697, %v2690, %v2694
        %v2699 = vand.u32 2147483647, %v1414
        %vm2700 = vcmp.eq.f32.partialorder %v2699, 8.507059e+37
        %v2701 = vand.u32 %v1414, 2147483648
        %v2702 = vor.u32 1.1754944e-38, %v2701
        %v2703 = vsel %vm2700, %v2702, %v2698
        %v2704 = vmul.f32 1.0, %v2703
        %v2705 = vrcp.pop %v1415
        %v2706 = vmul.f32 %v1415, %v2705
        %v2707 = vsub.f32 1.0, %v2706
        %v2708 = vmul.f32 %v2705, %v2707
        %v2709 = vadd.f32 %v2705, %v2708
        %vm2710 = vweird.f32 %v1415
        %vm2711 = vweird.f32 %v2705
        %vm2712 = vmor %vm2710, %vm2711
        %v2713 = vsel %vm2712, %v2705, %v2709
        %v2714 = vand.u32 2147483647, %v1415
        %vm2715 = vcmp.eq.f32.partialorder %v2714, 8.507059e+37
        %v2716 = vand.u32 %v1415, 2147483648
        %v2717 = vor.u32 1.1754944e-38, %v2716
        %v2718 = vsel %vm2715, %v2717, %v2713
        %v2719 = vmul.f32 1.0, %v2718
        %v2720 = vrcp.pop %v1416
        %v2721 = vmul.f32 %v1416, %v2720
        %v2722 = vsub.f32 1.0, %v2721
        %v2723 = vmul.f32 %v2720, %v2722
        %v2724 = vadd.f32 %v2720, %v2723
        %vm2725 = vweird.f32 %v1416
        %vm2726 = vweird.f32 %v2720
        %vm2727 = vmor %vm2725, %vm2726
        %v2728 = vsel %vm2727, %v2720, %v2724
        %v2729 = vand.u32 2147483647, %v1416
        %vm2730 = vcmp.eq.f32.partialorder %v2729, 8.507059e+37
        %v2731 = vand.u32 %v1416, 2147483648
        %v2732 = vor.u32 1.1754944e-38, %v2731
        %v2733 = vsel %vm2730, %v2732, %v2728
        %v2734 = vmul.f32 1.0, %v2733
        %v2735 = vrcp.pop %v1417
        %v2736 = vmul.f32 %v1417, %v2735
        %v2737 = vsub.f32 1.0, %v2736
        %v2738 = vmul.f32 %v2735, %v2737
        %v2739 = vadd.f32 %v2735, %v2738
        %vm2740 = vweird.f32 %v1417
        %vm2741 = vweird.f32 %v2735
        %vm2742 = vmor %vm2740, %vm2741
        %v2743 = vsel %vm2742, %v2735, %v2739
        %v2744 = vand.u32 2147483647, %v1417
        %vm2745 = vcmp.eq.f32.partialorder %v2744, 8.507059e+37
        %v2746 = vand.u32 %v1417, 2147483648
        %v2747 = vor.u32 1.1754944e-38, %v2746
        %v2748 = vsel %vm2745, %v2747, %v2743
        %v2749 = vmul.f32 1.0, %v2748
        %v2750 = vrcp.pop %v1418
        %v2751 = vmul.f32 %v1418, %v2750
        %v2752 = vsub.f32 1.0, %v2751
        %v2753 = vmul.f32 %v2750, %v2752
        %v2754 = vadd.f32 %v2750, %v2753
        %vm2755 = vweird.f32 %v1418
        %vm2756 = vweird.f32 %v2750
        %vm2757 = vmor %vm2755, %vm2756
        %v2758 = vsel %vm2757, %v2750, %v2754
        %v2759 = vand.u32 2147483647, %v1418
        %vm2760 = vcmp.eq.f32.partialorder %v2759, 8.507059e+37
        %v2761 = vand.u32 %v1418, 2147483648
        %v2762 = vor.u32 1.1754944e-38, %v2761
        %v2763 = vsel %vm2760, %v2762, %v2758
        %v2764 = vmul.f32 1.0, %v2763
        %v2765 = vrcp.pop %v1419
        %v2766 = vmul.f32 %v1419, %v2765
        %v2767 = vsub.f32 1.0, %v2766
        %v2768 = vmul.f32 %v2765, %v2767
        %v2769 = vadd.f32 %v2765, %v2768
        %vm2770 = vweird.f32 %v1419
        %vm2771 = vweird.f32 %v2765
        %vm2772 = vmor %vm2770, %vm2771
        %v2773 = vsel %vm2772, %v2765, %v2769
        %v2774 = vand.u32 2147483647, %v1419
        %vm2775 = vcmp.eq.f32.partialorder %v2774, 8.507059e+37
        %v2776 = vand.u32 %v1419, 2147483648
        %v2777 = vor.u32 1.1754944e-38, %v2776
        %v2778 = vsel %vm2775, %v2777, %v2773
        %v2779 = vmul.f32 1.0, %v2778
        %v2780 = vrcp.pop %v1420
        %v2781 = vmul.f32 %v1420, %v2780
        %v2782 = vsub.f32 1.0, %v2781
        %v2783 = vmul.f32 %v2780, %v2782
        %v2784 = vadd.f32 %v2780, %v2783
        %vm2785 = vweird.f32 %v1420
        %vm2786 = vweird.f32 %v2780
        %vm2787 = vmor %vm2785, %vm2786
        %v2788 = vsel %vm2787, %v2780, %v2784
        %v2789 = vand.u32 2147483647, %v1420
        %vm2790 = vcmp.eq.f32.partialorder %v2789, 8.507059e+37
        %v2791 = vand.u32 %v1420, 2147483648
        %v2792 = vor.u32 1.1754944e-38, %v2791
        %v2793 = vsel %vm2790, %v2792, %v2788
        %v2794 = vmul.f32 1.0, %v2793
        %v2795 = vrcp.pop %v1421
        %v2796 = vmul.f32 %v1421, %v2795
        %v2797 = vsub.f32 1.0, %v2796
        %v2798 = vmul.f32 %v2795, %v2797
        %v2799 = vadd.f32 %v2795, %v2798
        %vm2800 = vweird.f32 %v1421
        %vm2801 = vweird.f32 %v2795
        %vm2802 = vmor %vm2800, %vm2801
        %v2803 = vsel %vm2802, %v2795, %v2799
        %v2804 = vand.u32 2147483647, %v1421
        %vm2805 = vcmp.eq.f32.partialorder %v2804, 8.507059e+37
        %v2806 = vand.u32 %v1421, 2147483648
        %v2807 = vor.u32 1.1754944e-38, %v2806
        %v2808 = vsel %vm2805, %v2807, %v2803
        %v2809 = vmul.f32 1.0, %v2808
        %v2810 = vrcp.pop %v1422
        %v2811 = vmul.f32 %v1422, %v2810
        %v2812 = vsub.f32 1.0, %v2811
        %v2813 = vmul.f32 %v2810, %v2812
        %v2814 = vadd.f32 %v2810, %v2813
        %vm2815 = vweird.f32 %v1422
        %vm2816 = vweird.f32 %v2810
        %vm2817 = vmor %vm2815, %vm2816
        %v2818 = vsel %vm2817, %v2810, %v2814
        %v2819 = vand.u32 2147483647, %v1422
        %vm2820 = vcmp.eq.f32.partialorder %v2819, 8.507059e+37
        %v2821 = vand.u32 %v1422, 2147483648
        %v2822 = vor.u32 1.1754944e-38, %v2821
        %v2823 = vsel %vm2820, %v2822, %v2818
        %v2824 = vmul.f32 1.0, %v2823
        %v2825 = vrcp.pop %v1423
        %v2826 = vmul.f32 %v1423, %v2825
        %v2827 = vsub.f32 1.0, %v2826
        %v2828 = vmul.f32 %v2825, %v2827
        %v2829 = vadd.f32 %v2825, %v2828
        %vm2830 = vweird.f32 %v1423
        %vm2831 = vweird.f32 %v2825
        %vm2832 = vmor %vm2830, %vm2831
        %v2833 = vsel %vm2832, %v2825, %v2829
        %v2834 = vand.u32 2147483647, %v1423
        %vm2835 = vcmp.eq.f32.partialorder %v2834, 8.507059e+37
        %v2836 = vand.u32 %v1423, 2147483648
        %v2837 = vor.u32 1.1754944e-38, %v2836
        %v2838 = vsel %vm2835, %v2837, %v2833
        %v2839 = vmul.f32 1.0, %v2838
        %v2840 = vrcp.pop %v1424
        %v2841 = vmul.f32 %v1424, %v2840
        %v2842 = vsub.f32 1.0, %v2841
        %v2843 = vmul.f32 %v2840, %v2842
        %v2844 = vadd.f32 %v2840, %v2843
        %vm2845 = vweird.f32 %v1424
        %vm2846 = vweird.f32 %v2840
        %vm2847 = vmor %vm2845, %vm2846
        %v2848 = vsel %vm2847, %v2840, %v2844
        %v2849 = vand.u32 2147483647, %v1424
        %vm2850 = vcmp.eq.f32.partialorder %v2849, 8.507059e+37
        %v2851 = vand.u32 %v1424, 2147483648
        %v2852 = vor.u32 1.1754944e-38, %v2851
        %v2853 = vsel %vm2850, %v2852, %v2848
        %v2854 = vmul.f32 1.0, %v2853
        %v2855 = vrcp.pop %v1425
        %v2856 = vmul.f32 %v1425, %v2855
        %v2857 = vsub.f32 1.0, %v2856
        %v2858 = vmul.f32 %v2855, %v2857
        %v2859 = vadd.f32 %v2855, %v2858
        %vm2860 = vweird.f32 %v1425
        %vm2861 = vweird.f32 %v2855
        %vm2862 = vmor %vm2860, %vm2861
        %v2863 = vsel %vm2862, %v2855, %v2859
        %v2864 = vand.u32 2147483647, %v1425
        %vm2865 = vcmp.eq.f32.partialorder %v2864, 8.507059e+37
        %v2866 = vand.u32 %v1425, 2147483648
        %v2867 = vor.u32 1.1754944e-38, %v2866
        %v2868 = vsel %vm2865, %v2867, %v2863
        %v2869 = vmul.f32 1.0, %v2868
        %v2870 = vrcp.pop %v1426
        %v2871 = vmul.f32 %v1426, %v2870
        %v2872 = vsub.f32 1.0, %v2871
        %v2873 = vmul.f32 %v2870, %v2872
        %v2874 = vadd.f32 %v2870, %v2873
        %vm2875 = vweird.f32 %v1426
        %vm2876 = vweird.f32 %v2870
        %vm2877 = vmor %vm2875, %vm2876
        %v2878 = vsel %vm2877, %v2870, %v2874
        %v2879 = vand.u32 2147483647, %v1426
        %vm2880 = vcmp.eq.f32.partialorder %v2879, 8.507059e+37
        %v2881 = vand.u32 %v1426, 2147483648
        %v2882 = vor.u32 1.1754944e-38, %v2881
        %v2883 = vsel %vm2880, %v2882, %v2878
        %v2884 = vmul.f32 1.0, %v2883
        %v2885 = vrcp.pop %v1427
        %v2886 = vmul.f32 %v1427, %v2885
        %v2887 = vsub.f32 1.0, %v2886
        %v2888 = vmul.f32 %v2885, %v2887
        %v2889 = vadd.f32 %v2885, %v2888
        %vm2890 = vweird.f32 %v1427
        %vm2891 = vweird.f32 %v2885
        %vm2892 = vmor %vm2890, %vm2891
        %v2893 = vsel %vm2892, %v2885, %v2889
        %v2894 = vand.u32 2147483647, %v1427
        %vm2895 = vcmp.eq.f32.partialorder %v2894, 8.507059e+37
        %v2896 = vand.u32 %v1427, 2147483648
        %v2897 = vor.u32 1.1754944e-38, %v2896
        %v2898 = vsel %vm2895, %v2897, %v2893
        %v2899 = vmul.f32 1.0, %v2898
        %v2900 = vrcp.pop %v1428
        %v2901 = vmul.f32 %v1428, %v2900
        %v2902 = vsub.f32 1.0, %v2901
        %v2903 = vmul.f32 %v2900, %v2902
        %v2904 = vadd.f32 %v2900, %v2903
        %vm2905 = vweird.f32 %v1428
        %vm2906 = vweird.f32 %v2900
        %vm2907 = vmor %vm2905, %vm2906
        %v2908 = vsel %vm2907, %v2900, %v2904
        %v2909 = vand.u32 2147483647, %v1428
        %vm2910 = vcmp.eq.f32.partialorder %v2909, 8.507059e+37
        %v2911 = vand.u32 %v1428, 2147483648
        %v2912 = vor.u32 1.1754944e-38, %v2911
        %v2913 = vsel %vm2910, %v2912, %v2908
        %v2914 = vmul.f32 1.0, %v2913
        %v2915 = vrcp.pop %v1429
        %v2916 = vmul.f32 %v1429, %v2915
        %v2917 = vsub.f32 1.0, %v2916
        %v2918 = vmul.f32 %v2915, %v2917
        %v2919 = vadd.f32 %v2915, %v2918
        %vm2920 = vweird.f32 %v1429
        %vm2921 = vweird.f32 %v2915
        %vm2922 = vmor %vm2920, %vm2921
        %v2923 = vsel %vm2922, %v2915, %v2919
        %v2924 = vand.u32 2147483647, %v1429
        %vm2925 = vcmp.eq.f32.partialorder %v2924, 8.507059e+37
        %v2926 = vand.u32 %v1429, 2147483648
        %v2927 = vor.u32 1.1754944e-38, %v2926
        %v2928 = vsel %vm2925, %v2927, %v2923
        %v2929 = vmul.f32 1.0, %v2928
        %v2930 = vrcp.pop %v1430
        %v2931 = vmul.f32 %v1430, %v2930
        %v2932 = vsub.f32 1.0, %v2931
        %v2933 = vmul.f32 %v2930, %v2932
        %v2934 = vadd.f32 %v2930, %v2933
        %vm2935 = vweird.f32 %v1430
        %vm2936 = vweird.f32 %v2930
        %vm2937 = vmor %vm2935, %vm2936
        %v2938 = vsel %vm2937, %v2930, %v2934
        %v2939 = vand.u32 2147483647, %v1430
        %vm2940 = vcmp.eq.f32.partialorder %v2939, 8.507059e+37
        %v2941 = vand.u32 %v1430, 2147483648
        %v2942 = vor.u32 1.1754944e-38, %v2941
        %v2943 = vsel %vm2940, %v2942, %v2938
        %v2944 = vmul.f32 1.0, %v2943
        %v2945 = vrcp.pop %v1431
        %v2946 = vmul.f32 %v1431, %v2945
        %v2947 = vsub.f32 1.0, %v2946
        %v2948 = vmul.f32 %v2945, %v2947
        %v2949 = vadd.f32 %v2945, %v2948
        %vm2950 = vweird.f32 %v1431
        %vm2951 = vweird.f32 %v2945
        %vm2952 = vmor %vm2950, %vm2951
        %v2953 = vsel %vm2952, %v2945, %v2949
        %v2954 = vand.u32 2147483647, %v1431
        %vm2955 = vcmp.eq.f32.partialorder %v2954, 8.507059e+37
        %v2956 = vand.u32 %v1431, 2147483648
        %v2957 = vor.u32 1.1754944e-38, %v2956
        %v2958 = vsel %vm2955, %v2957, %v2953
        %v2959 = vmul.f32 1.0, %v2958
        %v2960 = vrcp.pop %v1432
        %v2961 = vmul.f32 %v1432, %v2960
        %v2962 = vsub.f32 1.0, %v2961
        %v2963 = vmul.f32 %v2960, %v2962
        %v2964 = vadd.f32 %v2960, %v2963
        %vm2965 = vweird.f32 %v1432
        %vm2966 = vweird.f32 %v2960
        %vm2967 = vmor %vm2965, %vm2966
        %v2968 = vsel %vm2967, %v2960, %v2964
        %v2969 = vand.u32 2147483647, %v1432
        %vm2970 = vcmp.eq.f32.partialorder %v2969, 8.507059e+37
        %v2971 = vand.u32 %v1432, 2147483648
        %v2972 = vor.u32 1.1754944e-38, %v2971
        %v2973 = vsel %vm2970, %v2972, %v2968
        %v2974 = vmul.f32 1.0, %v2973
        %v2975 = vrcp.pop %v1433
        %v2976 = vmul.f32 %v1433, %v2975
        %v2977 = vsub.f32 1.0, %v2976
        %v2978 = vmul.f32 %v2975, %v2977
        %v2979 = vadd.f32 %v2975, %v2978
        %vm2980 = vweird.f32 %v1433
        %vm2981 = vweird.f32 %v2975
        %vm2982 = vmor %vm2980, %vm2981
        %v2983 = vsel %vm2982, %v2975, %v2979
        %v2984 = vand.u32 2147483647, %v1433
        %vm2985 = vcmp.eq.f32.partialorder %v2984, 8.507059e+37
        %v2986 = vand.u32 %v1433, 2147483648
        %v2987 = vor.u32 1.1754944e-38, %v2986
        %v2988 = vsel %vm2985, %v2987, %v2983
        %v2989 = vmul.f32 1.0, %v2988
        %v2990 = vrcp.pop %v1434
        %v2991 = vmul.f32 %v1434, %v2990
        %v2992 = vsub.f32 1.0, %v2991
        %v2993 = vmul.f32 %v2990, %v2992
        %v2994 = vadd.f32 %v2990, %v2993
        %vm2995 = vweird.f32 %v1434
        %vm2996 = vweird.f32 %v2990
        %vm2997 = vmor %vm2995, %vm2996
        %v2998 = vsel %vm2997, %v2990, %v2994
        %v2999 = vand.u32 2147483647, %v1434
        %vm3000 = vcmp.eq.f32.partialorder %v2999, 8.507059e+37
        %v3001 = vand.u32 %v1434, 2147483648
        %v3002 = vor.u32 1.1754944e-38, %v3001
        %v3003 = vsel %vm3000, %v3002, %v2998
        %v3004 = vmul.f32 1.0, %v3003
        %v3005 = vrcp.pop %v1435
        %v3006 = vmul.f32 %v1435, %v3005
        %v3007 = vsub.f32 1.0, %v3006
        %v3008 = vmul.f32 %v3005, %v3007
        %v3009 = vadd.f32 %v3005, %v3008
        %vm3010 = vweird.f32 %v1435
        %vm3011 = vweird.f32 %v3005
        %vm3012 = vmor %vm3010, %vm3011
        %v3013 = vsel %vm3012, %v3005, %v3009
        %v3014 = vand.u32 2147483647, %v1435
        %vm3015 = vcmp.eq.f32.partialorder %v3014, 8.507059e+37
        %v3016 = vand.u32 %v1435, 2147483648
        %v3017 = vor.u32 1.1754944e-38, %v3016
        %v3018 = vsel %vm3015, %v3017, %v3013
        %v3019 = vmul.f32 1.0, %v3018
        %v3020 = vrcp.pop %v1436
        %v3021 = vmul.f32 %v1436, %v3020
        %v3022 = vsub.f32 1.0, %v3021
        %v3023 = vmul.f32 %v3020, %v3022
        %v3024 = vadd.f32 %v3020, %v3023
        %vm3025 = vweird.f32 %v1436
        %vm3026 = vweird.f32 %v3020
        %vm3027 = vmor %vm3025, %vm3026
        %v3028 = vsel %vm3027, %v3020, %v3024
        %v3029 = vand.u32 2147483647, %v1436
        %vm3030 = vcmp.eq.f32.partialorder %v3029, 8.507059e+37
        %v3031 = vand.u32 %v1436, 2147483648
        %v3032 = vor.u32 1.1754944e-38, %v3031
        %v3033 = vsel %vm3030, %v3032, %v3028
        %v3034 = vmul.f32 1.0, %v3033
        %v3035 = vrcp.pop %v1437
        %v3036 = vmul.f32 %v1437, %v3035
        %v3037 = vsub.f32 1.0, %v3036
        %v3038 = vmul.f32 %v3035, %v3037
        %v3039 = vadd.f32 %v3035, %v3038
        %vm3040 = vweird.f32 %v1437
        %vm3041 = vweird.f32 %v3035
        %vm3042 = vmor %vm3040, %vm3041
        %v3043 = vsel %vm3042, %v3035, %v3039
        %v3044 = vand.u32 2147483647, %v1437
        %vm3045 = vcmp.eq.f32.partialorder %v3044, 8.507059e+37
        %v3046 = vand.u32 %v1437, 2147483648
        %v3047 = vor.u32 1.1754944e-38, %v3046
        %v3048 = vsel %vm3045, %v3047, %v3043
        %v3049 = vmul.f32 1.0, %v3048
        %v3050 = vrcp.pop %v1438
        %v3051 = vmul.f32 %v1438, %v3050
        %v3052 = vsub.f32 1.0, %v3051
        %v3053 = vmul.f32 %v3050, %v3052
        %v3054 = vadd.f32 %v3050, %v3053
        %vm3055 = vweird.f32 %v1438
        %vm3056 = vweird.f32 %v3050
        %vm3057 = vmor %vm3055, %vm3056
        %v3058 = vsel %vm3057, %v3050, %v3054
        %v3059 = vand.u32 2147483647, %v1438
        %vm3060 = vcmp.eq.f32.partialorder %v3059, 8.507059e+37
        %v3061 = vand.u32 %v1438, 2147483648
        %v3062 = vor.u32 1.1754944e-38, %v3061
        %v3063 = vsel %vm3060, %v3062, %v3058
        %v3064 = vmul.f32 1.0, %v3063
        %v3065 = vrcp.pop %v1439
        %v3066 = vmul.f32 %v1439, %v3065
        %v3067 = vsub.f32 1.0, %v3066
        %v3068 = vmul.f32 %v3065, %v3067
        %v3069 = vadd.f32 %v3065, %v3068
        %vm3070 = vweird.f32 %v1439
        %vm3071 = vweird.f32 %v3065
        %vm3072 = vmor %vm3070, %vm3071
        %v3073 = vsel %vm3072, %v3065, %v3069
        %v3074 = vand.u32 2147483647, %v1439
        %vm3075 = vcmp.eq.f32.partialorder %v3074, 8.507059e+37
        %v3076 = vand.u32 %v1439, 2147483648
        %v3077 = vor.u32 1.1754944e-38, %v3076
        %v3078 = vsel %vm3075, %v3077, %v3073
        %v3079 = vmul.f32 1.0, %v3078
        %v3080 = vrcp.pop %v1440
        %v3081 = vmul.f32 %v1440, %v3080
        %v3082 = vsub.f32 1.0, %v3081
        %v3083 = vmul.f32 %v3080, %v3082
        %v3084 = vadd.f32 %v3080, %v3083
        %vm3085 = vweird.f32 %v1440
        %vm3086 = vweird.f32 %v3080
        %vm3087 = vmor %vm3085, %vm3086
        %v3088 = vsel %vm3087, %v3080, %v3084
        %v3089 = vand.u32 2147483647, %v1440
        %vm3090 = vcmp.eq.f32.partialorder %v3089, 8.507059e+37
        %v3091 = vand.u32 %v1440, 2147483648
        %v3092 = vor.u32 1.1754944e-38, %v3091
        %v3093 = vsel %vm3090, %v3092, %v3088
        %v3094 = vmul.f32 1.0, %v3093
        %v3095 = vrcp.pop %v1441
        %v3096 = vmul.f32 %v1441, %v3095
        %v3097 = vsub.f32 1.0, %v3096
        %v3098 = vmul.f32 %v3095, %v3097
        %v3099 = vadd.f32 %v3095, %v3098
        %vm3100 = vweird.f32 %v1441
        %vm3101 = vweird.f32 %v3095
        %vm3102 = vmor %vm3100, %vm3101
        %v3103 = vsel %vm3102, %v3095, %v3099
        %v3104 = vand.u32 2147483647, %v1441
        %vm3105 = vcmp.eq.f32.partialorder %v3104, 8.507059e+37
        %v3106 = vand.u32 %v1441, 2147483648
        %v3107 = vor.u32 1.1754944e-38, %v3106
        %v3108 = vsel %vm3105, %v3107, %v3103
        %v3109 = vmul.f32 1.0, %v3108
        %v3110 = vrcp.pop %v1442
        %v3111 = vmul.f32 %v1442, %v3110
        %v3112 = vsub.f32 1.0, %v3111
        %v3113 = vmul.f32 %v3110, %v3112
        %v3114 = vadd.f32 %v3110, %v3113
        %vm3115 = vweird.f32 %v1442
        %vm3116 = vweird.f32 %v3110
        %vm3117 = vmor %vm3115, %vm3116
        %v3118 = vsel %vm3117, %v3110, %v3114
        %v3119 = vand.u32 2147483647, %v1442
        %vm3120 = vcmp.eq.f32.partialorder %v3119, 8.507059e+37
        %v3121 = vand.u32 %v1442, 2147483648
        %v3122 = vor.u32 1.1754944e-38, %v3121
        %v3123 = vsel %vm3120, %v3122, %v3118
        %v3124 = vmul.f32 1.0, %v3123
        %v3125 = vrcp.pop %v1443
        %v3126 = vmul.f32 %v1443, %v3125
        %v3127 = vsub.f32 1.0, %v3126
        %v3128 = vmul.f32 %v3125, %v3127
        %v3129 = vadd.f32 %v3125, %v3128
        %vm3130 = vweird.f32 %v1443
        %vm3131 = vweird.f32 %v3125
        %vm3132 = vmor %vm3130, %vm3131
        %v3133 = vsel %vm3132, %v3125, %v3129
        %v3134 = vand.u32 2147483647, %v1443
        %vm3135 = vcmp.eq.f32.partialorder %v3134, 8.507059e+37
        %v3136 = vand.u32 %v1443, 2147483648
        %v3137 = vor.u32 1.1754944e-38, %v3136
        %v3138 = vsel %vm3135, %v3137, %v3133
        %v3139 = vmul.f32 1.0, %v3138
        %v3140 = vrcp.pop %v1444
        %v3141 = vmul.f32 %v1444, %v3140
        %v3142 = vsub.f32 1.0, %v3141
        %v3143 = vmul.f32 %v3140, %v3142
        %v3144 = vadd.f32 %v3140, %v3143
        %vm3145 = vweird.f32 %v1444
        %vm3146 = vweird.f32 %v3140
        %vm3147 = vmor %vm3145, %vm3146
        %v3148 = vsel %vm3147, %v3140, %v3144
        %v3149 = vand.u32 2147483647, %v1444
        %vm3150 = vcmp.eq.f32.partialorder %v3149, 8.507059e+37
        %v3151 = vand.u32 %v1444, 2147483648
        %v3152 = vor.u32 1.1754944e-38, %v3151
        %v3153 = vsel %vm3150, %v3152, %v3148
        %v3154 = vmul.f32 1.0, %v3153
        %v3155 = vrcp.pop %v1445
        %v3156 = vmul.f32 %v1445, %v3155
        %v3157 = vsub.f32 1.0, %v3156
        %v3158 = vmul.f32 %v3155, %v3157
        %v3159 = vadd.f32 %v3155, %v3158
        %vm3160 = vweird.f32 %v1445
        %vm3161 = vweird.f32 %v3155
        %vm3162 = vmor %vm3160, %vm3161
        %v3163 = vsel %vm3162, %v3155, %v3159
        %v3164 = vand.u32 2147483647, %v1445
        %vm3165 = vcmp.eq.f32.partialorder %v3164, 8.507059e+37
        %v3166 = vand.u32 %v1445, 2147483648
        %v3167 = vor.u32 1.1754944e-38, %v3166
        %v3168 = vsel %vm3165, %v3167, %v3163
        %v3169 = vmul.f32 1.0, %v3168
        %v3170 = vrcp.pop %v1446
        %v3171 = vmul.f32 %v1446, %v3170
        %v3172 = vsub.f32 1.0, %v3171
        %v3173 = vmul.f32 %v3170, %v3172
        %v3174 = vadd.f32 %v3170, %v3173
        %vm3175 = vweird.f32 %v1446
        %vm3176 = vweird.f32 %v3170
        %vm3177 = vmor %vm3175, %vm3176
        %v3178 = vsel %vm3177, %v3170, %v3174
        %v3179 = vand.u32 2147483647, %v1446
        %vm3180 = vcmp.eq.f32.partialorder %v3179, 8.507059e+37
        %v3181 = vand.u32 %v1446, 2147483648
        %v3182 = vor.u32 1.1754944e-38, %v3181
        %v3183 = vsel %vm3180, %v3182, %v3178
        %v3184 = vmul.f32 1.0, %v3183
        %v3185 = vrcp.pop %v1447
        %v3186 = vmul.f32 %v1447, %v3185
        %v3187 = vsub.f32 1.0, %v3186
        %v3188 = vmul.f32 %v3185, %v3187
        %v3189 = vadd.f32 %v3185, %v3188
        %vm3190 = vweird.f32 %v1447
        %vm3191 = vweird.f32 %v3185
        %vm3192 = vmor %vm3190, %vm3191
        %v3193 = vsel %vm3192, %v3185, %v3189
        %v3194 = vand.u32 2147483647, %v1447
        %vm3195 = vcmp.eq.f32.partialorder %v3194, 8.507059e+37
        %v3196 = vand.u32 %v1447, 2147483648
        %v3197 = vor.u32 1.1754944e-38, %v3196
        %v3198 = vsel %vm3195, %v3197, %v3193
        %v3199 = vmul.f32 1.0, %v3198
        %v3200 = vrcp.pop %v1448
        %v3201 = vmul.f32 %v1448, %v3200
        %v3202 = vsub.f32 1.0, %v3201
        %v3203 = vmul.f32 %v3200, %v3202
        %v3204 = vadd.f32 %v3200, %v3203
        %vm3205 = vweird.f32 %v1448
        %vm3206 = vweird.f32 %v3200
        %vm3207 = vmor %vm3205, %vm3206
        %v3208 = vsel %vm3207, %v3200, %v3204
        %v3209 = vand.u32 2147483647, %v1448
        %vm3210 = vcmp.eq.f32.partialorder %v3209, 8.507059e+37
        %v3211 = vand.u32 %v1448, 2147483648
        %v3212 = vor.u32 1.1754944e-38, %v3211
        %v3213 = vsel %vm3210, %v3212, %v3208
        %v3214 = vmul.f32 1.0, %v3213
        %v3215 = vrcp.pop %v1449
        %v3216 = vmul.f32 %v1449, %v3215
        %v3217 = vsub.f32 1.0, %v3216
        %v3218 = vmul.f32 %v3215, %v3217
        %v3219 = vadd.f32 %v3215, %v3218
        %vm3220 = vweird.f32 %v1449
        %vm3221 = vweird.f32 %v3215
        %vm3222 = vmor %vm3220, %vm3221
        %v3223 = vsel %vm3222, %v3215, %v3219
        %v3224 = vand.u32 2147483647, %v1449
        %vm3225 = vcmp.eq.f32.partialorder %v3224, 8.507059e+37
        %v3226 = vand.u32 %v1449, 2147483648
        %v3227 = vor.u32 1.1754944e-38, %v3226
        %v3228 = vsel %vm3225, %v3227, %v3223
        %v3229 = vmul.f32 1.0, %v3228
        %v3230 = vrcp.pop %v1450
        %v3231 = vmul.f32 %v1450, %v3230
        %v3232 = vsub.f32 1.0, %v3231
        %v3233 = vmul.f32 %v3230, %v3232
        %v3234 = vadd.f32 %v3230, %v3233
        %vm3235 = vweird.f32 %v1450
        %vm3236 = vweird.f32 %v3230
        %vm3237 = vmor %vm3235, %vm3236
        %v3238 = vsel %vm3237, %v3230, %v3234
        %v3239 = vand.u32 2147483647, %v1450
        %vm3240 = vcmp.eq.f32.partialorder %v3239, 8.507059e+37
        %v3241 = vand.u32 %v1450, 2147483648
        %v3242 = vor.u32 1.1754944e-38, %v3241
        %v3243 = vsel %vm3240, %v3242, %v3238
        %v3244 = vmul.f32 1.0, %v3243
        %v3245 = vrcp.pop %v1451
        %v3246 = vmul.f32 %v1451, %v3245
        %v3247 = vsub.f32 1.0, %v3246
        %v3248 = vmul.f32 %v3245, %v3247
        %v3249 = vadd.f32 %v3245, %v3248
        %vm3250 = vweird.f32 %v1451
        %vm3251 = vweird.f32 %v3245
        %vm3252 = vmor %vm3250, %vm3251
        %v3253 = vsel %vm3252, %v3245, %v3249
        %v3254 = vand.u32 2147483647, %v1451
        %vm3255 = vcmp.eq.f32.partialorder %v3254, 8.507059e+37
        %v3256 = vand.u32 %v1451, 2147483648
        %v3257 = vor.u32 1.1754944e-38, %v3256
        %v3258 = vsel %vm3255, %v3257, %v3253
        %v3259 = vmul.f32 1.0, %v3258
        %v3260 = vrcp.pop %v1452
        %v3261 = vmul.f32 %v1452, %v3260
        %v3262 = vsub.f32 1.0, %v3261
        %v3263 = vmul.f32 %v3260, %v3262
        %v3264 = vadd.f32 %v3260, %v3263
        %vm3265 = vweird.f32 %v1452
        %vm3266 = vweird.f32 %v3260
        %vm3267 = vmor %vm3265, %vm3266
        %v3268 = vsel %vm3267, %v3260, %v3264
        %v3269 = vand.u32 2147483647, %v1452
        %vm3270 = vcmp.eq.f32.partialorder %v3269, 8.507059e+37
        %v3271 = vand.u32 %v1452, 2147483648
        %v3272 = vor.u32 1.1754944e-38, %v3271
        %v3273 = vsel %vm3270, %v3272, %v3268
        %v3274 = vmul.f32 1.0, %v3273
        %v3275 = vrcp.pop %v1453
        %v3276 = vmul.f32 %v1453, %v3275
        %v3277 = vsub.f32 1.0, %v3276
        %v3278 = vmul.f32 %v3275, %v3277
        %v3279 = vadd.f32 %v3275, %v3278
        %vm3280 = vweird.f32 %v1453
        %vm3281 = vweird.f32 %v3275
        %vm3282 = vmor %vm3280, %vm3281
        %v3283 = vsel %vm3282, %v3275, %v3279
        %v3284 = vand.u32 2147483647, %v1453
        %vm3285 = vcmp.eq.f32.partialorder %v3284, 8.507059e+37
        %v3286 = vand.u32 %v1453, 2147483648
        %v3287 = vor.u32 1.1754944e-38, %v3286
        %v3288 = vsel %vm3285, %v3287, %v3283
        %v3289 = vmul.f32 1.0, %v3288
        %v3290 = vrcp.pop %v1454
        %v3291 = vmul.f32 %v1454, %v3290
        %v3292 = vsub.f32 1.0, %v3291
        %v3293 = vmul.f32 %v3290, %v3292
        %v3294 = vadd.f32 %v3290, %v3293
        %vm3295 = vweird.f32 %v1454
        %vm3296 = vweird.f32 %v3290
        %vm3297 = vmor %vm3295, %vm3296
        %v3298 = vsel %vm3297, %v3290, %v3294
        %v3299 = vand.u32 2147483647, %v1454
        %vm3300 = vcmp.eq.f32.partialorder %v3299, 8.507059e+37
        %v3301 = vand.u32 %v1454, 2147483648
        %v3302 = vor.u32 1.1754944e-38, %v3301
        %v3303 = vsel %vm3300, %v3302, %v3298
        %v3304 = vmul.f32 1.0, %v3303
        %v3305 = vrcp.pop %v1455
        %v3306 = vmul.f32 %v1455, %v3305
        %v3307 = vsub.f32 1.0, %v3306
        %v3308 = vmul.f32 %v3305, %v3307
        %v3309 = vadd.f32 %v3305, %v3308
        %vm3310 = vweird.f32 %v1455
        %vm3311 = vweird.f32 %v3305
        %vm3312 = vmor %vm3310, %vm3311
        %v3313 = vsel %vm3312, %v3305, %v3309
        %v3314 = vand.u32 2147483647, %v1455
        %vm3315 = vcmp.eq.f32.partialorder %v3314, 8.507059e+37
        %v3316 = vand.u32 %v1455, 2147483648
        %v3317 = vor.u32 1.1754944e-38, %v3316
        %v3318 = vsel %vm3315, %v3317, %v3313
        %v3319 = vmul.f32 1.0, %v3318
        %v3320 = vrcp.pop %v1456
        %v3321 = vmul.f32 %v1456, %v3320
        %v3322 = vsub.f32 1.0, %v3321
        %v3323 = vmul.f32 %v3320, %v3322
        %v3324 = vadd.f32 %v3320, %v3323
        %vm3325 = vweird.f32 %v1456
        %vm3326 = vweird.f32 %v3320
        %vm3327 = vmor %vm3325, %vm3326
        %v3328 = vsel %vm3327, %v3320, %v3324
        %v3329 = vand.u32 2147483647, %v1456
        %vm3330 = vcmp.eq.f32.partialorder %v3329, 8.507059e+37
        %v3331 = vand.u32 %v1456, 2147483648
        %v3332 = vor.u32 1.1754944e-38, %v3331
        %v3333 = vsel %vm3330, %v3332, %v3328
        %v3334 = vmul.f32 1.0, %v3333
        %v3335 = vrcp.pop %v1457
        %v3336 = vmul.f32 %v1457, %v3335
        %v3337 = vsub.f32 1.0, %v3336
        %v3338 = vmul.f32 %v3335, %v3337
        %v3339 = vadd.f32 %v3335, %v3338
        %vm3340 = vweird.f32 %v1457
        %vm3341 = vweird.f32 %v3335
        %vm3342 = vmor %vm3340, %vm3341
        %v3343 = vsel %vm3342, %v3335, %v3339
        %v3344 = vand.u32 2147483647, %v1457
        %vm3345 = vcmp.eq.f32.partialorder %v3344, 8.507059e+37
        %v3346 = vand.u32 %v1457, 2147483648
        %v3347 = vor.u32 1.1754944e-38, %v3346
        %v3348 = vsel %vm3345, %v3347, %v3343
        %v3349 = vmul.f32 1.0, %v3348
        %v3350 = vrcp.pop %v1458
        %v3351 = vmul.f32 %v1458, %v3350
        %v3352 = vsub.f32 1.0, %v3351
        %v3353 = vmul.f32 %v3350, %v3352
        %v3354 = vadd.f32 %v3350, %v3353
        %vm3355 = vweird.f32 %v1458
        %vm3356 = vweird.f32 %v3350
        %vm3357 = vmor %vm3355, %vm3356
        %v3358 = vsel %vm3357, %v3350, %v3354
        %v3359 = vand.u32 2147483647, %v1458
        %vm3360 = vcmp.eq.f32.partialorder %v3359, 8.507059e+37
        %v3361 = vand.u32 %v1458, 2147483648
        %v3362 = vor.u32 1.1754944e-38, %v3361
        %v3363 = vsel %vm3360, %v3362, %v3358
        %v3364 = vmul.f32 1.0, %v3363
        %v3365 = vrcp.pop %v1459
        %v3366 = vmul.f32 %v1459, %v3365
        %v3367 = vsub.f32 1.0, %v3366
        %v3368 = vmul.f32 %v3365, %v3367
        %v3369 = vadd.f32 %v3365, %v3368
        %vm3370 = vweird.f32 %v1459
        %vm3371 = vweird.f32 %v3365
        %vm3372 = vmor %vm3370, %vm3371
        %v3373 = vsel %vm3372, %v3365, %v3369
        %v3374 = vand.u32 2147483647, %v1459
        %vm3375 = vcmp.eq.f32.partialorder %v3374, 8.507059e+37
        %v3376 = vand.u32 %v1459, 2147483648
        %v3377 = vor.u32 1.1754944e-38, %v3376
        %v3378 = vsel %vm3375, %v3377, %v3373
        %v3379 = vmul.f32 1.0, %v3378
        %3380 = vst [vmem:[%s137] sm:$0xff] %v1474
        %3381 = vst [vmem:[%s137 + $0x8] sm:$0xff] %v1489
        %3382 = vst [vmem:[%s137 + $0x10] sm:$0xff] %v1504
        %3383 = vst [vmem:[%s137 + $0x18] sm:$0xff] %v1519
        %3384 = vst [vmem:[%s137 + $0x20] sm:$0xff] %v1534
        %3385 = vst [vmem:[%s137 + $0x28] sm:$0xff] %v1549
        %3386 = vst [vmem:[%s137 + $0x30] sm:$0xff] %v1564
        %3387 = vst [vmem:[%s137 + $0x38] sm:$0xff] %v1579
        %3388 = vst [vmem:[%s137 + $0x40] sm:$0xff] %v1594
        %3389 = vst [vmem:[%s137 + $0x48] sm:$0xff] %v1609
        %3390 = vst [vmem:[%s137 + $0x50] sm:$0xff] %v1624
        %3391 = vst [vmem:[%s137 + $0x58] sm:$0xff] %v1639
        %3392 = vst [vmem:[%s137 + $0x60] sm:$0xff] %v1654
        %3393 = vst [vmem:[%s137 + $0x68] sm:$0xff] %v1669
        %3394 = vst [vmem:[%s137 + $0x70] sm:$0xff] %v1684
        %3395 = vst [vmem:[%s137 + $0x78] sm:$0xff] %v1699
        %3396 = vst [vmem:[%s137 + $0x80] sm:$0xff] %v1714
        %3397 = vst [vmem:[%s137 + $0x88] sm:$0xff] %v1729
        %3398 = vst [vmem:[%s137 + $0x90] sm:$0xff] %v1744
        %3399 = vst [vmem:[%s137 + $0x98] sm:$0xff] %v1759
        %3400 = vst [vmem:[%s137 + $0xa0] sm:$0xff] %v1774
        %3401 = vst [vmem:[%s137 + $0xa8] sm:$0xff] %v1789
        %3402 = vst [vmem:[%s137 + $0xb0] sm:$0xff] %v1804
        %3403 = vst [vmem:[%s137 + $0xb8] sm:$0xff] %v1819
        %3404 = vst [vmem:[%s137 + $0xc0] sm:$0xff] %v1834
        %3405 = vst [vmem:[%s137 + $0xc8] sm:$0xff] %v1849
        %3406 = vst [vmem:[%s137 + $0xd0] sm:$0xff] %v1864
        %3407 = vst [vmem:[%s137 + $0xd8] sm:$0xff] %v1879
        %3408 = vst [vmem:[%s137 + $0xe0] sm:$0xff] %v1894
        %3409 = vst [vmem:[%s137 + $0xe8] sm:$0xff] %v1909
        %3410 = vst [vmem:[%s137 + $0xf0] sm:$0xff] %v1924
        %3411 = vst [vmem:[%s137 + $0xf8] sm:$0xff] %v1939
        %3412 = vst [vmem:[%s137 + $0x100] sm:$0xff] %v1954
        %3413 = vst [vmem:[%s137 + $0x108] sm:$0xff] %v1969
        %3414 = vst [vmem:[%s137 + $0x110] sm:$0xff] %v1984
        %3415 = vst [vmem:[%s137 + $0x118] sm:$0xff] %v1999
        %3416 = vst [vmem:[%s137 + $0x120] sm:$0xff] %v2014
        %3417 = vst [vmem:[%s137 + $0x128] sm:$0xff] %v2029
        %3418 = vst [vmem:[%s137 + $0x130] sm:$0xff] %v2044
        %3419 = vst [vmem:[%s137 + $0x138] sm:$0xff] %v2059
        %3420 = vst [vmem:[%s137 + $0x140] sm:$0xff] %v2074
        %3421 = vst [vmem:[%s137 + $0x148] sm:$0xff] %v2089
        %3422 = vst [vmem:[%s137 + $0x150] sm:$0xff] %v2104
        %3423 = vst [vmem:[%s137 + $0x158] sm:$0xff] %v2119
        %3424 = vst [vmem:[%s137 + $0x160] sm:$0xff] %v2134
        %3425 = vst [vmem:[%s137 + $0x168] sm:$0xff] %v2149
        %3426 = vst [vmem:[%s137 + $0x170] sm:$0xff] %v2164
        %3427 = vst [vmem:[%s137 + $0x178] sm:$0xff] %v2179
        %3428 = vst [vmem:[%s137 + $0x180] sm:$0xff] %v2194
        %3429 = vst [vmem:[%s137 + $0x188] sm:$0xff] %v2209
        %3430 = vst [vmem:[%s137 + $0x190] sm:$0xff] %v2224
        %3431 = vst [vmem:[%s137 + $0x198] sm:$0xff] %v2239
        %3432 = vst [vmem:[%s137 + $0x1a0] sm:$0xff] %v2254
        %3433 = vst [vmem:[%s137 + $0x1a8] sm:$0xff] %v2269
        %3434 = vst [vmem:[%s137 + $0x1b0] sm:$0xff] %v2284
        %3435 = vst [vmem:[%s137 + $0x1b8] sm:$0xff] %v2299
        %3436 = vst [vmem:[%s137 + $0x1c0] sm:$0xff] %v2314
        %3437 = vst [vmem:[%s137 + $0x1c8] sm:$0xff] %v2329
        %3438 = vst [vmem:[%s137 + $0x1d0] sm:$0xff] %v2344
        %3439 = vst [vmem:[%s137 + $0x1d8] sm:$0xff] %v2359
        %3440 = vst [vmem:[%s137 + $0x1e0] sm:$0xff] %v2374
        %3441 = vst [vmem:[%s137 + $0x1e8] sm:$0xff] %v2389
        %3442 = vst [vmem:[%s137 + $0x1f0] sm:$0xff] %v2404
        %3443 = vst [vmem:[%s137 + $0x1f8] sm:$0xff] %v2419
        %3444 = vst [vmem:[%s137 + $0x200] sm:$0xff] %v2434
        %3445 = vst [vmem:[%s137 + $0x208] sm:$0xff] %v2449
        %3446 = vst [vmem:[%s137 + $0x210] sm:$0xff] %v2464
        %3447 = vst [vmem:[%s137 + $0x218] sm:$0xff] %v2479
        %3448 = vst [vmem:[%s137 + $0x220] sm:$0xff] %v2494
        %3449 = vst [vmem:[%s137 + $0x228] sm:$0xff] %v2509
        %3450 = vst [vmem:[%s137 + $0x230] sm:$0xff] %v2524
        %3451 = vst [vmem:[%s137 + $0x238] sm:$0xff] %v2539
        %3452 = vst [vmem:[%s137 + $0x240] sm:$0xff] %v2554
        %3453 = vst [vmem:[%s137 + $0x248] sm:$0xff] %v2569
        %3454 = vst [vmem:[%s137 + $0x250] sm:$0xff] %v2584
        %3455 = vst [vmem:[%s137 + $0x258] sm:$0xff] %v2599
        %3456 = vst [vmem:[%s137 + $0x260] sm:$0xff] %v2614
        %3457 = vst [vmem:[%s137 + $0x268] sm:$0xff] %v2629
        %3458 = vst [vmem:[%s137 + $0x270] sm:$0xff] %v2644
        %3459 = vst [vmem:[%s137 + $0x278] sm:$0xff] %v2659
        %3460 = vst [vmem:[%s137 + $0x280] sm:$0xff] %v2674
        %3461 = vst [vmem:[%s137 + $0x288] sm:$0xff] %v2689
        %3462 = vst [vmem:[%s137 + $0x290] sm:$0xff] %v2704
        %3463 = vst [vmem:[%s137 + $0x298] sm:$0xff] %v2719
        %3464 = vst [vmem:[%s137 + $0x2a0] sm:$0xff] %v2734
        %3465 = vst [vmem:[%s137 + $0x2a8] sm:$0xff] %v2749
        %3466 = vst [vmem:[%s137 + $0x2b0] sm:$0xff] %v2764
        %3467 = vst [vmem:[%s137 + $0x2b8] sm:$0xff] %v2779
        %3468 = vst [vmem:[%s137 + $0x2c0] sm:$0xff] %v2794
        %3469 = vst [vmem:[%s137 + $0x2c8] sm:$0xff] %v2809
        %3470 = vst [vmem:[%s137 + $0x2d0] sm:$0xff] %v2824
        %3471 = vst [vmem:[%s137 + $0x2d8] sm:$0xff] %v2839
        %3472 = vst [vmem:[%s137 + $0x2e0] sm:$0xff] %v2854
        %3473 = vst [vmem:[%s137 + $0x2e8] sm:$0xff] %v2869
        %3474 = vst [vmem:[%s137 + $0x2f0] sm:$0xff] %v2884
        %3475 = vst [vmem:[%s137 + $0x2f8] sm:$0xff] %v2899
        %3476 = vst [vmem:[%s137 + $0x300] sm:$0xff] %v2914
        %3477 = vst [vmem:[%s137 + $0x308] sm:$0xff] %v2929
        %3478 = vst [vmem:[%s137 + $0x310] sm:$0xff] %v2944
        %3479 = vst [vmem:[%s137 + $0x318] sm:$0xff] %v2959
        %3480 = vst [vmem:[%s137 + $0x320] sm:$0xff] %v2974
        %3481 = vst [vmem:[%s137 + $0x328] sm:$0xff] %v2989
        %3482 = vst [vmem:[%s137 + $0x330] sm:$0xff] %v3004
        %3483 = vst [vmem:[%s137 + $0x338] sm:$0xff] %v3019
        %3484 = vst [vmem:[%s137 + $0x340] sm:$0xff] %v3034
        %3485 = vst [vmem:[%s137 + $0x348] sm:$0xff] %v3049
        %3486 = vst [vmem:[%s137 + $0x350] sm:$0xff] %v3064
        %3487 = vst [vmem:[%s137 + $0x358] sm:$0xff] %v3079
        %3488 = vst [vmem:[%s137 + $0x360] sm:$0xff] %v3094
        %3489 = vst [vmem:[%s137 + $0x368] sm:$0xff] %v3109
        %3490 = vst [vmem:[%s137 + $0x370] sm:$0xff] %v3124
        %3491 = vst [vmem:[%s137 + $0x378] sm:$0xff] %v3139
        %3492 = vst [vmem:[%s137 + $0x380] sm:$0xff] %v3154
        %3493 = vst [vmem:[%s137 + $0x388] sm:$0xff] %v3169
        %3494 = vst [vmem:[%s137 + $0x390] sm:$0xff] %v3184
        %3495 = vst [vmem:[%s137 + $0x398] sm:$0xff] %v3199
        %3496 = vst [vmem:[%s137 + $0x3a0] sm:$0xff] %v3214
        %3497 = vst [vmem:[%s137 + $0x3a8] sm:$0xff] %v3229
        %3498 = vst [vmem:[%s137 + $0x3b0] sm:$0xff] %v3244
        %3499 = vst [vmem:[%s137 + $0x3b8] sm:$0xff] %v3259
        %3500 = vst [vmem:[%s137 + $0x3c0] sm:$0xff] %v3274
        %3501 = vst [vmem:[%s137 + $0x3c8] sm:$0xff] %v3289
        %3502 = vst [vmem:[%s137 + $0x3d0] sm:$0xff] %v3304
        %3503 = vst [vmem:[%s137 + $0x3d8] sm:$0xff] %v3319
        %3504 = vst [vmem:[%s137 + $0x3e0] sm:$0xff] %v3334
        %3505 = vst [vmem:[%s137 + $0x3e8] sm:$0xff] %v3349
        %3506 = vst [vmem:[%s137 + $0x3f0] sm:$0xff] %v3364
        %3507 = vst [vmem:[%s137 + $0x3f8] sm:$0xff] %v3379
        %s3508 = sand.u32 %s71, 1
        %s3509 = scalar_lea.sflag [#allocation3], %s3508
        %s3510 = sand.u32 %s71, 1
        %s3511 = smul.addr %s3510, 1024
        %s3512 = scalar_lea.vmem [#allocation2], %s3511
        // Predicated region
        $region29: #{tpu_custom_call.1} parent=27 // pred_check
          %p3513 = pneg %p81
        $region30: #{tpu_custom_call.1} parent=27 // pred_check_branch
          %3515 = sbr.rel (%p3513) target = $region32
        $region31: #{tpu_custom_call.1} parent=27 // pred_region
          %s3516 = smul.u32 64, %s16
          %3518 = vsyncadd %s3509, 0
          %s3519 = smul.addr %s3516, 2
          %s3520 = smul.addr %s3519, 8
          %s3521 = scalar_lea.hbm %s2, %s3520
          %s3522 = sshll.u32 %s3512, 4
          %s3523 = int_to_ptr.vmem [resolvable:$true] %s3522
          %s3524 = sshll.u32 %s3521, 4
          %s3525 = int_to_ptr.hbm [resolvable:$true] %s3524
          %3530 = dma.vmem_to_hbm [thread:$0]  %s3523, 16384, %s3525, %s3509, 256, 256, 16
        $region32: #{tpu_custom_call.1} parent=27 // pred_fallthru
          _
      $region28: #{tpu_custom_call.1} parent=5 // pred_fallthru
        _
      %p3531 = scmp.le.s32.totalorder 2, %s11
      // Predicated region
      $region33: #{tpu_custom_call.1} parent=5 // pred_check
        %p3532 = pneg %p3531
      $region34: #{tpu_custom_call.1} parent=5 // pred_check_branch
        %3534 = sbr.rel (%p3532) target = $region36
      $region35: #{tpu_custom_call.1} parent=5 // pred_region
        %s3535 = ssub.s32 %s11, 2
        // Predicated region
        $region37: #{tpu_custom_call.1} parent=35 // pred_check
          %p3536 = pneg %p87
        $region38: #{tpu_custom_call.1} parent=35 // pred_check_branch
          %3538 = sbr.rel (%p3536) target = $region40
        $region39: #{tpu_custom_call.1} parent=35 // pred_region
          %s3539 = sand.u32 %s72, 1
          %s3540 = scalar_lea.sflag [#allocation3], %s3539
          %s3541 = sand.u32 %s72, 1
          %s3542 = smul.addr %s3541, 1024
          %s3543 = scalar_lea.vmem [#allocation2], %s3542
          %3545 = dma.done %s3540, 16384
        $region40: #{tpu_custom_call.1} parent=35 // pred_fallthru
          _
      $region36: #{tpu_custom_call.1} parent=5 // pred_fallthru
        _
    $region6: #{tpu_custom_call.1} parent=1 // loop_footer
      %s15 = sadd.s32 1, %s11
    $region7: #{tpu_custom_call.1} parent=1 // loop_footer_branch
      %10 = sbr.rel target = $region3
    $region8: #{tpu_custom_call.1} parent=1 // loop_exit
      _
    %3546 = vsyncpa [#allocation3], 1
    %s3547 = scalar_lea.sflag [#allocation3], 1
    %3548 = vsyncpa %s3547, 1

</llo_original>
